<compile_context>
chip_gen: v7x
topology: tpu7x:2x2x1
jax: 0.10.0
libtpu: 0.0.40
codegen_flags: <defaults>
</compile_context>

<pallas_src>
import functools

import jax
import jax.numpy as jnp
from jax.experimental import pallas as pl
from jax.experimental.pallas import tpu as pltpu

BN_EPS = 1e-5

# (in_features, out_features) for the 5 blocks, then the head.
BLOCK_DIMS = [(1024, 512), (512, 512), (512, 256), (256, 128), (128, 64)]
HEAD_DIMS = (64, 4)
HEAD_PAD = 128  # lane-dense padded head width


def mlp_kernel(x_ref, *refs):
    """refs = 5*(Wt_bf16, packed(3,F)_f32) + (Wt_head_bf16, b_head_f32) + (out_ref,)."""
    out_ref = refs[-1]
    p = refs[:-1]

    h = x_ref[...].astype(jnp.float32)

    idx = 0
    for _ in range(len(BLOCK_DIMS)):
        w_ref, s_ref = p[idx], p[idx + 1]
        idx += 2
        small = s_ref[...]            # (3, F) f32: [bias; gamma; beta]
        b = small[0:1, :]
        g = small[1:2, :]
        beta = small[2:3, :]

        # Linear: bf16 operands into the MXU, f32 accumulate.
        h = jnp.dot(h.astype(jnp.bfloat16), w_ref[...],
                    preferred_element_type=jnp.float32) + b
        # ReLU
        h = jnp.maximum(h, 0.0)
        # BatchNorm1d (training-mode batch stats, biased variance), folded
        # into a single scale/shift FMA over the (B, F) activation.
        mean = jnp.mean(h, axis=0, keepdims=True)
        var = jnp.mean((h - mean) ** 2, axis=0, keepdims=True)
        inv = jax.lax.rsqrt(var + BN_EPS)
        scale = g * inv
        shift = beta - mean * scale
        h = h * scale + shift

    # Head: Linear(64, 4) padded to 128 lanes + Softmax(dim=1).
    # Padded columns have zero weights and bias = -1e30 -> softmax gives 0.
    wh_ref, bh_ref = p[idx], p[idx + 1]
    logits = jnp.dot(h.astype(jnp.bfloat16), wh_ref[...],
                     preferred_element_type=jnp.float32) + bh_ref[...]
    m = jnp.max(logits, axis=1, keepdims=True)
    e = jnp.exp(logits - m)
    out_ref[...] = e * pl.reciprocal(jnp.sum(e, axis=1, keepdims=True), approx=False)


def init_params(key):
    """Deterministic init mimicking PyTorch defaults (uniform +/- 1/sqrt(fan_in)).

    Returns 12 arrays:
      5 x [W_t (in,out) bf16, packed (3,out) f32 = (bias, gamma, beta)]
      + head [W_t padded (64,128) bf16, bias padded (1,128) f32].
    """
    params = []
    for i, (fin, fout) in enumerate(BLOCK_DIMS):
        kw, kb = jax.random.split(jax.random.fold_in(key, i))
        bound = 1.0 / (fin ** 0.5)
        w_t = jax.random.uniform(kw, (fin, fout), jnp.float32, -bound, bound)
        b = jax.random.uniform(kb, (fout,), jnp.float32, -bound, bound)
        gamma = jnp.ones((fout,), jnp.float32)
        beta = jnp.zeros((fout,), jnp.float32)
        packed = jnp.stack([b, gamma, beta], axis=0)          # (3, fout) f32
        params.extend([w_t.astype(jnp.bfloat16), packed])

    # Head, padded to HEAD_PAD lanes.
    fin, fout = HEAD_DIMS
    kw, kb = jax.random.split(jax.random.fold_in(key, len(BLOCK_DIMS)))
    bound = 1.0 / (fin ** 0.5)
    w_t = jax.random.uniform(kw, (fin, fout), jnp.float32, -bound, bound)
    b = jax.random.uniform(kb, (fout,), jnp.float32, -bound, bound)
    w_pad = jnp.zeros((fin, HEAD_PAD), jnp.float32).at[:, :fout].set(w_t)
    b_pad = jnp.full((1, HEAD_PAD), -1e30, jnp.float32).at[0, :fout].set(b)
    params.extend([w_pad.astype(jnp.bfloat16), b_pad])
    return params


@functools.partial(jax.jit, static_argnames=())
def model_forward(x, *params):
    batch = x.shape[0]
    n_in = 1 + len(params)
    vmem_spec = pl.BlockSpec(memory_space=pltpu.MemorySpace.VMEM)
    out_padded = pl.pallas_call(
        mlp_kernel,
        out_shape=jax.ShapeDtypeStruct((batch, HEAD_PAD), jnp.float32),
        in_specs=[vmem_spec] * n_in,
        out_specs=vmem_spec,
        compiler_params=pltpu.CompilerParams(vmem_limit_bytes=32 * 1024 * 1024),
    )(x, *params)
    return out_padded[:, :HEAD_DIMS[1]]


if __name__ == "__main__":
    key = jax.random.PRNGKey(0)
    k_x, k_p = jax.random.split(key)

    B = 16  # batch; must be >= 2 for BatchNorm1d training-mode stats
    x = jax.random.normal(k_x, (B, 1024), dtype=jnp.float32)
    params = init_params(k_p)

    out = model_forward(x, *params)
    out = jax.block_until_ready(out)

    assert out.shape == (B, 4)
    # Softmax rows should sum to ~1 (padded lanes contribute exactly 0)
    assert bool(jnp.all(jnp.abs(jnp.sum(out, axis=1) - 1.0) < 1e-3))

    print("KERNEL_OK")
</pallas_src>

<mosaic_0001>
module attributes {stable_mosaic.version = 11 : i64} {
  func.func @mlp_kernel(%arg0: memref<16x1024xf32, #tpu.memory_space<vmem>>, %arg1: memref<1024x512xbf16, #tpu.memory_space<vmem>>, %arg2: memref<3x512xf32, #tpu.memory_space<vmem>>, %arg3: memref<512x512xbf16, #tpu.memory_space<vmem>>, %arg4: memref<3x512xf32, #tpu.memory_space<vmem>>, %arg5: memref<512x256xbf16, #tpu.memory_space<vmem>>, %arg6: memref<3x256xf32, #tpu.memory_space<vmem>>, %arg7: memref<256x128xbf16, #tpu.memory_space<vmem>>, %arg8: memref<3x128xf32, #tpu.memory_space<vmem>>, %arg9: memref<128x64xbf16, #tpu.memory_space<vmem>>, %arg10: memref<3x64xf32, #tpu.memory_space<vmem>>, %arg11: memref<64x128xbf16, #tpu.memory_space<vmem>>, %arg12: memref<1x128xf32, #tpu.memory_space<vmem>>, %arg13: memref<16x128xf32, #tpu.memory_space<vmem>>) attributes {dimension_semantics = [], scalar_prefetch = 0 : i64, scratch_operands = 0 : i64, tpu.core_type = #tpu.core_type<tc>} {
    %c0 = arith.constant 0 : index
    %c0_0 = arith.constant 0 : index
    %0 = vector.load %arg0[%c0, %c0_0] : memref<16x1024xf32, #tpu.memory_space<vmem>>, vector<16x1024xf32>
    %c0_1 = arith.constant 0 : index
    %c0_2 = arith.constant 0 : index
    %1 = vector.load %arg2[%c0_1, %c0_2] : memref<3x512xf32, #tpu.memory_space<vmem>>, vector<3x512xf32>
    %2 = vector.extract_strided_slice %1 {offsets = [0, 0], sizes = [1, 512], strides = [1, 1]} : vector<3x512xf32> to vector<1x512xf32>
    %3 = vector.extract_strided_slice %1 {offsets = [1, 0], sizes = [1, 512], strides = [1, 1]} : vector<3x512xf32> to vector<1x512xf32>
    %4 = vector.extract_strided_slice %1 {offsets = [2, 0], sizes = [1, 512], strides = [1, 1]} : vector<3x512xf32> to vector<1x512xf32>
    %5 = arith.truncf %0 : vector<16x1024xf32> to vector<16x1024xbf16>
    %c0_3 = arith.constant 0 : index
    %c0_4 = arith.constant 0 : index
    %6 = vector.load %arg1[%c0_3, %c0_4] : memref<1024x512xbf16, #tpu.memory_space<vmem>>, vector<1024x512xbf16>
    %cst = arith.constant dense<0.000000e+00> : vector<16x512xf32>
    %7 = tpu.matmul %5, %6, %cst {dimension_numbers = #tpu.dot_dimension_numbers<[1], [0], [0], [1], [0, 0, 1, 1], [], []>} : vector<16x1024xbf16>, vector<1024x512xbf16>, vector<16x512xf32> -> vector<16x512xf32>
    %8 = vector.broadcast %2 : vector<1x512xf32> to vector<16x512xf32>
    %9 = arith.addf %7, %8 : vector<16x512xf32>
    %cst_5 = arith.constant 0.000000e+00 : f32
    %10 = vector.broadcast %cst_5 : f32 to vector<16x512xf32>
    %11 = arith.maximumf %9, %10 : vector<16x512xf32>
    %cst_6 = arith.constant dense<0.000000e+00> : vector<512xf32>
    %12 = vector.multi_reduction <add>, %11, %cst_6 [0] : vector<16x512xf32> to vector<512xf32>
    %13 = vector.shape_cast %12 : vector<512xf32> to vector<1x512xf32>
    %cst_7 = arith.constant 1.600000e+01 : f32
    %14 = vector.broadcast %cst_7 : f32 to vector<1x512xf32>
    %15 = arith.divf %13, %14 : vector<1x512xf32>
    %16 = vector.broadcast %15 : vector<1x512xf32> to vector<16x512xf32>
    %17 = arith.subf %11, %16 : vector<16x512xf32>
    %18 = arith.mulf %17, %17 : vector<16x512xf32>
    %cst_8 = arith.constant dense<0.000000e+00> : vector<512xf32>
    %19 = vector.multi_reduction <add>, %18, %cst_8 [0] : vector<16x512xf32> to vector<512xf32>
    %20 = vector.shape_cast %19 : vector<512xf32> to vector<1x512xf32>
    %cst_9 = arith.constant 1.600000e+01 : f32
    %21 = vector.broadcast %cst_9 : f32 to vector<1x512xf32>
    %22 = arith.divf %20, %21 : vector<1x512xf32>
    %cst_10 = arith.constant 9.99999974E-6 : f32
    %23 = vector.broadcast %cst_10 : f32 to vector<1x512xf32>
    %24 = arith.addf %22, %23 : vector<1x512xf32>
    %25 = math.rsqrt %24 : vector<1x512xf32>
    %26 = arith.mulf %3, %25 : vector<1x512xf32>
    %27 = arith.mulf %15, %26 : vector<1x512xf32>
    %28 = arith.subf %4, %27 : vector<1x512xf32>
    %29 = vector.broadcast %26 : vector<1x512xf32> to vector<16x512xf32>
    %30 = arith.mulf %11, %29 : vector<16x512xf32>
    %31 = vector.broadcast %28 : vector<1x512xf32> to vector<16x512xf32>
    %32 = arith.addf %30, %31 : vector<16x512xf32>
    %c0_11 = arith.constant 0 : index
    %c0_12 = arith.constant 0 : index
    %33 = vector.load %arg4[%c0_11, %c0_12] : memref<3x512xf32, #tpu.memory_space<vmem>>, vector<3x512xf32>
    %34 = vector.extract_strided_slice %33 {offsets = [0, 0], sizes = [1, 512], strides = [1, 1]} : vector<3x512xf32> to vector<1x512xf32>
    %35 = vector.extract_strided_slice %33 {offsets = [1, 0], sizes = [1, 512], strides = [1, 1]} : vector<3x512xf32> to vector<1x512xf32>
    %36 = vector.extract_strided_slice %33 {offsets = [2, 0], sizes = [1, 512], strides = [1, 1]} : vector<3x512xf32> to vector<1x512xf32>
    %37 = arith.truncf %32 : vector<16x512xf32> to vector<16x512xbf16>
    %c0_13 = arith.constant 0 : index
    %c0_14 = arith.constant 0 : index
    %38 = vector.load %arg3[%c0_13, %c0_14] : memref<512x512xbf16, #tpu.memory_space<vmem>>, vector<512x512xbf16>
    %cst_15 = arith.constant dense<0.000000e+00> : vector<16x512xf32>
    %39 = tpu.matmul %37, %38, %cst_15 {dimension_numbers = #tpu.dot_dimension_numbers<[1], [0], [0], [1], [0, 0, 1, 1], [], []>} : vector<16x512xbf16>, vector<512x512xbf16>, vector<16x512xf32> -> vector<16x512xf32>
    %40 = vector.broadcast %34 : vector<1x512xf32> to vector<16x512xf32>
    %41 = arith.addf %39, %40 : vector<16x512xf32>
    %cst_16 = arith.constant 0.000000e+00 : f32
    %42 = vector.broadcast %cst_16 : f32 to vector<16x512xf32>
    %43 = arith.maximumf %41, %42 : vector<16x512xf32>
    %cst_17 = arith.constant dense<0.000000e+00> : vector<512xf32>
    %44 = vector.multi_reduction <add>, %43, %cst_17 [0] : vector<16x512xf32> to vector<512xf32>
    %45 = vector.shape_cast %44 : vector<512xf32> to vector<1x512xf32>
    %cst_18 = arith.constant 1.600000e+01 : f32
    %46 = vector.broadcast %cst_18 : f32 to vector<1x512xf32>
    %47 = arith.divf %45, %46 : vector<1x512xf32>
    %48 = vector.broadcast %47 : vector<1x512xf32> to vector<16x512xf32>
    %49 = arith.subf %43, %48 : vector<16x512xf32>
    %50 = arith.mulf %49, %49 : vector<16x512xf32>
    %cst_19 = arith.constant dense<0.000000e+00> : vector<512xf32>
    %51 = vector.multi_reduction <add>, %50, %cst_19 [0] : vector<16x512xf32> to vector<512xf32>
    %52 = vector.shape_cast %51 : vector<512xf32> to vector<1x512xf32>
    %cst_20 = arith.constant 1.600000e+01 : f32
    %53 = vector.broadcast %cst_20 : f32 to vector<1x512xf32>
    %54 = arith.divf %52, %53 : vector<1x512xf32>
    %cst_21 = arith.constant 9.99999974E-6 : f32
    %55 = vector.broadcast %cst_21 : f32 to vector<1x512xf32>
    %56 = arith.addf %54, %55 : vector<1x512xf32>
    %57 = math.rsqrt %56 : vector<1x512xf32>
    %58 = arith.mulf %35, %57 : vector<1x512xf32>
    %59 = arith.mulf %47, %58 : vector<1x512xf32>
    %60 = arith.subf %36, %59 : vector<1x512xf32>
    %61 = vector.broadcast %58 : vector<1x512xf32> to vector<16x512xf32>
    %62 = arith.mulf %43, %61 : vector<16x512xf32>
    %63 = vector.broadcast %60 : vector<1x512xf32> to vector<16x512xf32>
    %64 = arith.addf %62, %63 : vector<16x512xf32>
    %c0_22 = arith.constant 0 : index
    %c0_23 = arith.constant 0 : index
    %65 = vector.load %arg6[%c0_22, %c0_23] : memref<3x256xf32, #tpu.memory_space<vmem>>, vector<3x256xf32>
    %66 = vector.extract_strided_slice %65 {offsets = [0, 0], sizes = [1, 256], strides = [1, 1]} : vector<3x256xf32> to vector<1x256xf32>
    %67 = vector.extract_strided_slice %65 {offsets = [1, 0], sizes = [1, 256], strides = [1, 1]} : vector<3x256xf32> to vector<1x256xf32>
    %68 = vector.extract_strided_slice %65 {offsets = [2, 0], sizes = [1, 256], strides = [1, 1]} : vector<3x256xf32> to vector<1x256xf32>
    %69 = arith.truncf %64 : vector<16x512xf32> to vector<16x512xbf16>
    %c0_24 = arith.constant 0 : index
    %c0_25 = arith.constant 0 : index
    %70 = vector.load %arg5[%c0_24, %c0_25] : memref<512x256xbf16, #tpu.memory_space<vmem>>, vector<512x256xbf16>
    %cst_26 = arith.constant dense<0.000000e+00> : vector<16x256xf32>
    %71 = tpu.matmul %69, %70, %cst_26 {dimension_numbers = #tpu.dot_dimension_numbers<[1], [0], [0], [1], [0, 0, 1, 1], [], []>} : vector<16x512xbf16>, vector<512x256xbf16>, vector<16x256xf32> -> vector<16x256xf32>
    %72 = vector.broadcast %66 : vector<1x256xf32> to vector<16x256xf32>
    %73 = arith.addf %71, %72 : vector<16x256xf32>
    %cst_27 = arith.constant 0.000000e+00 : f32
    %74 = vector.broadcast %cst_27 : f32 to vector<16x256xf32>
    %75 = arith.maximumf %73, %74 : vector<16x256xf32>
    %cst_28 = arith.constant dense<0.000000e+00> : vector<256xf32>
    %76 = vector.multi_reduction <add>, %75, %cst_28 [0] : vector<16x256xf32> to vector<256xf32>
    %77 = vector.shape_cast %76 : vector<256xf32> to vector<1x256xf32>
    %cst_29 = arith.constant 1.600000e+01 : f32
    %78 = vector.broadcast %cst_29 : f32 to vector<1x256xf32>
    %79 = arith.divf %77, %78 : vector<1x256xf32>
    %80 = vector.broadcast %79 : vector<1x256xf32> to vector<16x256xf32>
    %81 = arith.subf %75, %80 : vector<16x256xf32>
    %82 = arith.mulf %81, %81 : vector<16x256xf32>
    %cst_30 = arith.constant dense<0.000000e+00> : vector<256xf32>
    %83 = vector.multi_reduction <add>, %82, %cst_30 [0] : vector<16x256xf32> to vector<256xf32>
    %84 = vector.shape_cast %83 : vector<256xf32> to vector<1x256xf32>
    %cst_31 = arith.constant 1.600000e+01 : f32
    %85 = vector.broadcast %cst_31 : f32 to vector<1x256xf32>
    %86 = arith.divf %84, %85 : vector<1x256xf32>
    %cst_32 = arith.constant 9.99999974E-6 : f32
    %87 = vector.broadcast %cst_32 : f32 to vector<1x256xf32>
    %88 = arith.addf %86, %87 : vector<1x256xf32>
    %89 = math.rsqrt %88 : vector<1x256xf32>
    %90 = arith.mulf %67, %89 : vector<1x256xf32>
    %91 = arith.mulf %79, %90 : vector<1x256xf32>
    %92 = arith.subf %68, %91 : vector<1x256xf32>
    %93 = vector.broadcast %90 : vector<1x256xf32> to vector<16x256xf32>
    %94 = arith.mulf %75, %93 : vector<16x256xf32>
    %95 = vector.broadcast %92 : vector<1x256xf32> to vector<16x256xf32>
    %96 = arith.addf %94, %95 : vector<16x256xf32>
    %c0_33 = arith.constant 0 : index
    %c0_34 = arith.constant 0 : index
    %97 = vector.load %arg8[%c0_33, %c0_34] : memref<3x128xf32, #tpu.memory_space<vmem>>, vector<3x128xf32>
    %98 = vector.extract_strided_slice %97 {offsets = [0, 0], sizes = [1, 128], strides = [1, 1]} : vector<3x128xf32> to vector<1x128xf32>
    %99 = vector.extract_strided_slice %97 {offsets = [1, 0], sizes = [1, 128], strides = [1, 1]} : vector<3x128xf32> to vector<1x128xf32>
    %100 = vector.extract_strided_slice %97 {offsets = [2, 0], sizes = [1, 128], strides = [1, 1]} : vector<3x128xf32> to vector<1x128xf32>
    %101 = arith.truncf %96 : vector<16x256xf32> to vector<16x256xbf16>
    %c0_35 = arith.constant 0 : index
    %c0_36 = arith.constant 0 : index
    %102 = vector.load %arg7[%c0_35, %c0_36] : memref<256x128xbf16, #tpu.memory_space<vmem>>, vector<256x128xbf16>
    %cst_37 = arith.constant dense<0.000000e+00> : vector<16x128xf32>
    %103 = tpu.matmul %101, %102, %cst_37 {dimension_numbers = #tpu.dot_dimension_numbers<[1], [0], [0], [1], [0, 0, 1, 1], [], []>} : vector<16x256xbf16>, vector<256x128xbf16>, vector<16x128xf32> -> vector<16x128xf32>
    %104 = vector.broadcast %98 : vector<1x128xf32> to vector<16x128xf32>
    %105 = arith.addf %103, %104 : vector<16x128xf32>
    %cst_38 = arith.constant 0.000000e+00 : f32
    %106 = vector.broadcast %cst_38 : f32 to vector<16x128xf32>
    %107 = arith.maximumf %105, %106 : vector<16x128xf32>
    %cst_39 = arith.constant dense<0.000000e+00> : vector<128xf32>
    %108 = vector.multi_reduction <add>, %107, %cst_39 [0] : vector<16x128xf32> to vector<128xf32>
    %109 = vector.shape_cast %108 : vector<128xf32> to vector<1x128xf32>
    %cst_40 = arith.constant 1.600000e+01 : f32
    %110 = vector.broadcast %cst_40 : f32 to vector<1x128xf32>
    %111 = arith.divf %109, %110 : vector<1x128xf32>
    %112 = vector.broadcast %111 : vector<1x128xf32> to vector<16x128xf32>
    %113 = arith.subf %107, %112 : vector<16x128xf32>
    %114 = arith.mulf %113, %113 : vector<16x128xf32>
    %cst_41 = arith.constant dense<0.000000e+00> : vector<128xf32>
    %115 = vector.multi_reduction <add>, %114, %cst_41 [0] : vector<16x128xf32> to vector<128xf32>
    %116 = vector.shape_cast %115 : vector<128xf32> to vector<1x128xf32>
    %cst_42 = arith.constant 1.600000e+01 : f32
    %117 = vector.broadcast %cst_42 : f32 to vector<1x128xf32>
    %118 = arith.divf %116, %117 : vector<1x128xf32>
    %cst_43 = arith.constant 9.99999974E-6 : f32
    %119 = vector.broadcast %cst_43 : f32 to vector<1x128xf32>
    %120 = arith.addf %118, %119 : vector<1x128xf32>
    %121 = math.rsqrt %120 : vector<1x128xf32>
    %122 = arith.mulf %99, %121 : vector<1x128xf32>
    %123 = arith.mulf %111, %122 : vector<1x128xf32>
    %124 = arith.subf %100, %123 : vector<1x128xf32>
    %125 = vector.broadcast %122 : vector<1x128xf32> to vector<16x128xf32>
    %126 = arith.mulf %107, %125 : vector<16x128xf32>
    %127 = vector.broadcast %124 : vector<1x128xf32> to vector<16x128xf32>
    %128 = arith.addf %126, %127 : vector<16x128xf32>
    %c0_44 = arith.constant 0 : index
    %c0_45 = arith.constant 0 : index
    %129 = vector.load %arg10[%c0_44, %c0_45] : memref<3x64xf32, #tpu.memory_space<vmem>>, vector<3x64xf32>
    %130 = vector.extract_strided_slice %129 {offsets = [0, 0], sizes = [1, 64], strides = [1, 1]} : vector<3x64xf32> to vector<1x64xf32>
    %131 = vector.extract_strided_slice %129 {offsets = [1, 0], sizes = [1, 64], strides = [1, 1]} : vector<3x64xf32> to vector<1x64xf32>
    %132 = vector.extract_strided_slice %129 {offsets = [2, 0], sizes = [1, 64], strides = [1, 1]} : vector<3x64xf32> to vector<1x64xf32>
    %133 = arith.truncf %128 : vector<16x128xf32> to vector<16x128xbf16>
    %c0_46 = arith.constant 0 : index
    %c0_47 = arith.constant 0 : index
    %134 = vector.load %arg9[%c0_46, %c0_47] : memref<128x64xbf16, #tpu.memory_space<vmem>>, vector<128x64xbf16>
    %cst_48 = arith.constant dense<0.000000e+00> : vector<16x64xf32>
    %135 = tpu.matmul %133, %134, %cst_48 {dimension_numbers = #tpu.dot_dimension_numbers<[1], [0], [0], [1], [0, 0, 1, 1], [], []>} : vector<16x128xbf16>, vector<128x64xbf16>, vector<16x64xf32> -> vector<16x64xf32>
    %136 = vector.broadcast %130 : vector<1x64xf32> to vector<16x64xf32>
    %137 = arith.addf %135, %136 : vector<16x64xf32>
    %cst_49 = arith.constant 0.000000e+00 : f32
    %138 = vector.broadcast %cst_49 : f32 to vector<16x64xf32>
    %139 = arith.maximumf %137, %138 : vector<16x64xf32>
    %cst_50 = arith.constant dense<0.000000e+00> : vector<64xf32>
    %140 = vector.multi_reduction <add>, %139, %cst_50 [0] : vector<16x64xf32> to vector<64xf32>
    %141 = vector.shape_cast %140 : vector<64xf32> to vector<1x64xf32>
    %cst_51 = arith.constant 1.600000e+01 : f32
    %142 = vector.broadcast %cst_51 : f32 to vector<1x64xf32>
    %143 = arith.divf %141, %142 : vector<1x64xf32>
    %144 = vector.broadcast %143 : vector<1x64xf32> to vector<16x64xf32>
    %145 = arith.subf %139, %144 : vector<16x64xf32>
    %146 = arith.mulf %145, %145 : vector<16x64xf32>
    %cst_52 = arith.constant dense<0.000000e+00> : vector<64xf32>
    %147 = vector.multi_reduction <add>, %146, %cst_52 [0] : vector<16x64xf32> to vector<64xf32>
    %148 = vector.shape_cast %147 : vector<64xf32> to vector<1x64xf32>
    %cst_53 = arith.constant 1.600000e+01 : f32
    %149 = vector.broadcast %cst_53 : f32 to vector<1x64xf32>
    %150 = arith.divf %148, %149 : vector<1x64xf32>
    %cst_54 = arith.constant 9.99999974E-6 : f32
    %151 = vector.broadcast %cst_54 : f32 to vector<1x64xf32>
    %152 = arith.addf %150, %151 : vector<1x64xf32>
    %153 = math.rsqrt %152 : vector<1x64xf32>
    %154 = arith.mulf %131, %153 : vector<1x64xf32>
    %155 = arith.mulf %143, %154 : vector<1x64xf32>
    %156 = arith.subf %132, %155 : vector<1x64xf32>
    %157 = vector.broadcast %154 : vector<1x64xf32> to vector<16x64xf32>
    %158 = arith.mulf %139, %157 : vector<16x64xf32>
    %159 = vector.broadcast %156 : vector<1x64xf32> to vector<16x64xf32>
    %160 = arith.addf %158, %159 : vector<16x64xf32>
    %161 = arith.truncf %160 : vector<16x64xf32> to vector<16x64xbf16>
    %c0_55 = arith.constant 0 : index
    %c0_56 = arith.constant 0 : index
    %162 = vector.load %arg11[%c0_55, %c0_56] : memref<64x128xbf16, #tpu.memory_space<vmem>>, vector<64x128xbf16>
    %cst_57 = arith.constant dense<0.000000e+00> : vector<16x128xf32>
    %163 = tpu.matmul %161, %162, %cst_57 {dimension_numbers = #tpu.dot_dimension_numbers<[1], [0], [0], [1], [0, 0, 1, 1], [], []>} : vector<16x64xbf16>, vector<64x128xbf16>, vector<16x128xf32> -> vector<16x128xf32>
    %c0_58 = arith.constant 0 : index
    %c0_59 = arith.constant 0 : index
    %164 = vector.load %arg12[%c0_58, %c0_59] : memref<1x128xf32, #tpu.memory_space<vmem>>, vector<1x128xf32>
    %165 = vector.broadcast %164 : vector<1x128xf32> to vector<16x128xf32>
    %166 = arith.addf %163, %165 : vector<16x128xf32>
    %cst_60 = arith.constant dense<0xFF800000> : vector<16xf32>
    %167 = vector.multi_reduction <maximumf>, %166, %cst_60 [1] : vector<16x128xf32> to vector<16xf32>
    %168 = vector.shape_cast %167 : vector<16xf32> to vector<16x1xf32>
    %169 = vector.broadcast %168 : vector<16x1xf32> to vector<16x128xf32>
    %170 = arith.subf %166, %169 : vector<16x128xf32>
    %171 = math.exp %170 : vector<16x128xf32>
    %cst_61 = arith.constant dense<0.000000e+00> : vector<16xf32>
    %172 = vector.multi_reduction <add>, %171, %cst_61 [1] : vector<16x128xf32> to vector<16xf32>
    %173 = vector.shape_cast %172 : vector<16xf32> to vector<16x1xf32>
    %174 = tpu.reciprocal %173 : vector<16x1xf32> -> vector<16x1xf32>
    %175 = vector.broadcast %174 : vector<16x1xf32> to vector<16x128xf32>
    %176 = arith.mulf %171, %175 : vector<16x128xf32>
    %c0_62 = arith.constant 0 : index
    %c0_63 = arith.constant 0 : index
    %177 = vector.load %arg13[%c0_62, %c0_63] : memref<16x128xf32, #tpu.memory_space<vmem>>, vector<16x128xf32>
    tpu.vector_store %arg13[%c0_62, %c0_63], %176 {strides = array<i32>} : memref<16x128xf32, #tpu.memory_space<vmem>>, vector<16x128xf32>,
    return
  }
}

</mosaic_0001>

<llo_original>
// kernel: model_forward.1
$region0: #{model_forward.1}
  #allocation0 [shape = 'u32[]', space=smem, size = 0x4, offset = 0x4, fixed_abs, tag = 'smem constant byte address 0x4 - core index']
  #allocation1 [shape = 'u32[144,128]{1,0:T(1,128)}', space=vmem, size = 0x12000, scoped, tag = 'internal scratch']
  %s0 = inlined_call_operand.hbm [shape: f32[16,1024], index: 0, kind: input, shape index: {}]
  %s1 = inlined_call_operand.hbm [shape: bf16[1024,512], index: 1, kind: input, shape index: {}]
  %s2 = inlined_call_operand.vmem [shape: f32[3,512], index: 2, kind: input, shape index: {}]
  %s3 = inlined_call_operand.hbm [shape: bf16[512,512], index: 3, kind: input, shape index: {}]
  %s4 = inlined_call_operand.vmem [shape: f32[3,512], index: 4, kind: input, shape index: {}]
  %s5 = inlined_call_operand.hbm [shape: bf16[512,256], index: 5, kind: input, shape index: {}]
  %s6 = inlined_call_operand.vmem [shape: f32[3,256], index: 6, kind: input, shape index: {}]
  %s7 = inlined_call_operand.hbm [shape: bf16[256,128], index: 7, kind: input, shape index: {}]
  %s8 = inlined_call_operand.vmem [shape: f32[3,128], index: 8, kind: input, shape index: {}]
  %s9 = inlined_call_operand.vmem [shape: bf16[128,64], index: 9, kind: input, shape index: {}]
  %s10 = inlined_call_operand.vmem [shape: f32[3,64], index: 10, kind: input, shape index: {}]
  %s11 = inlined_call_operand.vmem [shape: bf16[64,128], index: 11, kind: input, shape index: {}]
  %s12 = inlined_call_operand.vmem [shape: f32[1,128], index: 12, kind: input, shape index: {}]
  %s13 = inlined_call_operand.vmem [shape: f32[16,128], index: 13, kind: output, shape index: {}]
  %s14 = sld [smem:[#allocation0]]
  $region82: #{model_forward.1} parent=0
    _
  %s16 = ssub.s32 1, %s14
  %s17 = scalar_select 0, %s16, %s14
  $region1: #{model_forward.1} parent=0
    #allocation2 [shape = 'u8[65536]{0}', space=vmem, size = 0x10000, scoped, tag = 'input window, operand 0, single buffered']
    #allocation3 [shape = 's32[1]{0}', space=sflag, size = 0x4, scoped, tag = 'scoped memory for model_forward.1']
    #allocation4 [shape = 'u8[1048576]{0}', space=vmem, size = 0x100000, scoped, tag = 'input window, operand 1, single buffered']
    #allocation5 [shape = 's32[1]{0}', space=sflag, size = 0x4, scoped, tag = 'scoped memory for model_forward.1']
    #allocation6 [shape = 'u8[524288]{0}', space=vmem, size = 0x80000, scoped, tag = 'input window, operand 3, single buffered']
    #allocation7 [shape = 'u8[262144]{0}', space=vmem, size = 0x40000, scoped, tag = 'input window, operand 5, single buffered']
    #allocation8 [shape = 's32[1]{0}', space=sflag, size = 0x4, scoped, tag = 'scoped memory for model_forward.1']
    #allocation9 [shape = 'u8[65536]{0}', space=vmem, size = 0x10000, scoped, tag = 'input window, operand 7, single buffered']
    %18 = vsyncpa [#allocation3], 0
    %19 = vsyncpa [#allocation5], 0
    %20 = vsyncpa [#allocation8], 0
    // Predicated region
    $region2: #{model_forward.1} parent=1 // pred_check
      _
    $region3: #{model_forward.1} parent=1 // pred_check_branch
      %22 = sbr.rel (0) target = $region5
    $region4: #{model_forward.1} parent=1 // pred_region
      %s24 = ssub.s32 2048, 2048
      %25 = vsyncadd [#allocation3], %s24
      %s26 = sshll.u32 [#allocation2], 4
      %s27 = int_to_ptr.vmem [resolvable:$true] %s26
      %32 = dma.hbm_to_vmem [thread:$0]  %s0, 2048, %s27, [#allocation3], 1024, 1024, 64
    $region5: #{model_forward.1} parent=1 // pred_fallthru
      _
    // Predicated region
    $region6: #{model_forward.1} parent=1 // pred_check
      _
    $region7: #{model_forward.1} parent=1 // pred_check_branch
      %34 = sbr.rel (0) target = $region9
    $region8: #{model_forward.1} parent=1 // pred_region
      %s36 = ssub.s32 32768, 32768
      %37 = vsyncadd [#allocation5], %s36
      %s38 = sshll.u32 [#allocation4], 4
      %s39 = int_to_ptr.vmem [resolvable:$true] %s38
      %44 = dma.hbm_to_vmem [thread:$0]  %s1, 32768, %s39, [#allocation5], 256, 256, 16
    $region9: #{model_forward.1} parent=1 // pred_fallthru
      _
    // Predicated region
    $region10: #{model_forward.1} parent=1 // pred_check
      _
    $region11: #{model_forward.1} parent=1 // pred_check_branch
      %46 = sbr.rel (0) target = $region13
    $region12: #{model_forward.1} parent=1 // pred_region
      _
    $region13: #{model_forward.1} parent=1 // pred_fallthru
      _
    // Predicated region
    $region14: #{model_forward.1} parent=1 // pred_check
      _
    $region15: #{model_forward.1} parent=1 // pred_check_branch
      %48 = sbr.rel (0) target = $region17
    $region16: #{model_forward.1} parent=1 // pred_region
      %s50 = ssub.s32 16384, 16384
      %51 = vsyncadd [#allocation5], %s50
      %s52 = sshll.u32 [#allocation6], 4
      %s53 = int_to_ptr.vmem [resolvable:$true] %s52
      %58 = dma.hbm_to_vmem [thread:$0]  %s3, 16384, %s53, [#allocation5], 256, 256, 16
    $region17: #{model_forward.1} parent=1 // pred_fallthru
      _
    // Predicated region
    $region18: #{model_forward.1} parent=1 // pred_check
      _
    $region19: #{model_forward.1} parent=1 // pred_check_branch
      %60 = sbr.rel (0) target = $region21
    $region20: #{model_forward.1} parent=1 // pred_region
      _
    $region21: #{model_forward.1} parent=1 // pred_fallthru
      _
    // Predicated region
    $region22: #{model_forward.1} parent=1 // pred_check
      _
    $region23: #{model_forward.1} parent=1 // pred_check_branch
      %62 = sbr.rel (0) target = $region25
    $region24: #{model_forward.1} parent=1 // pred_region
      %s64 = ssub.s32 8192, 8192
      %65 = vsyncadd [#allocation8], %s64
      %s66 = sshll.u32 [#allocation7], 4
      %s67 = int_to_ptr.vmem [resolvable:$true] %s66
      %72 = dma.hbm_to_vmem [thread:$0]  %s5, 8192, %s67, [#allocation8], 128, 128, 8
    $region25: #{model_forward.1} parent=1 // pred_fallthru
      _
    // Predicated region
    $region26: #{model_forward.1} parent=1 // pred_check
      _
    $region27: #{model_forward.1} parent=1 // pred_check_branch
      %74 = sbr.rel (0) target = $region29
    $region28: #{model_forward.1} parent=1 // pred_region
      _
    $region29: #{model_forward.1} parent=1 // pred_fallthru
      _
    // Predicated region
    $region30: #{model_forward.1} parent=1 // pred_check
      _
    $region31: #{model_forward.1} parent=1 // pred_check_branch
      %76 = sbr.rel (0) target = $region33
    $region32: #{model_forward.1} parent=1 // pred_region
      %s78 = ssub.s32 2048, 2048
      %79 = vsyncadd [#allocation8], %s78
      %s80 = sshll.u32 [#allocation9], 4
      %s81 = int_to_ptr.vmem [resolvable:$true] %s80
      %86 = dma.hbm_to_vmem [thread:$0]  %s7, 2048, %s81, [#allocation8], 64, 64, 4
    $region33: #{model_forward.1} parent=1 // pred_fallthru
      _
    // Predicated region
    $region34: #{model_forward.1} parent=1 // pred_check
      _
    $region35: #{model_forward.1} parent=1 // pred_check_branch
      %88 = sbr.rel (0) target = $region37
    $region36: #{model_forward.1} parent=1 // pred_region
      _
    $region37: #{model_forward.1} parent=1 // pred_fallthru
      _
    // Predicated region
    $region38: #{model_forward.1} parent=1 // pred_check
      _
    $region39: #{model_forward.1} parent=1 // pred_check_branch
      %90 = sbr.rel (0) target = $region41
    $region40: #{model_forward.1} parent=1 // pred_region
      _
    $region41: #{model_forward.1} parent=1 // pred_fallthru
      _
    // Predicated region
    $region42: #{model_forward.1} parent=1 // pred_check
      _
    $region43: #{model_forward.1} parent=1 // pred_check_branch
      %92 = sbr.rel (0) target = $region45
    $region44: #{model_forward.1} parent=1 // pred_region
      _
    $region45: #{model_forward.1} parent=1 // pred_fallthru
      _
    // Predicated region
    $region46: #{model_forward.1} parent=1 // pred_check
      _
    $region47: #{model_forward.1} parent=1 // pred_check_branch
      %94 = sbr.rel (0) target = $region49
    $region48: #{model_forward.1} parent=1 // pred_region
      _
    $region49: #{model_forward.1} parent=1 // pred_fallthru
      _
    // Predicated region
    $region50: #{model_forward.1} parent=1 // pred_check
      _
    $region51: #{model_forward.1} parent=1 // pred_check_branch
      %96 = sbr.rel (0) target = $region53
    $region52: #{model_forward.1} parent=1 // pred_region
      _
    $region53: #{model_forward.1} parent=1 // pred_fallthru
      _
    // Predicated region
    $region54: #{model_forward.1} parent=1 // pred_check
      _
    $region55: #{model_forward.1} parent=1 // pred_check_branch
      %98 = sbr.rel (0) target = $region57
    $region56: #{model_forward.1} parent=1 // pred_region
      %99 = dma.done [#allocation3], 2048
    $region57: #{model_forward.1} parent=1 // pred_fallthru
      _
    // Predicated region
    $region58: #{model_forward.1} parent=1 // pred_check
      _
    $region59: #{model_forward.1} parent=1 // pred_check_branch
      %101 = sbr.rel (0) target = $region61
    $region60: #{model_forward.1} parent=1 // pred_region
      %102 = dma.done [#allocation5], 32768
    $region61: #{model_forward.1} parent=1 // pred_fallthru
      _
    // Predicated region
    $region62: #{model_forward.1} parent=1 // pred_check
      _
    $region63: #{model_forward.1} parent=1 // pred_check_branch
      %104 = sbr.rel (0) target = $region65
    $region64: #{model_forward.1} parent=1 // pred_region
      %105 = dma.done [#allocation5], 16384
    $region65: #{model_forward.1} parent=1 // pred_fallthru
      _
    // Predicated region
    $region66: #{model_forward.1} parent=1 // pred_check
      _
    $region67: #{model_forward.1} parent=1 // pred_check_branch
      %107 = sbr.rel (0) target = $region69
    $region68: #{model_forward.1} parent=1 // pred_region
      %108 = dma.done [#allocation8], 8192
    $region69: #{model_forward.1} parent=1 // pred_fallthru
      _
    // Predicated region
    $region70: #{model_forward.1} parent=1 // pred_check
      _
    $region71: #{model_forward.1} parent=1 // pred_check_branch
      %110 = sbr.rel (0) target = $region73
    $region72: #{model_forward.1} parent=1 // pred_region
      %111 = dma.done [#allocation8], 2048
    $region73: #{model_forward.1} parent=1 // pred_fallthru
      _
    %v113 = vld [vmem:[#allocation2] sm:$0xff]
    %v114 = vld [vmem:[#allocation2 + $0x8] sm:$0xff]
    %v115 = vld [vmem:[#allocation2 + $0x10] sm:$0xff]
    %v116 = vld [vmem:[#allocation2 + $0x18] sm:$0xff]
    %v117 = vld [vmem:[#allocation2 + $0x20] sm:$0xff]
    %v118 = vld [vmem:[#allocation2 + $0x28] sm:$0xff]
    %v119 = vld [vmem:[#allocation2 + $0x30] sm:$0xff]
    %v120 = vld [vmem:[#allocation2 + $0x38] sm:$0xff]
    %v121 = vld [vmem:[#allocation2 + $0x40] sm:$0xff]
    %v122 = vld [vmem:[#allocation2 + $0x48] sm:$0xff]
    %v123 = vld [vmem:[#allocation2 + $0x50] sm:$0xff]
    %v124 = vld [vmem:[#allocation2 + $0x58] sm:$0xff]
    %v125 = vld [vmem:[#allocation2 + $0x60] sm:$0xff]
    %v126 = vld [vmem:[#allocation2 + $0x68] sm:$0xff]
    %v127 = vld [vmem:[#allocation2 + $0x70] sm:$0xff]
    %v128 = vld [vmem:[#allocation2 + $0x78] sm:$0xff]
    %v129 = vld [vmem:[%s2] sm:$0x77]
    %v130 = vld [vmem:[%s2 + $0x8] sm:$0x77]
    %v131 = vpack.c.bf16 %v121, %v113
    %v132 = vpack.c.bf16 %v122, %v114
    %v133 = vpack.c.bf16 %v123, %v115
    %v134 = vpack.c.bf16 %v124, %v116
    %v135 = vpack.c.bf16 %v125, %v117
    %v136 = vpack.c.bf16 %v126, %v118
    %v137 = vpack.c.bf16 %v127, %v119
    %v138 = vpack.c.bf16 %v128, %v120
    %v139 = vld [vmem:[#allocation4] sm:$0xff]
    %v140 = vld [vmem:[#allocation4 + $0x8] sm:$0xff]
    %v141 = vld [vmem:[#allocation4 + $0x10] sm:$0xff]
    %v142 = vld [vmem:[#allocation4 + $0x18] sm:$0xff]
    %v143 = vld [vmem:[#allocation4 + $0x20] sm:$0xff]
    %v144 = vld [vmem:[#allocation4 + $0x28] sm:$0xff]
    %v145 = vld [vmem:[#allocation4 + $0x30] sm:$0xff]
    %v146 = vld [vmem:[#allocation4 + $0x38] sm:$0xff]
    %v147 = vld [vmem:[#allocation4 + $0x40] sm:$0xff]
    %v148 = vld [vmem:[#allocation4 + $0x48] sm:$0xff]
    %v149 = vld [vmem:[#allocation4 + $0x50] sm:$0xff]
    %v150 = vld [vmem:[#allocation4 + $0x58] sm:$0xff]
    %v151 = vld [vmem:[#allocation4 + $0x60] sm:$0xff]
    %v152 = vld [vmem:[#allocation4 + $0x68] sm:$0xff]
    %v153 = vld [vmem:[#allocation4 + $0x70] sm:$0xff]
    %v154 = vld [vmem:[#allocation4 + $0x78] sm:$0xff]
    %v155 = vld [vmem:[#allocation4 + $0x80] sm:$0xff]
    %v156 = vld [vmem:[#allocation4 + $0x88] sm:$0xff]
    %v157 = vld [vmem:[#allocation4 + $0x90] sm:$0xff]
    %v158 = vld [vmem:[#allocation4 + $0x98] sm:$0xff]
    %v159 = vld [vmem:[#allocation4 + $0xa0] sm:$0xff]
    %v160 = vld [vmem:[#allocation4 + $0xa8] sm:$0xff]
    %v161 = vld [vmem:[#allocation4 + $0xb0] sm:$0xff]
    %v162 = vld [vmem:[#allocation4 + $0xb8] sm:$0xff]
    %v163 = vld [vmem:[#allocation4 + $0xc0] sm:$0xff]
    %v164 = vld [vmem:[#allocation4 + $0xc8] sm:$0xff]
    %v165 = vld [vmem:[#allocation4 + $0xd0] sm:$0xff]
    %v166 = vld [vmem:[#allocation4 + $0xd8] sm:$0xff]
    %v167 = vld [vmem:[#allocation4 + $0xe0] sm:$0xff]
    %v168 = vld [vmem:[#allocation4 + $0xe8] sm:$0xff]
    %v169 = vld [vmem:[#allocation4 + $0xf0] sm:$0xff]
    %v170 = vld [vmem:[#allocation4 + $0xf8] sm:$0xff]
    %v171 = vld [vmem:[#allocation4 + $0x100] sm:$0xff]
    %v172 = vld [vmem:[#allocation4 + $0x108] sm:$0xff]
    %v173 = vld [vmem:[#allocation4 + $0x110] sm:$0xff]
    %v174 = vld [vmem:[#allocation4 + $0x118] sm:$0xff]
    %v175 = vld [vmem:[#allocation4 + $0x120] sm:$0xff]
    %v176 = vld [vmem:[#allocation4 + $0x128] sm:$0xff]
    %v177 = vld [vmem:[#allocation4 + $0x130] sm:$0xff]
    %v178 = vld [vmem:[#allocation4 + $0x138] sm:$0xff]
    %v179 = vld [vmem:[#allocation4 + $0x140] sm:$0xff]
    %v180 = vld [vmem:[#allocation4 + $0x148] sm:$0xff]
    %v181 = vld [vmem:[#allocation4 + $0x150] sm:$0xff]
    %v182 = vld [vmem:[#allocation4 + $0x158] sm:$0xff]
    %v183 = vld [vmem:[#allocation4 + $0x160] sm:$0xff]
    %v184 = vld [vmem:[#allocation4 + $0x168] sm:$0xff]
    %v185 = vld [vmem:[#allocation4 + $0x170] sm:$0xff]
    %v186 = vld [vmem:[#allocation4 + $0x178] sm:$0xff]
    %v187 = vld [vmem:[#allocation4 + $0x180] sm:$0xff]
    %v188 = vld [vmem:[#allocation4 + $0x188] sm:$0xff]
    %v189 = vld [vmem:[#allocation4 + $0x190] sm:$0xff]
    %v190 = vld [vmem:[#allocation4 + $0x198] sm:$0xff]
    %v191 = vld [vmem:[#allocation4 + $0x1a0] sm:$0xff]
    %v192 = vld [vmem:[#allocation4 + $0x1a8] sm:$0xff]
    %v193 = vld [vmem:[#allocation4 + $0x1b0] sm:$0xff]
    %v194 = vld [vmem:[#allocation4 + $0x1b8] sm:$0xff]
    %v195 = vld [vmem:[#allocation4 + $0x1c0] sm:$0xff]
    %v196 = vld [vmem:[#allocation4 + $0x1c8] sm:$0xff]
    %v197 = vld [vmem:[#allocation4 + $0x1d0] sm:$0xff]
    %v198 = vld [vmem:[#allocation4 + $0x1d8] sm:$0xff]
    %v199 = vld [vmem:[#allocation4 + $0x1e0] sm:$0xff]
    %v200 = vld [vmem:[#allocation4 + $0x1e8] sm:$0xff]
    %v201 = vld [vmem:[#allocation4 + $0x1f0] sm:$0xff]
    %v202 = vld [vmem:[#allocation4 + $0x1f8] sm:$0xff]
    %v203 = vld [vmem:[#allocation4 + $0x200] sm:$0xff]
    %v204 = vld [vmem:[#allocation4 + $0x208] sm:$0xff]
    %v205 = vld [vmem:[#allocation4 + $0x210] sm:$0xff]
    %v206 = vld [vmem:[#allocation4 + $0x218] sm:$0xff]
    %v207 = vld [vmem:[#allocation4 + $0x220] sm:$0xff]
    %v208 = vld [vmem:[#allocation4 + $0x228] sm:$0xff]
    %v209 = vld [vmem:[#allocation4 + $0x230] sm:$0xff]
    %v210 = vld [vmem:[#allocation4 + $0x238] sm:$0xff]
    %v211 = vld [vmem:[#allocation4 + $0x240] sm:$0xff]
    %v212 = vld [vmem:[#allocation4 + $0x248] sm:$0xff]
    %v213 = vld [vmem:[#allocation4 + $0x250] sm:$0xff]
    %v214 = vld [vmem:[#allocation4 + $0x258] sm:$0xff]
    %v215 = vld [vmem:[#allocation4 + $0x260] sm:$0xff]
    %v216 = vld [vmem:[#allocation4 + $0x268] sm:$0xff]
    %v217 = vld [vmem:[#allocation4 + $0x270] sm:$0xff]
    %v218 = vld [vmem:[#allocation4 + $0x278] sm:$0xff]
    %v219 = vld [vmem:[#allocation4 + $0x280] sm:$0xff]
    %v220 = vld [vmem:[#allocation4 + $0x288] sm:$0xff]
    %v221 = vld [vmem:[#allocation4 + $0x290] sm:$0xff]
    %v222 = vld [vmem:[#allocation4 + $0x298] sm:$0xff]
    %v223 = vld [vmem:[#allocation4 + $0x2a0] sm:$0xff]
    %v224 = vld [vmem:[#allocation4 + $0x2a8] sm:$0xff]
    %v225 = vld [vmem:[#allocation4 + $0x2b0] sm:$0xff]
    %v226 = vld [vmem:[#allocation4 + $0x2b8] sm:$0xff]
    %v227 = vld [vmem:[#allocation4 + $0x2c0] sm:$0xff]
    %v228 = vld [vmem:[#allocation4 + $0x2c8] sm:$0xff]
    %v229 = vld [vmem:[#allocation4 + $0x2d0] sm:$0xff]
    %v230 = vld [vmem:[#allocation4 + $0x2d8] sm:$0xff]
    %v231 = vld [vmem:[#allocation4 + $0x2e0] sm:$0xff]
    %v232 = vld [vmem:[#allocation4 + $0x2e8] sm:$0xff]
    %v233 = vld [vmem:[#allocation4 + $0x2f0] sm:$0xff]
    %v234 = vld [vmem:[#allocation4 + $0x2f8] sm:$0xff]
    %v235 = vld [vmem:[#allocation4 + $0x300] sm:$0xff]
    %v236 = vld [vmem:[#allocation4 + $0x308] sm:$0xff]
    %v237 = vld [vmem:[#allocation4 + $0x310] sm:$0xff]
    %v238 = vld [vmem:[#allocation4 + $0x318] sm:$0xff]
    %v239 = vld [vmem:[#allocation4 + $0x320] sm:$0xff]
    %v240 = vld [vmem:[#allocation4 + $0x328] sm:$0xff]
    %v241 = vld [vmem:[#allocation4 + $0x330] sm:$0xff]
    %v242 = vld [vmem:[#allocation4 + $0x338] sm:$0xff]
    %v243 = vld [vmem:[#allocation4 + $0x340] sm:$0xff]
    %v244 = vld [vmem:[#allocation4 + $0x348] sm:$0xff]
    %v245 = vld [vmem:[#allocation4 + $0x350] sm:$0xff]
    %v246 = vld [vmem:[#allocation4 + $0x358] sm:$0xff]
    %v247 = vld [vmem:[#allocation4 + $0x360] sm:$0xff]
    %v248 = vld [vmem:[#allocation4 + $0x368] sm:$0xff]
    %v249 = vld [vmem:[#allocation4 + $0x370] sm:$0xff]
    %v250 = vld [vmem:[#allocation4 + $0x378] sm:$0xff]
    %v251 = vld [vmem:[#allocation4 + $0x380] sm:$0xff]
    %v252 = vld [vmem:[#allocation4 + $0x388] sm:$0xff]
    %v253 = vld [vmem:[#allocation4 + $0x390] sm:$0xff]
    %v254 = vld [vmem:[#allocation4 + $0x398] sm:$0xff]
    %v255 = vld [vmem:[#allocation4 + $0x3a0] sm:$0xff]
    %v256 = vld [vmem:[#allocation4 + $0x3a8] sm:$0xff]
    %v257 = vld [vmem:[#allocation4 + $0x3b0] sm:$0xff]
    %v258 = vld [vmem:[#allocation4 + $0x3b8] sm:$0xff]
    %v259 = vld [vmem:[#allocation4 + $0x3c0] sm:$0xff]
    %v260 = vld [vmem:[#allocation4 + $0x3c8] sm:$0xff]
    %v261 = vld [vmem:[#allocation4 + $0x3d0] sm:$0xff]
    %v262 = vld [vmem:[#allocation4 + $0x3d8] sm:$0xff]
    %v263 = vld [vmem:[#allocation4 + $0x3e0] sm:$0xff]
    %v264 = vld [vmem:[#allocation4 + $0x3e8] sm:$0xff]
    %v265 = vld [vmem:[#allocation4 + $0x3f0] sm:$0xff]
    %v266 = vld [vmem:[#allocation4 + $0x3f8] sm:$0xff]
    %v267 = vld [vmem:[#allocation4 + $0x400] sm:$0xff]
    %v268 = vld [vmem:[#allocation4 + $0x408] sm:$0xff]
    %v269 = vld [vmem:[#allocation4 + $0x410] sm:$0xff]
    %v270 = vld [vmem:[#allocation4 + $0x418] sm:$0xff]
    %v271 = vld [vmem:[#allocation4 + $0x420] sm:$0xff]
    %v272 = vld [vmem:[#allocation4 + $0x428] sm:$0xff]
    %v273 = vld [vmem:[#allocation4 + $0x430] sm:$0xff]
    %v274 = vld [vmem:[#allocation4 + $0x438] sm:$0xff]
    %v275 = vld [vmem:[#allocation4 + $0x440] sm:$0xff]
    %v276 = vld [vmem:[#allocation4 + $0x448] sm:$0xff]
    %v277 = vld [vmem:[#allocation4 + $0x450] sm:$0xff]
    %v278 = vld [vmem:[#allocation4 + $0x458] sm:$0xff]
    %v279 = vld [vmem:[#allocation4 + $0x460] sm:$0xff]
    %v280 = vld [vmem:[#allocation4 + $0x468] sm:$0xff]
    %v281 = vld [vmem:[#allocation4 + $0x470] sm:$0xff]
    %v282 = vld [vmem:[#allocation4 + $0x478] sm:$0xff]
    %v283 = vld [vmem:[#allocation4 + $0x480] sm:$0xff]
    %v284 = vld [vmem:[#allocation4 + $0x488] sm:$0xff]
    %v285 = vld [vmem:[#allocation4 + $0x490] sm:$0xff]
    %v286 = vld [vmem:[#allocation4 + $0x498] sm:$0xff]
    %v287 = vld [vmem:[#allocation4 + $0x4a0] sm:$0xff]
    %v288 = vld [vmem:[#allocation4 + $0x4a8] sm:$0xff]
    %v289 = vld [vmem:[#allocation4 + $0x4b0] sm:$0xff]
    %v290 = vld [vmem:[#allocation4 + $0x4b8] sm:$0xff]
    %v291 = vld [vmem:[#allocation4 + $0x4c0] sm:$0xff]
    %v292 = vld [vmem:[#allocation4 + $0x4c8] sm:$0xff]
    %v293 = vld [vmem:[#allocation4 + $0x4d0] sm:$0xff]
    %v294 = vld [vmem:[#allocation4 + $0x4d8] sm:$0xff]
    %v295 = vld [vmem:[#allocation4 + $0x4e0] sm:$0xff]
    %v296 = vld [vmem:[#allocation4 + $0x4e8] sm:$0xff]
    %v297 = vld [vmem:[#allocation4 + $0x4f0] sm:$0xff]
    %v298 = vld [vmem:[#allocation4 + $0x4f8] sm:$0xff]
    %v299 = vld [vmem:[#allocation4 + $0x500] sm:$0xff]
    %v300 = vld [vmem:[#allocation4 + $0x508] sm:$0xff]
    %v301 = vld [vmem:[#allocation4 + $0x510] sm:$0xff]
    %v302 = vld [vmem:[#allocation4 + $0x518] sm:$0xff]
    %v303 = vld [vmem:[#allocation4 + $0x520] sm:$0xff]
    %v304 = vld [vmem:[#allocation4 + $0x528] sm:$0xff]
    %v305 = vld [vmem:[#allocation4 + $0x530] sm:$0xff]
    %v306 = vld [vmem:[#allocation4 + $0x538] sm:$0xff]
    %v307 = vld [vmem:[#allocation4 + $0x540] sm:$0xff]
    %v308 = vld [vmem:[#allocation4 + $0x548] sm:$0xff]
    %v309 = vld [vmem:[#allocation4 + $0x550] sm:$0xff]
    %v310 = vld [vmem:[#allocation4 + $0x558] sm:$0xff]
    %v311 = vld [vmem:[#allocation4 + $0x560] sm:$0xff]
    %v312 = vld [vmem:[#allocation4 + $0x568] sm:$0xff]
    %v313 = vld [vmem:[#allocation4 + $0x570] sm:$0xff]
    %v314 = vld [vmem:[#allocation4 + $0x578] sm:$0xff]
    %v315 = vld [vmem:[#allocation4 + $0x580] sm:$0xff]
    %v316 = vld [vmem:[#allocation4 + $0x588] sm:$0xff]
    %v317 = vld [vmem:[#allocation4 + $0x590] sm:$0xff]
    %v318 = vld [vmem:[#allocation4 + $0x598] sm:$0xff]
    %v319 = vld [vmem:[#allocation4 + $0x5a0] sm:$0xff]
    %v320 = vld [vmem:[#allocation4 + $0x5a8] sm:$0xff]
    %v321 = vld [vmem:[#allocation4 + $0x5b0] sm:$0xff]
    %v322 = vld [vmem:[#allocation4 + $0x5b8] sm:$0xff]
    %v323 = vld [vmem:[#allocation4 + $0x5c0] sm:$0xff]
    %v324 = vld [vmem:[#allocation4 + $0x5c8] sm:$0xff]
    %v325 = vld [vmem:[#allocation4 + $0x5d0] sm:$0xff]
    %v326 = vld [vmem:[#allocation4 + $0x5d8] sm:$0xff]
    %v327 = vld [vmem:[#allocation4 + $0x5e0] sm:$0xff]
    %v328 = vld [vmem:[#allocation4 + $0x5e8] sm:$0xff]
    %v329 = vld [vmem:[#allocation4 + $0x5f0] sm:$0xff]
    %v330 = vld [vmem:[#allocation4 + $0x5f8] sm:$0xff]
    %v331 = vld [vmem:[#allocation4 + $0x600] sm:$0xff]
    %v332 = vld [vmem:[#allocation4 + $0x608] sm:$0xff]
    %v333 = vld [vmem:[#allocation4 + $0x610] sm:$0xff]
    %v334 = vld [vmem:[#allocation4 + $0x618] sm:$0xff]
    %v335 = vld [vmem:[#allocation4 + $0x620] sm:$0xff]
    %v336 = vld [vmem:[#allocation4 + $0x628] sm:$0xff]
    %v337 = vld [vmem:[#allocation4 + $0x630] sm:$0xff]
    %v338 = vld [vmem:[#allocation4 + $0x638] sm:$0xff]
    %v339 = vld [vmem:[#allocation4 + $0x640] sm:$0xff]
    %v340 = vld [vmem:[#allocation4 + $0x648] sm:$0xff]
    %v341 = vld [vmem:[#allocation4 + $0x650] sm:$0xff]
    %v342 = vld [vmem:[#allocation4 + $0x658] sm:$0xff]
    %v343 = vld [vmem:[#allocation4 + $0x660] sm:$0xff]
    %v344 = vld [vmem:[#allocation4 + $0x668] sm:$0xff]
    %v345 = vld [vmem:[#allocation4 + $0x670] sm:$0xff]
    %v346 = vld [vmem:[#allocation4 + $0x678] sm:$0xff]
    %v347 = vld [vmem:[#allocation4 + $0x680] sm:$0xff]
    %v348 = vld [vmem:[#allocation4 + $0x688] sm:$0xff]
    %v349 = vld [vmem:[#allocation4 + $0x690] sm:$0xff]
    %v350 = vld [vmem:[#allocation4 + $0x698] sm:$0xff]
    %v351 = vld [vmem:[#allocation4 + $0x6a0] sm:$0xff]
    %v352 = vld [vmem:[#allocation4 + $0x6a8] sm:$0xff]
    %v353 = vld [vmem:[#allocation4 + $0x6b0] sm:$0xff]
    %v354 = vld [vmem:[#allocation4 + $0x6b8] sm:$0xff]
    %v355 = vld [vmem:[#allocation4 + $0x6c0] sm:$0xff]
    %v356 = vld [vmem:[#allocation4 + $0x6c8] sm:$0xff]
    %v357 = vld [vmem:[#allocation4 + $0x6d0] sm:$0xff]
    %v358 = vld [vmem:[#allocation4 + $0x6d8] sm:$0xff]
    %v359 = vld [vmem:[#allocation4 + $0x6e0] sm:$0xff]
    %v360 = vld [vmem:[#allocation4 + $0x6e8] sm:$0xff]
    %v361 = vld [vmem:[#allocation4 + $0x6f0] sm:$0xff]
    %v362 = vld [vmem:[#allocation4 + $0x6f8] sm:$0xff]
    %v363 = vld [vmem:[#allocation4 + $0x700] sm:$0xff]
    %v364 = vld [vmem:[#allocation4 + $0x708] sm:$0xff]
    %v365 = vld [vmem:[#allocation4 + $0x710] sm:$0xff]
    %v366 = vld [vmem:[#allocation4 + $0x718] sm:$0xff]
    %v367 = vld [vmem:[#allocation4 + $0x720] sm:$0xff]
    %v368 = vld [vmem:[#allocation4 + $0x728] sm:$0xff]
    %v369 = vld [vmem:[#allocation4 + $0x730] sm:$0xff]
    %v370 = vld [vmem:[#allocation4 + $0x738] sm:$0xff]
    %v371 = vld [vmem:[#allocation4 + $0x740] sm:$0xff]
    %v372 = vld [vmem:[#allocation4 + $0x748] sm:$0xff]
    %v373 = vld [vmem:[#allocation4 + $0x750] sm:$0xff]
    %v374 = vld [vmem:[#allocation4 + $0x758] sm:$0xff]
    %v375 = vld [vmem:[#allocation4 + $0x760] sm:$0xff]
    %v376 = vld [vmem:[#allocation4 + $0x768] sm:$0xff]
    %v377 = vld [vmem:[#allocation4 + $0x770] sm:$0xff]
    %v378 = vld [vmem:[#allocation4 + $0x778] sm:$0xff]
    %v379 = vld [vmem:[#allocation4 + $0x780] sm:$0xff]
    %v380 = vld [vmem:[#allocation4 + $0x788] sm:$0xff]
    %v381 = vld [vmem:[#allocation4 + $0x790] sm:$0xff]
    %v382 = vld [vmem:[#allocation4 + $0x798] sm:$0xff]
    %v383 = vld [vmem:[#allocation4 + $0x7a0] sm:$0xff]
    %v384 = vld [vmem:[#allocation4 + $0x7a8] sm:$0xff]
    %v385 = vld [vmem:[#allocation4 + $0x7b0] sm:$0xff]
    %v386 = vld [vmem:[#allocation4 + $0x7b8] sm:$0xff]
    %v387 = vld [vmem:[#allocation4 + $0x7c0] sm:$0xff]
    %v388 = vld [vmem:[#allocation4 + $0x7c8] sm:$0xff]
    %v389 = vld [vmem:[#allocation4 + $0x7d0] sm:$0xff]
    %v390 = vld [vmem:[#allocation4 + $0x7d8] sm:$0xff]
    %v391 = vld [vmem:[#allocation4 + $0x7e0] sm:$0xff]
    %v392 = vld [vmem:[#allocation4 + $0x7e8] sm:$0xff]
    %v393 = vld [vmem:[#allocation4 + $0x7f0] sm:$0xff]
    %v394 = vld [vmem:[#allocation4 + $0x7f8] sm:$0xff]
    %v397 = vlaneseq
    %v398 = vshrl.u32 %v397, 7
    %v399 = vsub.s32 0, %v398
    %v400 = vrot.slane %v129, %v399
    %v401 = vlaneseq
    %v402 = vshrl.u32 %v401, 7
    %v403 = vsub.s32 4, %v402
    %v404 = vrot.slane %v129, %v403
    %v405 = vlaneseq
    %v406 = vshrl.u32 %v405, 7
    %v407 = vsub.s32 0, %v406
    %v408 = vrot.slane %v130, %v407
    %v409 = vlaneseq
    %v410 = vshrl.u32 %v409, 7
    %v411 = vsub.s32 4, %v410
    %v412 = vrot.slane %v130, %v411
    %v417 = vlaneseq
    %v418 = vshrl.u32 %v417, 7
    %v419 = vsub.s32 0, %v418
    %v420 = vrot.slane %v400, %v419
    %v421 = vlaneseq
    %v422 = vshrl.u32 %v421, 7
    %v423 = vsub.s32 0, %v422
    %v424 = vrot.slane %v404, %v423
    %v425 = vlaneseq
    %v426 = vshrl.u32 %v425, 7
    %v427 = vsub.s32 0, %v426
    %v428 = vrot.slane %v408, %v427
    %v429 = vlaneseq
    %v430 = vshrl.u32 %v429, 7
    %v431 = vsub.s32 0, %v430
    %v432 = vrot.slane %v412, %v431
    %v689 = vunpack.c.l.b16 %v139
    %v690 = vunpack.c.h.b16 %v139
    %v691 = vunpack.c.l.b16 %v140
    %v692 = vunpack.c.h.b16 %v140
    %v693 = vunpack.c.l.b16 %v141
    %v694 = vunpack.c.h.b16 %v141
    %v695 = vunpack.c.l.b16 %v142
    %v696 = vunpack.c.h.b16 %v142
    %v697 = vunpack.c.l.b16 %v143
    %v698 = vunpack.c.h.b16 %v143
    %v699 = vunpack.c.l.b16 %v144
    %v700 = vunpack.c.h.b16 %v144
    %v701 = vunpack.c.l.b16 %v145
    %v702 = vunpack.c.h.b16 %v145
    %v703 = vunpack.c.l.b16 %v146
    %v704 = vunpack.c.h.b16 %v146
    %v705 = vunpack.c.l.b16 %v147
    %v706 = vunpack.c.h.b16 %v147
    %v707 = vunpack.c.l.b16 %v148
    %v708 = vunpack.c.h.b16 %v148
    %v709 = vunpack.c.l.b16 %v149
    %v710 = vunpack.c.h.b16 %v149
    %v711 = vunpack.c.l.b16 %v150
    %v712 = vunpack.c.h.b16 %v150
    %v713 = vunpack.c.l.b16 %v151
    %v714 = vunpack.c.h.b16 %v151
    %v715 = vunpack.c.l.b16 %v152
    %v716 = vunpack.c.h.b16 %v152
    %v717 = vunpack.c.l.b16 %v153
    %v718 = vunpack.c.h.b16 %v153
    %v719 = vunpack.c.l.b16 %v154
    %v720 = vunpack.c.h.b16 %v154
    %v721 = vunpack.c.l.b16 %v155
    %v722 = vunpack.c.h.b16 %v155
    %v723 = vunpack.c.l.b16 %v156
    %v724 = vunpack.c.h.b16 %v156
    %v725 = vunpack.c.l.b16 %v157
    %v726 = vunpack.c.h.b16 %v157
    %v727 = vunpack.c.l.b16 %v158
    %v728 = vunpack.c.h.b16 %v158
    %v729 = vunpack.c.l.b16 %v159
    %v730 = vunpack.c.h.b16 %v159
    %v731 = vunpack.c.l.b16 %v160
    %v732 = vunpack.c.h.b16 %v160
    %v733 = vunpack.c.l.b16 %v161
    %v734 = vunpack.c.h.b16 %v161
    %v735 = vunpack.c.l.b16 %v162
    %v736 = vunpack.c.h.b16 %v162
    %v737 = vunpack.c.l.b16 %v163
    %v738 = vunpack.c.h.b16 %v163
    %v739 = vunpack.c.l.b16 %v164
    %v740 = vunpack.c.h.b16 %v164
    %v741 = vunpack.c.l.b16 %v165
    %v742 = vunpack.c.h.b16 %v165
    %v743 = vunpack.c.l.b16 %v166
    %v744 = vunpack.c.h.b16 %v166
    %v745 = vunpack.c.l.b16 %v167
    %v746 = vunpack.c.h.b16 %v167
    %v747 = vunpack.c.l.b16 %v168
    %v748 = vunpack.c.h.b16 %v168
    %v749 = vunpack.c.l.b16 %v169
    %v750 = vunpack.c.h.b16 %v169
    %v751 = vunpack.c.l.b16 %v170
    %v752 = vunpack.c.h.b16 %v170
    %v753 = vunpack.c.l.b16 %v171
    %v754 = vunpack.c.h.b16 %v171
    %v755 = vunpack.c.l.b16 %v172
    %v756 = vunpack.c.h.b16 %v172
    %v757 = vunpack.c.l.b16 %v173
    %v758 = vunpack.c.h.b16 %v173
    %v759 = vunpack.c.l.b16 %v174
    %v760 = vunpack.c.h.b16 %v174
    %v761 = vunpack.c.l.b16 %v175
    %v762 = vunpack.c.h.b16 %v175
    %v763 = vunpack.c.l.b16 %v176
    %v764 = vunpack.c.h.b16 %v176
    %v765 = vunpack.c.l.b16 %v177
    %v766 = vunpack.c.h.b16 %v177
    %v767 = vunpack.c.l.b16 %v178
    %v768 = vunpack.c.h.b16 %v178
    %v769 = vunpack.c.l.b16 %v179
    %v770 = vunpack.c.h.b16 %v179
    %v771 = vunpack.c.l.b16 %v180
    %v772 = vunpack.c.h.b16 %v180
    %v773 = vunpack.c.l.b16 %v181
    %v774 = vunpack.c.h.b16 %v181
    %v775 = vunpack.c.l.b16 %v182
    %v776 = vunpack.c.h.b16 %v182
    %v777 = vunpack.c.l.b16 %v183
    %v778 = vunpack.c.h.b16 %v183
    %v779 = vunpack.c.l.b16 %v184
    %v780 = vunpack.c.h.b16 %v184
    %v781 = vunpack.c.l.b16 %v185
    %v782 = vunpack.c.h.b16 %v185
    %v783 = vunpack.c.l.b16 %v186
    %v784 = vunpack.c.h.b16 %v186
    %v785 = vunpack.c.l.b16 %v187
    %v786 = vunpack.c.h.b16 %v187
    %v787 = vunpack.c.l.b16 %v188
    %v788 = vunpack.c.h.b16 %v188
    %v789 = vunpack.c.l.b16 %v189
    %v790 = vunpack.c.h.b16 %v189
    %v791 = vunpack.c.l.b16 %v190
    %v792 = vunpack.c.h.b16 %v190
    %v793 = vunpack.c.l.b16 %v191
    %v794 = vunpack.c.h.b16 %v191
    %v795 = vunpack.c.l.b16 %v192
    %v796 = vunpack.c.h.b16 %v192
    %v797 = vunpack.c.l.b16 %v193
    %v798 = vunpack.c.h.b16 %v193
    %v799 = vunpack.c.l.b16 %v194
    %v800 = vunpack.c.h.b16 %v194
    %v801 = vunpack.c.l.b16 %v195
    %v802 = vunpack.c.h.b16 %v195
    %v803 = vunpack.c.l.b16 %v196
    %v804 = vunpack.c.h.b16 %v196
    %v805 = vunpack.c.l.b16 %v197
    %v806 = vunpack.c.h.b16 %v197
    %v807 = vunpack.c.l.b16 %v198
    %v808 = vunpack.c.h.b16 %v198
    %v809 = vunpack.c.l.b16 %v199
    %v810 = vunpack.c.h.b16 %v199
    %v811 = vunpack.c.l.b16 %v200
    %v812 = vunpack.c.h.b16 %v200
    %v813 = vunpack.c.l.b16 %v201
    %v814 = vunpack.c.h.b16 %v201
    %v815 = vunpack.c.l.b16 %v202
    %v816 = vunpack.c.h.b16 %v202
    %v817 = vunpack.c.l.b16 %v203
    %v818 = vunpack.c.h.b16 %v203
    %v819 = vunpack.c.l.b16 %v204
    %v820 = vunpack.c.h.b16 %v204
    %v821 = vunpack.c.l.b16 %v205
    %v822 = vunpack.c.h.b16 %v205
    %v823 = vunpack.c.l.b16 %v206
    %v824 = vunpack.c.h.b16 %v206
    %v825 = vunpack.c.l.b16 %v207
    %v826 = vunpack.c.h.b16 %v207
    %v827 = vunpack.c.l.b16 %v208
    %v828 = vunpack.c.h.b16 %v208
    %v829 = vunpack.c.l.b16 %v209
    %v830 = vunpack.c.h.b16 %v209
    %v831 = vunpack.c.l.b16 %v210
    %v832 = vunpack.c.h.b16 %v210
    %v833 = vunpack.c.l.b16 %v211
    %v834 = vunpack.c.h.b16 %v211
    %v835 = vunpack.c.l.b16 %v212
    %v836 = vunpack.c.h.b16 %v212
    %v837 = vunpack.c.l.b16 %v213
    %v838 = vunpack.c.h.b16 %v213
    %v839 = vunpack.c.l.b16 %v214
    %v840 = vunpack.c.h.b16 %v214
    %v841 = vunpack.c.l.b16 %v215
    %v842 = vunpack.c.h.b16 %v215
    %v843 = vunpack.c.l.b16 %v216
    %v844 = vunpack.c.h.b16 %v216
    %v845 = vunpack.c.l.b16 %v217
    %v846 = vunpack.c.h.b16 %v217
    %v847 = vunpack.c.l.b16 %v218
    %v848 = vunpack.c.h.b16 %v218
    %v849 = vunpack.c.l.b16 %v219
    %v850 = vunpack.c.h.b16 %v219
    %v851 = vunpack.c.l.b16 %v220
    %v852 = vunpack.c.h.b16 %v220
    %v853 = vunpack.c.l.b16 %v221
    %v854 = vunpack.c.h.b16 %v221
    %v855 = vunpack.c.l.b16 %v222
    %v856 = vunpack.c.h.b16 %v222
    %v857 = vunpack.c.l.b16 %v223
    %v858 = vunpack.c.h.b16 %v223
    %v859 = vunpack.c.l.b16 %v224
    %v860 = vunpack.c.h.b16 %v224
    %v861 = vunpack.c.l.b16 %v225
    %v862 = vunpack.c.h.b16 %v225
    %v863 = vunpack.c.l.b16 %v226
    %v864 = vunpack.c.h.b16 %v226
    %v865 = vunpack.c.l.b16 %v227
    %v866 = vunpack.c.h.b16 %v227
    %v867 = vunpack.c.l.b16 %v228
    %v868 = vunpack.c.h.b16 %v228
    %v869 = vunpack.c.l.b16 %v229
    %v870 = vunpack.c.h.b16 %v229
    %v871 = vunpack.c.l.b16 %v230
    %v872 = vunpack.c.h.b16 %v230
    %v873 = vunpack.c.l.b16 %v231
    %v874 = vunpack.c.h.b16 %v231
    %v875 = vunpack.c.l.b16 %v232
    %v876 = vunpack.c.h.b16 %v232
    %v877 = vunpack.c.l.b16 %v233
    %v878 = vunpack.c.h.b16 %v233
    %v879 = vunpack.c.l.b16 %v234
    %v880 = vunpack.c.h.b16 %v234
    %v881 = vunpack.c.l.b16 %v235
    %v882 = vunpack.c.h.b16 %v235
    %v883 = vunpack.c.l.b16 %v236
    %v884 = vunpack.c.h.b16 %v236
    %v885 = vunpack.c.l.b16 %v237
    %v886 = vunpack.c.h.b16 %v237
    %v887 = vunpack.c.l.b16 %v238
    %v888 = vunpack.c.h.b16 %v238
    %v889 = vunpack.c.l.b16 %v239
    %v890 = vunpack.c.h.b16 %v239
    %v891 = vunpack.c.l.b16 %v240
    %v892 = vunpack.c.h.b16 %v240
    %v893 = vunpack.c.l.b16 %v241
    %v894 = vunpack.c.h.b16 %v241
    %v895 = vunpack.c.l.b16 %v242
    %v896 = vunpack.c.h.b16 %v242
    %v897 = vunpack.c.l.b16 %v243
    %v898 = vunpack.c.h.b16 %v243
    %v899 = vunpack.c.l.b16 %v244
    %v900 = vunpack.c.h.b16 %v244
    %v901 = vunpack.c.l.b16 %v245
    %v902 = vunpack.c.h.b16 %v245
    %v903 = vunpack.c.l.b16 %v246
    %v904 = vunpack.c.h.b16 %v246
    %v905 = vunpack.c.l.b16 %v247
    %v906 = vunpack.c.h.b16 %v247
    %v907 = vunpack.c.l.b16 %v248
    %v908 = vunpack.c.h.b16 %v248
    %v909 = vunpack.c.l.b16 %v249
    %v910 = vunpack.c.h.b16 %v249
    %v911 = vunpack.c.l.b16 %v250
    %v912 = vunpack.c.h.b16 %v250
    %v913 = vunpack.c.l.b16 %v251
    %v914 = vunpack.c.h.b16 %v251
    %v915 = vunpack.c.l.b16 %v252
    %v916 = vunpack.c.h.b16 %v252
    %v917 = vunpack.c.l.b16 %v253
    %v918 = vunpack.c.h.b16 %v253
    %v919 = vunpack.c.l.b16 %v254
    %v920 = vunpack.c.h.b16 %v254
    %v921 = vunpack.c.l.b16 %v255
    %v922 = vunpack.c.h.b16 %v255
    %v923 = vunpack.c.l.b16 %v256
    %v924 = vunpack.c.h.b16 %v256
    %v925 = vunpack.c.l.b16 %v257
    %v926 = vunpack.c.h.b16 %v257
    %v927 = vunpack.c.l.b16 %v258
    %v928 = vunpack.c.h.b16 %v258
    %v929 = vunpack.c.l.b16 %v259
    %v930 = vunpack.c.h.b16 %v259
    %v931 = vunpack.c.l.b16 %v260
    %v932 = vunpack.c.h.b16 %v260
    %v933 = vunpack.c.l.b16 %v261
    %v934 = vunpack.c.h.b16 %v261
    %v935 = vunpack.c.l.b16 %v262
    %v936 = vunpack.c.h.b16 %v262
    %v937 = vunpack.c.l.b16 %v263
    %v938 = vunpack.c.h.b16 %v263
    %v939 = vunpack.c.l.b16 %v264
    %v940 = vunpack.c.h.b16 %v264
    %v941 = vunpack.c.l.b16 %v265
    %v942 = vunpack.c.h.b16 %v265
    %v943 = vunpack.c.l.b16 %v266
    %v944 = vunpack.c.h.b16 %v266
    %v945 = vunpack.c.l.b16 %v267
    %v946 = vunpack.c.h.b16 %v267
    %v947 = vunpack.c.l.b16 %v268
    %v948 = vunpack.c.h.b16 %v268
    %v949 = vunpack.c.l.b16 %v269
    %v950 = vunpack.c.h.b16 %v269
    %v951 = vunpack.c.l.b16 %v270
    %v952 = vunpack.c.h.b16 %v270
    %v953 = vunpack.c.l.b16 %v271
    %v954 = vunpack.c.h.b16 %v271
    %v955 = vunpack.c.l.b16 %v272
    %v956 = vunpack.c.h.b16 %v272
    %v957 = vunpack.c.l.b16 %v273
    %v958 = vunpack.c.h.b16 %v273
    %v959 = vunpack.c.l.b16 %v274
    %v960 = vunpack.c.h.b16 %v274
    %v961 = vunpack.c.l.b16 %v275
    %v962 = vunpack.c.h.b16 %v275
    %v963 = vunpack.c.l.b16 %v276
    %v964 = vunpack.c.h.b16 %v276
    %v965 = vunpack.c.l.b16 %v277
    %v966 = vunpack.c.h.b16 %v277
    %v967 = vunpack.c.l.b16 %v278
    %v968 = vunpack.c.h.b16 %v278
    %v969 = vunpack.c.l.b16 %v279
    %v970 = vunpack.c.h.b16 %v279
    %v971 = vunpack.c.l.b16 %v280
    %v972 = vunpack.c.h.b16 %v280
    %v973 = vunpack.c.l.b16 %v281
    %v974 = vunpack.c.h.b16 %v281
    %v975 = vunpack.c.l.b16 %v282
    %v976 = vunpack.c.h.b16 %v282
    %v977 = vunpack.c.l.b16 %v283
    %v978 = vunpack.c.h.b16 %v283
    %v979 = vunpack.c.l.b16 %v284
    %v980 = vunpack.c.h.b16 %v284
    %v981 = vunpack.c.l.b16 %v285
    %v982 = vunpack.c.h.b16 %v285
    %v983 = vunpack.c.l.b16 %v286
    %v984 = vunpack.c.h.b16 %v286
    %v985 = vunpack.c.l.b16 %v287
    %v986 = vunpack.c.h.b16 %v287
    %v987 = vunpack.c.l.b16 %v288
    %v988 = vunpack.c.h.b16 %v288
    %v989 = vunpack.c.l.b16 %v289
    %v990 = vunpack.c.h.b16 %v289
    %v991 = vunpack.c.l.b16 %v290
    %v992 = vunpack.c.h.b16 %v290
    %v993 = vunpack.c.l.b16 %v291
    %v994 = vunpack.c.h.b16 %v291
    %v995 = vunpack.c.l.b16 %v292
    %v996 = vunpack.c.h.b16 %v292
    %v997 = vunpack.c.l.b16 %v293
    %v998 = vunpack.c.h.b16 %v293
    %v999 = vunpack.c.l.b16 %v294
    %v1000 = vunpack.c.h.b16 %v294
    %v1001 = vunpack.c.l.b16 %v295
    %v1002 = vunpack.c.h.b16 %v295
    %v1003 = vunpack.c.l.b16 %v296
    %v1004 = vunpack.c.h.b16 %v296
    %v1005 = vunpack.c.l.b16 %v297
    %v1006 = vunpack.c.h.b16 %v297
    %v1007 = vunpack.c.l.b16 %v298
    %v1008 = vunpack.c.h.b16 %v298
    %v1009 = vunpack.c.l.b16 %v299
    %v1010 = vunpack.c.h.b16 %v299
    %v1011 = vunpack.c.l.b16 %v300
    %v1012 = vunpack.c.h.b16 %v300
    %v1013 = vunpack.c.l.b16 %v301
    %v1014 = vunpack.c.h.b16 %v301
    %v1015 = vunpack.c.l.b16 %v302
    %v1016 = vunpack.c.h.b16 %v302
    %v1017 = vunpack.c.l.b16 %v303
    %v1018 = vunpack.c.h.b16 %v303
    %v1019 = vunpack.c.l.b16 %v304
    %v1020 = vunpack.c.h.b16 %v304
    %v1021 = vunpack.c.l.b16 %v305
    %v1022 = vunpack.c.h.b16 %v305
    %v1023 = vunpack.c.l.b16 %v306
    %v1024 = vunpack.c.h.b16 %v306
    %v1025 = vunpack.c.l.b16 %v307
    %v1026 = vunpack.c.h.b16 %v307
    %v1027 = vunpack.c.l.b16 %v308
    %v1028 = vunpack.c.h.b16 %v308
    %v1029 = vunpack.c.l.b16 %v309
    %v1030 = vunpack.c.h.b16 %v309
    %v1031 = vunpack.c.l.b16 %v310
    %v1032 = vunpack.c.h.b16 %v310
    %v1033 = vunpack.c.l.b16 %v311
    %v1034 = vunpack.c.h.b16 %v311
    %v1035 = vunpack.c.l.b16 %v312
    %v1036 = vunpack.c.h.b16 %v312
    %v1037 = vunpack.c.l.b16 %v313
    %v1038 = vunpack.c.h.b16 %v313
    %v1039 = vunpack.c.l.b16 %v314
    %v1040 = vunpack.c.h.b16 %v314
    %v1041 = vunpack.c.l.b16 %v315
    %v1042 = vunpack.c.h.b16 %v315
    %v1043 = vunpack.c.l.b16 %v316
    %v1044 = vunpack.c.h.b16 %v316
    %v1045 = vunpack.c.l.b16 %v317
    %v1046 = vunpack.c.h.b16 %v317
    %v1047 = vunpack.c.l.b16 %v318
    %v1048 = vunpack.c.h.b16 %v318
    %v1049 = vunpack.c.l.b16 %v319
    %v1050 = vunpack.c.h.b16 %v319
    %v1051 = vunpack.c.l.b16 %v320
    %v1052 = vunpack.c.h.b16 %v320
    %v1053 = vunpack.c.l.b16 %v321
    %v1054 = vunpack.c.h.b16 %v321
    %v1055 = vunpack.c.l.b16 %v322
    %v1056 = vunpack.c.h.b16 %v322
    %v1057 = vunpack.c.l.b16 %v323
    %v1058 = vunpack.c.h.b16 %v323
    %v1059 = vunpack.c.l.b16 %v324
    %v1060 = vunpack.c.h.b16 %v324
    %v1061 = vunpack.c.l.b16 %v325
    %v1062 = vunpack.c.h.b16 %v325
    %v1063 = vunpack.c.l.b16 %v326
    %v1064 = vunpack.c.h.b16 %v326
    %v1065 = vunpack.c.l.b16 %v327
    %v1066 = vunpack.c.h.b16 %v327
    %v1067 = vunpack.c.l.b16 %v328
    %v1068 = vunpack.c.h.b16 %v328
    %v1069 = vunpack.c.l.b16 %v329
    %v1070 = vunpack.c.h.b16 %v329
    %v1071 = vunpack.c.l.b16 %v330
    %v1072 = vunpack.c.h.b16 %v330
    %v1073 = vunpack.c.l.b16 %v331
    %v1074 = vunpack.c.h.b16 %v331
    %v1075 = vunpack.c.l.b16 %v332
    %v1076 = vunpack.c.h.b16 %v332
    %v1077 = vunpack.c.l.b16 %v333
    %v1078 = vunpack.c.h.b16 %v333
    %v1079 = vunpack.c.l.b16 %v334
    %v1080 = vunpack.c.h.b16 %v334
    %v1081 = vunpack.c.l.b16 %v335
    %v1082 = vunpack.c.h.b16 %v335
    %v1083 = vunpack.c.l.b16 %v336
    %v1084 = vunpack.c.h.b16 %v336
    %v1085 = vunpack.c.l.b16 %v337
    %v1086 = vunpack.c.h.b16 %v337
    %v1087 = vunpack.c.l.b16 %v338
    %v1088 = vunpack.c.h.b16 %v338
    %v1089 = vunpack.c.l.b16 %v339
    %v1090 = vunpack.c.h.b16 %v339
    %v1091 = vunpack.c.l.b16 %v340
    %v1092 = vunpack.c.h.b16 %v340
    %v1093 = vunpack.c.l.b16 %v341
    %v1094 = vunpack.c.h.b16 %v341
    %v1095 = vunpack.c.l.b16 %v342
    %v1096 = vunpack.c.h.b16 %v342
    %v1097 = vunpack.c.l.b16 %v343
    %v1098 = vunpack.c.h.b16 %v343
    %v1099 = vunpack.c.l.b16 %v344
    %v1100 = vunpack.c.h.b16 %v344
    %v1101 = vunpack.c.l.b16 %v345
    %v1102 = vunpack.c.h.b16 %v345
    %v1103 = vunpack.c.l.b16 %v346
    %v1104 = vunpack.c.h.b16 %v346
    %v1105 = vunpack.c.l.b16 %v347
    %v1106 = vunpack.c.h.b16 %v347
    %v1107 = vunpack.c.l.b16 %v348
    %v1108 = vunpack.c.h.b16 %v348
    %v1109 = vunpack.c.l.b16 %v349
    %v1110 = vunpack.c.h.b16 %v349
    %v1111 = vunpack.c.l.b16 %v350
    %v1112 = vunpack.c.h.b16 %v350
    %v1113 = vunpack.c.l.b16 %v351
    %v1114 = vunpack.c.h.b16 %v351
    %v1115 = vunpack.c.l.b16 %v352
    %v1116 = vunpack.c.h.b16 %v352
    %v1117 = vunpack.c.l.b16 %v353
    %v1118 = vunpack.c.h.b16 %v353
    %v1119 = vunpack.c.l.b16 %v354
    %v1120 = vunpack.c.h.b16 %v354
    %v1121 = vunpack.c.l.b16 %v355
    %v1122 = vunpack.c.h.b16 %v355
    %v1123 = vunpack.c.l.b16 %v356
    %v1124 = vunpack.c.h.b16 %v356
    %v1125 = vunpack.c.l.b16 %v357
    %v1126 = vunpack.c.h.b16 %v357
    %v1127 = vunpack.c.l.b16 %v358
    %v1128 = vunpack.c.h.b16 %v358
    %v1129 = vunpack.c.l.b16 %v359
    %v1130 = vunpack.c.h.b16 %v359
    %v1131 = vunpack.c.l.b16 %v360
    %v1132 = vunpack.c.h.b16 %v360
    %v1133 = vunpack.c.l.b16 %v361
    %v1134 = vunpack.c.h.b16 %v361
    %v1135 = vunpack.c.l.b16 %v362
    %v1136 = vunpack.c.h.b16 %v362
    %v1137 = vunpack.c.l.b16 %v363
    %v1138 = vunpack.c.h.b16 %v363
    %v1139 = vunpack.c.l.b16 %v364
    %v1140 = vunpack.c.h.b16 %v364
    %v1141 = vunpack.c.l.b16 %v365
    %v1142 = vunpack.c.h.b16 %v365
    %v1143 = vunpack.c.l.b16 %v366
    %v1144 = vunpack.c.h.b16 %v366
    %v1145 = vunpack.c.l.b16 %v367
    %v1146 = vunpack.c.h.b16 %v367
    %v1147 = vunpack.c.l.b16 %v368
    %v1148 = vunpack.c.h.b16 %v368
    %v1149 = vunpack.c.l.b16 %v369
    %v1150 = vunpack.c.h.b16 %v369
    %v1151 = vunpack.c.l.b16 %v370
    %v1152 = vunpack.c.h.b16 %v370
    %v1153 = vunpack.c.l.b16 %v371
    %v1154 = vunpack.c.h.b16 %v371
    %v1155 = vunpack.c.l.b16 %v372
    %v1156 = vunpack.c.h.b16 %v372
    %v1157 = vunpack.c.l.b16 %v373
    %v1158 = vunpack.c.h.b16 %v373
    %v1159 = vunpack.c.l.b16 %v374
    %v1160 = vunpack.c.h.b16 %v374
    %v1161 = vunpack.c.l.b16 %v375
    %v1162 = vunpack.c.h.b16 %v375
    %v1163 = vunpack.c.l.b16 %v376
    %v1164 = vunpack.c.h.b16 %v376
    %v1165 = vunpack.c.l.b16 %v377
    %v1166 = vunpack.c.h.b16 %v377
    %v1167 = vunpack.c.l.b16 %v378
    %v1168 = vunpack.c.h.b16 %v378
    %v1169 = vunpack.c.l.b16 %v379
    %v1170 = vunpack.c.h.b16 %v379
    %v1171 = vunpack.c.l.b16 %v380
    %v1172 = vunpack.c.h.b16 %v380
    %v1173 = vunpack.c.l.b16 %v381
    %v1174 = vunpack.c.h.b16 %v381
    %v1175 = vunpack.c.l.b16 %v382
    %v1176 = vunpack.c.h.b16 %v382
    %v1177 = vunpack.c.l.b16 %v383
    %v1178 = vunpack.c.h.b16 %v383
    %v1179 = vunpack.c.l.b16 %v384
    %v1180 = vunpack.c.h.b16 %v384
    %v1181 = vunpack.c.l.b16 %v385
    %v1182 = vunpack.c.h.b16 %v385
    %v1183 = vunpack.c.l.b16 %v386
    %v1184 = vunpack.c.h.b16 %v386
    %v1185 = vunpack.c.l.b16 %v387
    %v1186 = vunpack.c.h.b16 %v387
    %v1187 = vunpack.c.l.b16 %v388
    %v1188 = vunpack.c.h.b16 %v388
    %v1189 = vunpack.c.l.b16 %v389
    %v1190 = vunpack.c.h.b16 %v389
    %v1191 = vunpack.c.l.b16 %v390
    %v1192 = vunpack.c.h.b16 %v390
    %v1193 = vunpack.c.l.b16 %v391
    %v1194 = vunpack.c.h.b16 %v391
    %v1195 = vunpack.c.l.b16 %v392
    %v1196 = vunpack.c.h.b16 %v392
    %v1197 = vunpack.c.l.b16 %v393
    %v1198 = vunpack.c.h.b16 %v393
    %v1199 = vunpack.c.l.b16 %v394
    %v1200 = vunpack.c.h.b16 %v394
    %v1201 = vpack.c.b16 %v693, %v689
    %v1202 = vpack.c.b16 %v694, %v690
    %v1203 = vpack.c.b16 %v695, %v691
    %v1204 = vpack.c.b16 %v696, %v692
    %v1205 = vpack.c.b16 %v701, %v697
    %v1206 = vpack.c.b16 %v702, %v698
    %v1207 = vpack.c.b16 %v703, %v699
    %v1208 = vpack.c.b16 %v704, %v700
    %v1209 = vpack.c.b16 %v709, %v705
    %v1210 = vpack.c.b16 %v710, %v706
    %v1211 = vpack.c.b16 %v711, %v707
    %v1212 = vpack.c.b16 %v712, %v708
    %v1213 = vpack.c.b16 %v717, %v713
    %v1214 = vpack.c.b16 %v718, %v714
    %v1215 = vpack.c.b16 %v719, %v715
    %v1216 = vpack.c.b16 %v720, %v716
    %v1217 = vpack.c.b16 %v725, %v721
    %v1218 = vpack.c.b16 %v726, %v722
    %v1219 = vpack.c.b16 %v727, %v723
    %v1220 = vpack.c.b16 %v728, %v724
    %v1221 = vpack.c.b16 %v733, %v729
    %v1222 = vpack.c.b16 %v734, %v730
    %v1223 = vpack.c.b16 %v735, %v731
    %v1224 = vpack.c.b16 %v736, %v732
    %v1225 = vpack.c.b16 %v741, %v737
    %v1226 = vpack.c.b16 %v742, %v738
    %v1227 = vpack.c.b16 %v743, %v739
    %v1228 = vpack.c.b16 %v744, %v740
    %v1229 = vpack.c.b16 %v749, %v745
    %v1230 = vpack.c.b16 %v750, %v746
    %v1231 = vpack.c.b16 %v751, %v747
    %v1232 = vpack.c.b16 %v752, %v748
    %v1233 = vpack.c.b16 %v757, %v753
    %v1234 = vpack.c.b16 %v758, %v754
    %v1235 = vpack.c.b16 %v759, %v755
    %v1236 = vpack.c.b16 %v760, %v756
    %v1237 = vpack.c.b16 %v765, %v761
    %v1238 = vpack.c.b16 %v766, %v762
    %v1239 = vpack.c.b16 %v767, %v763
    %v1240 = vpack.c.b16 %v768, %v764
    %v1241 = vpack.c.b16 %v773, %v769
    %v1242 = vpack.c.b16 %v774, %v770
    %v1243 = vpack.c.b16 %v775, %v771
    %v1244 = vpack.c.b16 %v776, %v772
    %v1245 = vpack.c.b16 %v781, %v777
    %v1246 = vpack.c.b16 %v782, %v778
    %v1247 = vpack.c.b16 %v783, %v779
    %v1248 = vpack.c.b16 %v784, %v780
    %v1249 = vpack.c.b16 %v789, %v785
    %v1250 = vpack.c.b16 %v790, %v786
    %v1251 = vpack.c.b16 %v791, %v787
    %v1252 = vpack.c.b16 %v792, %v788
    %v1253 = vpack.c.b16 %v797, %v793
    %v1254 = vpack.c.b16 %v798, %v794
    %v1255 = vpack.c.b16 %v799, %v795
    %v1256 = vpack.c.b16 %v800, %v796
    %v1257 = vpack.c.b16 %v805, %v801
    %v1258 = vpack.c.b16 %v806, %v802
    %v1259 = vpack.c.b16 %v807, %v803
    %v1260 = vpack.c.b16 %v808, %v804
    %v1261 = vpack.c.b16 %v813, %v809
    %v1262 = vpack.c.b16 %v814, %v810
    %v1263 = vpack.c.b16 %v815, %v811
    %v1264 = vpack.c.b16 %v816, %v812
    %v1265 = vpack.c.b16 %v821, %v817
    %v1266 = vpack.c.b16 %v822, %v818
    %v1267 = vpack.c.b16 %v823, %v819
    %v1268 = vpack.c.b16 %v824, %v820
    %v1269 = vpack.c.b16 %v829, %v825
    %v1270 = vpack.c.b16 %v830, %v826
    %v1271 = vpack.c.b16 %v831, %v827
    %v1272 = vpack.c.b16 %v832, %v828
    %v1273 = vpack.c.b16 %v837, %v833
    %v1274 = vpack.c.b16 %v838, %v834
    %v1275 = vpack.c.b16 %v839, %v835
    %v1276 = vpack.c.b16 %v840, %v836
    %v1277 = vpack.c.b16 %v845, %v841
    %v1278 = vpack.c.b16 %v846, %v842
    %v1279 = vpack.c.b16 %v847, %v843
    %v1280 = vpack.c.b16 %v848, %v844
    %v1281 = vpack.c.b16 %v853, %v849
    %v1282 = vpack.c.b16 %v854, %v850
    %v1283 = vpack.c.b16 %v855, %v851
    %v1284 = vpack.c.b16 %v856, %v852
    %v1285 = vpack.c.b16 %v861, %v857
    %v1286 = vpack.c.b16 %v862, %v858
    %v1287 = vpack.c.b16 %v863, %v859
    %v1288 = vpack.c.b16 %v864, %v860
    %v1289 = vpack.c.b16 %v869, %v865
    %v1290 = vpack.c.b16 %v870, %v866
    %v1291 = vpack.c.b16 %v871, %v867
    %v1292 = vpack.c.b16 %v872, %v868
    %v1293 = vpack.c.b16 %v877, %v873
    %v1294 = vpack.c.b16 %v878, %v874
    %v1295 = vpack.c.b16 %v879, %v875
    %v1296 = vpack.c.b16 %v880, %v876
    %v1297 = vpack.c.b16 %v885, %v881
    %v1298 = vpack.c.b16 %v886, %v882
    %v1299 = vpack.c.b16 %v887, %v883
    %v1300 = vpack.c.b16 %v888, %v884
    %v1301 = vpack.c.b16 %v893, %v889
    %v1302 = vpack.c.b16 %v894, %v890
    %v1303 = vpack.c.b16 %v895, %v891
    %v1304 = vpack.c.b16 %v896, %v892
    %v1305 = vpack.c.b16 %v901, %v897
    %v1306 = vpack.c.b16 %v902, %v898
    %v1307 = vpack.c.b16 %v903, %v899
    %v1308 = vpack.c.b16 %v904, %v900
    %v1309 = vpack.c.b16 %v909, %v905
    %v1310 = vpack.c.b16 %v910, %v906
    %v1311 = vpack.c.b16 %v911, %v907
    %v1312 = vpack.c.b16 %v912, %v908
    %v1313 = vpack.c.b16 %v917, %v913
    %v1314 = vpack.c.b16 %v918, %v914
    %v1315 = vpack.c.b16 %v919, %v915
    %v1316 = vpack.c.b16 %v920, %v916
    %v1317 = vpack.c.b16 %v925, %v921
    %v1318 = vpack.c.b16 %v926, %v922
    %v1319 = vpack.c.b16 %v927, %v923
    %v1320 = vpack.c.b16 %v928, %v924
    %v1321 = vpack.c.b16 %v933, %v929
    %v1322 = vpack.c.b16 %v934, %v930
    %v1323 = vpack.c.b16 %v935, %v931
    %v1324 = vpack.c.b16 %v936, %v932
    %v1325 = vpack.c.b16 %v941, %v937
    %v1326 = vpack.c.b16 %v942, %v938
    %v1327 = vpack.c.b16 %v943, %v939
    %v1328 = vpack.c.b16 %v944, %v940
    %v1329 = vpack.c.b16 %v949, %v945
    %v1330 = vpack.c.b16 %v950, %v946
    %v1331 = vpack.c.b16 %v951, %v947
    %v1332 = vpack.c.b16 %v952, %v948
    %v1333 = vpack.c.b16 %v957, %v953
    %v1334 = vpack.c.b16 %v958, %v954
    %v1335 = vpack.c.b16 %v959, %v955
    %v1336 = vpack.c.b16 %v960, %v956
    %v1337 = vpack.c.b16 %v965, %v961
    %v1338 = vpack.c.b16 %v966, %v962
    %v1339 = vpack.c.b16 %v967, %v963
    %v1340 = vpack.c.b16 %v968, %v964
    %v1341 = vpack.c.b16 %v973, %v969
    %v1342 = vpack.c.b16 %v974, %v970
    %v1343 = vpack.c.b16 %v975, %v971
    %v1344 = vpack.c.b16 %v976, %v972
    %v1345 = vpack.c.b16 %v981, %v977
    %v1346 = vpack.c.b16 %v982, %v978
    %v1347 = vpack.c.b16 %v983, %v979
    %v1348 = vpack.c.b16 %v984, %v980
    %v1349 = vpack.c.b16 %v989, %v985
    %v1350 = vpack.c.b16 %v990, %v986
    %v1351 = vpack.c.b16 %v991, %v987
    %v1352 = vpack.c.b16 %v992, %v988
    %v1353 = vpack.c.b16 %v997, %v993
    %v1354 = vpack.c.b16 %v998, %v994
    %v1355 = vpack.c.b16 %v999, %v995
    %v1356 = vpack.c.b16 %v1000, %v996
    %v1357 = vpack.c.b16 %v1005, %v1001
    %v1358 = vpack.c.b16 %v1006, %v1002
    %v1359 = vpack.c.b16 %v1007, %v1003
    %v1360 = vpack.c.b16 %v1008, %v1004
    %v1361 = vpack.c.b16 %v1013, %v1009
    %v1362 = vpack.c.b16 %v1014, %v1010
    %v1363 = vpack.c.b16 %v1015, %v1011
    %v1364 = vpack.c.b16 %v1016, %v1012
    %v1365 = vpack.c.b16 %v1021, %v1017
    %v1366 = vpack.c.b16 %v1022, %v1018
    %v1367 = vpack.c.b16 %v1023, %v1019
    %v1368 = vpack.c.b16 %v1024, %v1020
    %v1369 = vpack.c.b16 %v1029, %v1025
    %v1370 = vpack.c.b16 %v1030, %v1026
    %v1371 = vpack.c.b16 %v1031, %v1027
    %v1372 = vpack.c.b16 %v1032, %v1028
    %v1373 = vpack.c.b16 %v1037, %v1033
    %v1374 = vpack.c.b16 %v1038, %v1034
    %v1375 = vpack.c.b16 %v1039, %v1035
    %v1376 = vpack.c.b16 %v1040, %v1036
    %v1377 = vpack.c.b16 %v1045, %v1041
    %v1378 = vpack.c.b16 %v1046, %v1042
    %v1379 = vpack.c.b16 %v1047, %v1043
    %v1380 = vpack.c.b16 %v1048, %v1044
    %v1381 = vpack.c.b16 %v1053, %v1049
    %v1382 = vpack.c.b16 %v1054, %v1050
    %v1383 = vpack.c.b16 %v1055, %v1051
    %v1384 = vpack.c.b16 %v1056, %v1052
    %v1385 = vpack.c.b16 %v1061, %v1057
    %v1386 = vpack.c.b16 %v1062, %v1058
    %v1387 = vpack.c.b16 %v1063, %v1059
    %v1388 = vpack.c.b16 %v1064, %v1060
    %v1389 = vpack.c.b16 %v1069, %v1065
    %v1390 = vpack.c.b16 %v1070, %v1066
    %v1391 = vpack.c.b16 %v1071, %v1067
    %v1392 = vpack.c.b16 %v1072, %v1068
    %v1393 = vpack.c.b16 %v1077, %v1073
    %v1394 = vpack.c.b16 %v1078, %v1074
    %v1395 = vpack.c.b16 %v1079, %v1075
    %v1396 = vpack.c.b16 %v1080, %v1076
    %v1397 = vpack.c.b16 %v1085, %v1081
    %v1398 = vpack.c.b16 %v1086, %v1082
    %v1399 = vpack.c.b16 %v1087, %v1083
    %v1400 = vpack.c.b16 %v1088, %v1084
    %v1401 = vpack.c.b16 %v1093, %v1089
    %v1402 = vpack.c.b16 %v1094, %v1090
    %v1403 = vpack.c.b16 %v1095, %v1091
    %v1404 = vpack.c.b16 %v1096, %v1092
    %v1405 = vpack.c.b16 %v1101, %v1097
    %v1406 = vpack.c.b16 %v1102, %v1098
    %v1407 = vpack.c.b16 %v1103, %v1099
    %v1408 = vpack.c.b16 %v1104, %v1100
    %v1409 = vpack.c.b16 %v1109, %v1105
    %v1410 = vpack.c.b16 %v1110, %v1106
    %v1411 = vpack.c.b16 %v1111, %v1107
    %v1412 = vpack.c.b16 %v1112, %v1108
    %v1413 = vpack.c.b16 %v1117, %v1113
    %v1414 = vpack.c.b16 %v1118, %v1114
    %v1415 = vpack.c.b16 %v1119, %v1115
    %v1416 = vpack.c.b16 %v1120, %v1116
    %v1417 = vpack.c.b16 %v1125, %v1121
    %v1418 = vpack.c.b16 %v1126, %v1122
    %v1419 = vpack.c.b16 %v1127, %v1123
    %v1420 = vpack.c.b16 %v1128, %v1124
    %v1421 = vpack.c.b16 %v1133, %v1129
    %v1422 = vpack.c.b16 %v1134, %v1130
    %v1423 = vpack.c.b16 %v1135, %v1131
    %v1424 = vpack.c.b16 %v1136, %v1132
    %v1425 = vpack.c.b16 %v1141, %v1137
    %v1426 = vpack.c.b16 %v1142, %v1138
    %v1427 = vpack.c.b16 %v1143, %v1139
    %v1428 = vpack.c.b16 %v1144, %v1140
    %v1429 = vpack.c.b16 %v1149, %v1145
    %v1430 = vpack.c.b16 %v1150, %v1146
    %v1431 = vpack.c.b16 %v1151, %v1147
    %v1432 = vpack.c.b16 %v1152, %v1148
    %v1433 = vpack.c.b16 %v1157, %v1153
    %v1434 = vpack.c.b16 %v1158, %v1154
    %v1435 = vpack.c.b16 %v1159, %v1155
    %v1436 = vpack.c.b16 %v1160, %v1156
    %v1437 = vpack.c.b16 %v1165, %v1161
    %v1438 = vpack.c.b16 %v1166, %v1162
    %v1439 = vpack.c.b16 %v1167, %v1163
    %v1440 = vpack.c.b16 %v1168, %v1164
    %v1441 = vpack.c.b16 %v1173, %v1169
    %v1442 = vpack.c.b16 %v1174, %v1170
    %v1443 = vpack.c.b16 %v1175, %v1171
    %v1444 = vpack.c.b16 %v1176, %v1172
    %v1445 = vpack.c.b16 %v1181, %v1177
    %v1446 = vpack.c.b16 %v1182, %v1178
    %v1447 = vpack.c.b16 %v1183, %v1179
    %v1448 = vpack.c.b16 %v1184, %v1180
    %v1449 = vpack.c.b16 %v1189, %v1185
    %v1450 = vpack.c.b16 %v1190, %v1186
    %v1451 = vpack.c.b16 %v1191, %v1187
    %v1452 = vpack.c.b16 %v1192, %v1188
    %v1453 = vpack.c.b16 %v1197, %v1193
    %v1454 = vpack.c.b16 %v1198, %v1194
    %v1455 = vpack.c.b16 %v1199, %v1195
    %v1456 = vpack.c.b16 %v1200, %v1196
    %1713 = vmatprep.subr.bf16.mxu0 %v1202
    %1714 = vmatpush1.bf16.msra.mxu0 %v1201
    %1715 = vmatprep.subr.bf16.mxu0 %v1206
    %1716 = vmatpush1.bf16.msra.mxu0 %v1205
    %1717 = vmatprep.subr.bf16.mxu0 %v1210
    %1718 = vmatpush1.bf16.msra.mxu0 %v1209
    %1719 = vmatprep.subr.bf16.mxu0 %v1214
    %1720 = vmatpush1.bf16.msra.mxu0 %v1213
    %1721 = vmatprep.subr.bf16.mxu0 %v1218
    %1722 = vmatpush1.bf16.msra.mxu0 %v1217
    %1723 = vmatprep.subr.bf16.mxu0 %v1222
    %1724 = vmatpush1.bf16.msra.mxu0 %v1221
    %1725 = vmatprep.subr.bf16.mxu0 %v1226
    %1726 = vmatpush1.bf16.msra.mxu0 %v1225
    %1727 = vmatprep.subr.bf16.mxu0 %v1230
    %1728 = vmatpush1.bf16.msra.mxu0 %v1229
    %1729 = vmatprep.subr.bf16.mxu0 %v1234
    %1730 = vmatpush1.bf16.msra.mxu0 %v1233
    %1731 = vmatprep.subr.bf16.mxu0 %v1238
    %1732 = vmatpush1.bf16.msra.mxu0 %v1237
    %1733 = vmatprep.subr.bf16.mxu0 %v1242
    %1734 = vmatpush1.bf16.msra.mxu0 %v1241
    %1735 = vmatprep.subr.bf16.mxu0 %v1246
    %1736 = vmatpush1.bf16.msra.mxu0 %v1245
    %1737 = vmatprep.subr.bf16.mxu0 %v1250
    %1738 = vmatpush1.bf16.msra.mxu0 %v1249
    %1739 = vmatprep.subr.bf16.mxu0 %v1254
    %1740 = vmatpush1.bf16.msra.mxu0 %v1253
    %1741 = vmatprep.subr.bf16.mxu0 %v1258
    %1742 = vmatpush1.bf16.msra.mxu0 %v1257
    %1743 = vmatprep.subr.bf16.mxu0 %v1262
    %1744 = vmatpush1.bf16.msra.mxu0 %v1261
    %1745 = vmatprep.mubr.bf16.mxu0 %v132
    %1746 = vmatmul.mubr.bf16.gmra.mrb[0].mxu0 %v131
    %v1747 = vpop.f32.mrb[0].mxu0
    %v1748 = vadd.f32 %v420, %v1747
    %v1749 = vpop.f32.mrb[0].mxu0
    %v1750 = vadd.f32 %v424, %v1749
    %v1751 = vpop.f32.mrb[0].mxu0
    %v1752 = vadd.f32 %v420, %v1751
    %v1753 = vpop.f32.mrb[0].mxu0
    %v1754 = vadd.f32 %v424, %v1753
    %1755 = vdwg.mxu0
    %1756 = vmatprep.subr.bf16.mxu0 %v1266
    %1757 = vmatpush1.bf16.msra.mxu0 %v1265
    %1758 = vmatprep.subr.bf16.mxu0 %v1270
    %1759 = vmatpush1.bf16.msra.mxu0 %v1269
    %1760 = vmatprep.subr.bf16.mxu0 %v1274
    %1761 = vmatpush1.bf16.msra.mxu0 %v1273
    %1762 = vmatprep.subr.bf16.mxu0 %v1278
    %1763 = vmatpush1.bf16.msra.mxu0 %v1277
    %1764 = vmatprep.subr.bf16.mxu0 %v1282
    %1765 = vmatpush1.bf16.msra.mxu0 %v1281
    %1766 = vmatprep.subr.bf16.mxu0 %v1286
    %1767 = vmatpush1.bf16.msra.mxu0 %v1285
    %1768 = vmatprep.subr.bf16.mxu0 %v1290
    %1769 = vmatpush1.bf16.msra.mxu0 %v1289
    %1770 = vmatprep.subr.bf16.mxu0 %v1294
    %1771 = vmatpush1.bf16.msra.mxu0 %v1293
    %1772 = vmatprep.subr.bf16.mxu0 %v1298
    %1773 = vmatpush1.bf16.msra.mxu0 %v1297
    %1774 = vmatprep.subr.bf16.mxu0 %v1302
    %1775 = vmatpush1.bf16.msra.mxu0 %v1301
    %1776 = vmatprep.subr.bf16.mxu0 %v1306
    %1777 = vmatpush1.bf16.msra.mxu0 %v1305
    %1778 = vmatprep.subr.bf16.mxu0 %v1310
    %1779 = vmatpush1.bf16.msra.mxu0 %v1309
    %1780 = vmatprep.subr.bf16.mxu0 %v1314
    %1781 = vmatpush1.bf16.msra.mxu0 %v1313
    %1782 = vmatprep.subr.bf16.mxu0 %v1318
    %1783 = vmatpush1.bf16.msra.mxu0 %v1317
    %1784 = vmatprep.subr.bf16.mxu0 %v1322
    %1785 = vmatpush1.bf16.msra.mxu0 %v1321
    %1786 = vmatprep.subr.bf16.mxu0 %v1326
    %1787 = vmatpush1.bf16.msra.mxu0 %v1325
    %1788 = vmatprep.mubr.bf16.mxu0 %v134
    %1789 = vmatmul.mubr.bf16.gmra.mrb[0].mxu0 %v133
    %v1790 = vpop.f32.mrb[0].mxu0
    %v1791 = vadd.f32 %v1748, %v1790
    %v1792 = vpop.f32.mrb[0].mxu0
    %v1793 = vadd.f32 %v1750, %v1792
    %v1794 = vpop.f32.mrb[0].mxu0
    %v1795 = vadd.f32 %v1752, %v1794
    %v1796 = vpop.f32.mrb[0].mxu0
    %v1797 = vadd.f32 %v1754, %v1796
    %1798 = vdwg.mxu0
    %1799 = vmatprep.subr.bf16.mxu0 %v1330
    %1800 = vmatpush1.bf16.msra.mxu0 %v1329
    %1801 = vmatprep.subr.bf16.mxu0 %v1334
    %1802 = vmatpush1.bf16.msra.mxu0 %v1333
    %1803 = vmatprep.subr.bf16.mxu0 %v1338
    %1804 = vmatpush1.bf16.msra.mxu0 %v1337
    %1805 = vmatprep.subr.bf16.mxu0 %v1342
    %1806 = vmatpush1.bf16.msra.mxu0 %v1341
    %1807 = vmatprep.subr.bf16.mxu0 %v1346
    %1808 = vmatpush1.bf16.msra.mxu0 %v1345
    %1809 = vmatprep.subr.bf16.mxu0 %v1350
    %1810 = vmatpush1.bf16.msra.mxu0 %v1349
    %1811 = vmatprep.subr.bf16.mxu0 %v1354
    %1812 = vmatpush1.bf16.msra.mxu0 %v1353
    %1813 = vmatprep.subr.bf16.mxu0 %v1358
    %1814 = vmatpush1.bf16.msra.mxu0 %v1357
    %1815 = vmatprep.subr.bf16.mxu0 %v1362
    %1816 = vmatpush1.bf16.msra.mxu0 %v1361
    %1817 = vmatprep.subr.bf16.mxu0 %v1366
    %1818 = vmatpush1.bf16.msra.mxu0 %v1365
    %1819 = vmatprep.subr.bf16.mxu0 %v1370
    %1820 = vmatpush1.bf16.msra.mxu0 %v1369
    %1821 = vmatprep.subr.bf16.mxu0 %v1374
    %1822 = vmatpush1.bf16.msra.mxu0 %v1373
    %1823 = vmatprep.subr.bf16.mxu0 %v1378
    %1824 = vmatpush1.bf16.msra.mxu0 %v1377
    %1825 = vmatprep.subr.bf16.mxu0 %v1382
    %1826 = vmatpush1.bf16.msra.mxu0 %v1381
    %1827 = vmatprep.subr.bf16.mxu0 %v1386
    %1828 = vmatpush1.bf16.msra.mxu0 %v1385
    %1829 = vmatprep.subr.bf16.mxu0 %v1390
    %1830 = vmatpush1.bf16.msra.mxu0 %v1389
    %1831 = vmatprep.mubr.bf16.mxu0 %v136
    %1832 = vmatmul.mubr.bf16.gmra.mrb[0].mxu0 %v135
    %v1833 = vpop.f32.mrb[0].mxu0
    %v1834 = vadd.f32 %v1791, %v1833
    %v1835 = vpop.f32.mrb[0].mxu0
    %v1836 = vadd.f32 %v1793, %v1835
    %v1837 = vpop.f32.mrb[0].mxu0
    %v1838 = vadd.f32 %v1795, %v1837
    %v1839 = vpop.f32.mrb[0].mxu0
    %v1840 = vadd.f32 %v1797, %v1839
    %1841 = vdwg.mxu0
    %1842 = vmatprep.subr.bf16.mxu0 %v1394
    %1843 = vmatpush1.bf16.msra.mxu0 %v1393
    %1844 = vmatprep.subr.bf16.mxu0 %v1398
    %1845 = vmatpush1.bf16.msra.mxu0 %v1397
    %1846 = vmatprep.subr.bf16.mxu0 %v1402
    %1847 = vmatpush1.bf16.msra.mxu0 %v1401
    %1848 = vmatprep.subr.bf16.mxu0 %v1406
    %1849 = vmatpush1.bf16.msra.mxu0 %v1405
    %1850 = vmatprep.subr.bf16.mxu0 %v1410
    %1851 = vmatpush1.bf16.msra.mxu0 %v1409
    %1852 = vmatprep.subr.bf16.mxu0 %v1414
    %1853 = vmatpush1.bf16.msra.mxu0 %v1413
    %1854 = vmatprep.subr.bf16.mxu0 %v1418
    %1855 = vmatpush1.bf16.msra.mxu0 %v1417
    %1856 = vmatprep.subr.bf16.mxu0 %v1422
    %1857 = vmatpush1.bf16.msra.mxu0 %v1421
    %1858 = vmatprep.subr.bf16.mxu0 %v1426
    %1859 = vmatpush1.bf16.msra.mxu0 %v1425
    %1860 = vmatprep.subr.bf16.mxu0 %v1430
    %1861 = vmatpush1.bf16.msra.mxu0 %v1429
    %1862 = vmatprep.subr.bf16.mxu0 %v1434
    %1863 = vmatpush1.bf16.msra.mxu0 %v1433
    %1864 = vmatprep.subr.bf16.mxu0 %v1438
    %1865 = vmatpush1.bf16.msra.mxu0 %v1437
    %1866 = vmatprep.subr.bf16.mxu0 %v1442
    %1867 = vmatpush1.bf16.msra.mxu0 %v1441
    %1868 = vmatprep.subr.bf16.mxu0 %v1446
    %1869 = vmatpush1.bf16.msra.mxu0 %v1445
    %1870 = vmatprep.subr.bf16.mxu0 %v1450
    %1871 = vmatpush1.bf16.msra.mxu0 %v1449
    %1872 = vmatprep.subr.bf16.mxu0 %v1454
    %1873 = vmatpush1.bf16.msra.mxu0 %v1453
    %1874 = vmatprep.mubr.bf16.mxu0 %v138
    %1875 = vmatmul.mubr.bf16.gmra.mrb[0].mxu0 %v137
    %v1876 = vpop.f32.mrb[0].mxu0
    %v1877 = vadd.f32 %v1834, %v1876
    %v1878 = vpop.f32.mrb[0].mxu0
    %v1879 = vadd.f32 %v1836, %v1878
    %v1880 = vpop.f32.mrb[0].mxu0
    %v1881 = vadd.f32 %v1838, %v1880
    %v1882 = vpop.f32.mrb[0].mxu0
    %v1883 = vadd.f32 %v1840, %v1882
    %1884 = vdwg.mxu0
    %1885 = vmatprep.subr.bf16.mxu0 %v1204
    %1886 = vmatpush1.bf16.msra.mxu0 %v1203
    %1887 = vmatprep.subr.bf16.mxu0 %v1208
    %1888 = vmatpush1.bf16.msra.mxu0 %v1207
    %1889 = vmatprep.subr.bf16.mxu0 %v1212
    %1890 = vmatpush1.bf16.msra.mxu0 %v1211
    %1891 = vmatprep.subr.bf16.mxu0 %v1216
    %1892 = vmatpush1.bf16.msra.mxu0 %v1215
    %1893 = vmatprep.subr.bf16.mxu0 %v1220
    %1894 = vmatpush1.bf16.msra.mxu0 %v1219
    %1895 = vmatprep.subr.bf16.mxu0 %v1224
    %1896 = vmatpush1.bf16.msra.mxu0 %v1223
    %1897 = vmatprep.subr.bf16.mxu0 %v1228
    %1898 = vmatpush1.bf16.msra.mxu0 %v1227
    %1899 = vmatprep.subr.bf16.mxu0 %v1232
    %1900 = vmatpush1.bf16.msra.mxu0 %v1231
    %1901 = vmatprep.subr.bf16.mxu0 %v1236
    %1902 = vmatpush1.bf16.msra.mxu0 %v1235
    %1903 = vmatprep.subr.bf16.mxu0 %v1240
    %1904 = vmatpush1.bf16.msra.mxu0 %v1239
    %1905 = vmatprep.subr.bf16.mxu0 %v1244
    %1906 = vmatpush1.bf16.msra.mxu0 %v1243
    %1907 = vmatprep.subr.bf16.mxu0 %v1248
    %1908 = vmatpush1.bf16.msra.mxu0 %v1247
    %1909 = vmatprep.subr.bf16.mxu0 %v1252
    %1910 = vmatpush1.bf16.msra.mxu0 %v1251
    %1911 = vmatprep.subr.bf16.mxu0 %v1256
    %1912 = vmatpush1.bf16.msra.mxu0 %v1255
    %1913 = vmatprep.subr.bf16.mxu0 %v1260
    %1914 = vmatpush1.bf16.msra.mxu0 %v1259
    %1915 = vmatprep.subr.bf16.mxu0 %v1264
    %1916 = vmatpush1.bf16.msra.mxu0 %v1263
    %1917 = vmatprep.mubr.bf16.mxu0 %v132
    %1918 = vmatmul.mubr.bf16.gmra.mrb[0].mxu0 %v131
    %v1919 = vpop.f32.mrb[0].mxu0
    %v1920 = vadd.f32 %v428, %v1919
    %v1921 = vpop.f32.mrb[0].mxu0
    %v1922 = vadd.f32 %v432, %v1921
    %v1923 = vpop.f32.mrb[0].mxu0
    %v1924 = vadd.f32 %v428, %v1923
    %v1925 = vpop.f32.mrb[0].mxu0
    %v1926 = vadd.f32 %v432, %v1925
    %1927 = vdwg.mxu0
    %1928 = vmatprep.subr.bf16.mxu0 %v1268
    %1929 = vmatpush1.bf16.msra.mxu0 %v1267
    %1930 = vmatprep.subr.bf16.mxu0 %v1272
    %1931 = vmatpush1.bf16.msra.mxu0 %v1271
    %1932 = vmatprep.subr.bf16.mxu0 %v1276
    %1933 = vmatpush1.bf16.msra.mxu0 %v1275
    %1934 = vmatprep.subr.bf16.mxu0 %v1280
    %1935 = vmatpush1.bf16.msra.mxu0 %v1279
    %1936 = vmatprep.subr.bf16.mxu0 %v1284
    %1937 = vmatpush1.bf16.msra.mxu0 %v1283
    %1938 = vmatprep.subr.bf16.mxu0 %v1288
    %1939 = vmatpush1.bf16.msra.mxu0 %v1287
    %1940 = vmatprep.subr.bf16.mxu0 %v1292
    %1941 = vmatpush1.bf16.msra.mxu0 %v1291
    %1942 = vmatprep.subr.bf16.mxu0 %v1296
    %1943 = vmatpush1.bf16.msra.mxu0 %v1295
    %1944 = vmatprep.subr.bf16.mxu0 %v1300
    %1945 = vmatpush1.bf16.msra.mxu0 %v1299
    %1946 = vmatprep.subr.bf16.mxu0 %v1304
    %1947 = vmatpush1.bf16.msra.mxu0 %v1303
    %1948 = vmatprep.subr.bf16.mxu0 %v1308
    %1949 = vmatpush1.bf16.msra.mxu0 %v1307
    %1950 = vmatprep.subr.bf16.mxu0 %v1312
    %1951 = vmatpush1.bf16.msra.mxu0 %v1311
    %1952 = vmatprep.subr.bf16.mxu0 %v1316
    %1953 = vmatpush1.bf16.msra.mxu0 %v1315
    %1954 = vmatprep.subr.bf16.mxu0 %v1320
    %1955 = vmatpush1.bf16.msra.mxu0 %v1319
    %1956 = vmatprep.subr.bf16.mxu0 %v1324
    %1957 = vmatpush1.bf16.msra.mxu0 %v1323
    %1958 = vmatprep.subr.bf16.mxu0 %v1328
    %1959 = vmatpush1.bf16.msra.mxu0 %v1327
    %1960 = vmatprep.mubr.bf16.mxu0 %v134
    %1961 = vmatmul.mubr.bf16.gmra.mrb[0].mxu0 %v133
    %v1962 = vpop.f32.mrb[0].mxu0
    %v1963 = vadd.f32 %v1920, %v1962
    %v1964 = vpop.f32.mrb[0].mxu0
    %v1965 = vadd.f32 %v1922, %v1964
    %v1966 = vpop.f32.mrb[0].mxu0
    %v1967 = vadd.f32 %v1924, %v1966
    %v1968 = vpop.f32.mrb[0].mxu0
    %v1969 = vadd.f32 %v1926, %v1968
    %1970 = vdwg.mxu0
    %1971 = vmatprep.subr.bf16.mxu0 %v1332
    %1972 = vmatpush1.bf16.msra.mxu0 %v1331
    %1973 = vmatprep.subr.bf16.mxu0 %v1336
    %1974 = vmatpush1.bf16.msra.mxu0 %v1335
    %1975 = vmatprep.subr.bf16.mxu0 %v1340
    %1976 = vmatpush1.bf16.msra.mxu0 %v1339
    %1977 = vmatprep.subr.bf16.mxu0 %v1344
    %1978 = vmatpush1.bf16.msra.mxu0 %v1343
    %1979 = vmatprep.subr.bf16.mxu0 %v1348
    %1980 = vmatpush1.bf16.msra.mxu0 %v1347
    %1981 = vmatprep.subr.bf16.mxu0 %v1352
    %1982 = vmatpush1.bf16.msra.mxu0 %v1351
    %1983 = vmatprep.subr.bf16.mxu0 %v1356
    %1984 = vmatpush1.bf16.msra.mxu0 %v1355
    %1985 = vmatprep.subr.bf16.mxu0 %v1360
    %1986 = vmatpush1.bf16.msra.mxu0 %v1359
    %1987 = vmatprep.subr.bf16.mxu0 %v1364
    %1988 = vmatpush1.bf16.msra.mxu0 %v1363
    %1989 = vmatprep.subr.bf16.mxu0 %v1368
    %1990 = vmatpush1.bf16.msra.mxu0 %v1367
    %1991 = vmatprep.subr.bf16.mxu0 %v1372
    %1992 = vmatpush1.bf16.msra.mxu0 %v1371
    %1993 = vmatprep.subr.bf16.mxu0 %v1376
    %1994 = vmatpush1.bf16.msra.mxu0 %v1375
    %1995 = vmatprep.subr.bf16.mxu0 %v1380
    %1996 = vmatpush1.bf16.msra.mxu0 %v1379
    %1997 = vmatprep.subr.bf16.mxu0 %v1384
    %1998 = vmatpush1.bf16.msra.mxu0 %v1383
    %1999 = vmatprep.subr.bf16.mxu0 %v1388
    %2000 = vmatpush1.bf16.msra.mxu0 %v1387
    %2001 = vmatprep.subr.bf16.mxu0 %v1392
    %2002 = vmatpush1.bf16.msra.mxu0 %v1391
    %2003 = vmatprep.mubr.bf16.mxu0 %v136
    %2004 = vmatmul.mubr.bf16.gmra.mrb[0].mxu0 %v135
    %v2005 = vpop.f32.mrb[0].mxu0
    %v2006 = vadd.f32 %v1963, %v2005
    %v2007 = vpop.f32.mrb[0].mxu0
    %v2008 = vadd.f32 %v1965, %v2007
    %v2009 = vpop.f32.mrb[0].mxu0
    %v2010 = vadd.f32 %v1967, %v2009
    %v2011 = vpop.f32.mrb[0].mxu0
    %v2012 = vadd.f32 %v1969, %v2011
    %2013 = vdwg.mxu0
    %2014 = vmatprep.subr.bf16.mxu0 %v1396
    %2015 = vmatpush1.bf16.msra.mxu0 %v1395
    %2016 = vmatprep.subr.bf16.mxu0 %v1400
    %2017 = vmatpush1.bf16.msra.mxu0 %v1399
    %2018 = vmatprep.subr.bf16.mxu0 %v1404
    %2019 = vmatpush1.bf16.msra.mxu0 %v1403
    %2020 = vmatprep.subr.bf16.mxu0 %v1408
    %2021 = vmatpush1.bf16.msra.mxu0 %v1407
    %2022 = vmatprep.subr.bf16.mxu0 %v1412
    %2023 = vmatpush1.bf16.msra.mxu0 %v1411
    %2024 = vmatprep.subr.bf16.mxu0 %v1416
    %2025 = vmatpush1.bf16.msra.mxu0 %v1415
    %2026 = vmatprep.subr.bf16.mxu0 %v1420
    %2027 = vmatpush1.bf16.msra.mxu0 %v1419
    %2028 = vmatprep.subr.bf16.mxu0 %v1424
    %2029 = vmatpush1.bf16.msra.mxu0 %v1423
    %2030 = vmatprep.subr.bf16.mxu0 %v1428
    %2031 = vmatpush1.bf16.msra.mxu0 %v1427
    %2032 = vmatprep.subr.bf16.mxu0 %v1432
    %2033 = vmatpush1.bf16.msra.mxu0 %v1431
    %2034 = vmatprep.subr.bf16.mxu0 %v1436
    %2035 = vmatpush1.bf16.msra.mxu0 %v1435
    %2036 = vmatprep.subr.bf16.mxu0 %v1440
    %2037 = vmatpush1.bf16.msra.mxu0 %v1439
    %2038 = vmatprep.subr.bf16.mxu0 %v1444
    %2039 = vmatpush1.bf16.msra.mxu0 %v1443
    %2040 = vmatprep.subr.bf16.mxu0 %v1448
    %2041 = vmatpush1.bf16.msra.mxu0 %v1447
    %2042 = vmatprep.subr.bf16.mxu0 %v1452
    %2043 = vmatpush1.bf16.msra.mxu0 %v1451
    %2044 = vmatprep.subr.bf16.mxu0 %v1456
    %2045 = vmatpush1.bf16.msra.mxu0 %v1455
    %2046 = vmatprep.mubr.bf16.mxu0 %v138
    %2047 = vmatmul.mubr.bf16.gmra.mrb[0].mxu0 %v137
    %v2048 = vpop.f32.mrb[0].mxu0
    %v2049 = vadd.f32 %v2006, %v2048
    %v2050 = vpop.f32.mrb[0].mxu0
    %v2051 = vadd.f32 %v2008, %v2050
    %v2052 = vpop.f32.mrb[0].mxu0
    %v2053 = vadd.f32 %v2010, %v2052
    %v2054 = vpop.f32.mrb[0].mxu0
    %v2055 = vadd.f32 %v2012, %v2054
    %2056 = vdwg.mxu0
    %v2057 = vmax.f32 %v1877, 0.0
    %v2058 = vmax.f32 %v1879, 0.0
    %v2059 = vmax.f32 %v2049, 0.0
    %v2060 = vmax.f32 %v2051, 0.0
    %v2061 = vmax.f32 %v1881, 0.0
    %v2062 = vmax.f32 %v1883, 0.0
    %v2063 = vmax.f32 %v2053, 0.0
    %v2064 = vmax.f32 %v2055, 0.0
    %v2065 = vadd.f32 %v2057, %v2061
    %v2066 = vrot.slane %v2065, 4
    %v2067 = vadd.f32 %v2065, %v2066
    %v2068 = vrot.slane %v2067, 2
    %v2069 = vadd.f32 %v2067, %v2068
    %v2070 = vrot.slane %v2069, 1
    %v2071 = vadd.f32 %v2069, %v2070
    %v2072 = vadd.f32 %v2058, %v2062
    %v2073 = vrot.slane %v2072, 4
    %v2074 = vadd.f32 %v2072, %v2073
    %v2075 = vrot.slane %v2074, 2
    %v2076 = vadd.f32 %v2074, %v2075
    %v2077 = vrot.slane %v2076, 1
    %v2078 = vadd.f32 %v2076, %v2077
    %v2079 = vadd.f32 %v2059, %v2063
    %v2080 = vrot.slane %v2079, 4
    %v2081 = vadd.f32 %v2079, %v2080
    %v2082 = vrot.slane %v2081, 2
    %v2083 = vadd.f32 %v2081, %v2082
    %v2084 = vrot.slane %v2083, 1
    %v2085 = vadd.f32 %v2083, %v2084
    %v2086 = vadd.f32 %v2060, %v2064
    %v2087 = vrot.slane %v2086, 4
    %v2088 = vadd.f32 %v2086, %v2087
    %v2089 = vrot.slane %v2088, 2
    %v2090 = vadd.f32 %v2088, %v2089
    %v2091 = vrot.slane %v2090, 1
    %v2092 = vadd.f32 %v2090, %v2091
    %v2093 = vrcp.pop 16.0
    %v2094 = vmul.f32 %v2071, %v2093
    %v2095 = vmul.f32 %v2078, %v2093
    %v2096 = vmul.f32 %v2085, %v2093
    %v2097 = vmul.f32 %v2092, %v2093
    %v2098 = vsub.f32 %v2057, %v2094
    %v2099 = vsub.f32 %v2058, %v2095
    %v2100 = vsub.f32 %v2059, %v2096
    %v2101 = vsub.f32 %v2060, %v2097
    %v2102 = vsub.f32 %v2061, %v2094
    %v2103 = vsub.f32 %v2062, %v2095
    %v2104 = vsub.f32 %v2063, %v2096
    %v2105 = vsub.f32 %v2064, %v2097
    %v2106 = vmul.f32 %v2098, %v2098
    %v2107 = vmul.f32 %v2099, %v2099
    %v2108 = vmul.f32 %v2100, %v2100
    %v2109 = vmul.f32 %v2101, %v2101
    %v2110 = vmul.f32 %v2102, %v2102
    %v2111 = vmul.f32 %v2103, %v2103
    %v2112 = vmul.f32 %v2104, %v2104
    %v2113 = vmul.f32 %v2105, %v2105
    %v2114 = vadd.f32 %v2106, %v2110
    %v2115 = vrot.slane %v2114, 4
    %v2116 = vadd.f32 %v2114, %v2115
    %v2117 = vrot.slane %v2116, 2
    %v2118 = vadd.f32 %v2116, %v2117
    %v2119 = vrot.slane %v2118, 1
    %v2120 = vadd.f32 %v2118, %v2119
    %v2121 = vadd.f32 %v2107, %v2111
    %v2122 = vrot.slane %v2121, 4
    %v2123 = vadd.f32 %v2121, %v2122
    %v2124 = vrot.slane %v2123, 2
    %v2125 = vadd.f32 %v2123, %v2124
    %v2126 = vrot.slane %v2125, 1
    %v2127 = vadd.f32 %v2125, %v2126
    %v2128 = vadd.f32 %v2108, %v2112
    %v2129 = vrot.slane %v2128, 4
    %v2130 = vadd.f32 %v2128, %v2129
    %v2131 = vrot.slane %v2130, 2
    %v2132 = vadd.f32 %v2130, %v2131
    %v2133 = vrot.slane %v2132, 1
    %v2134 = vadd.f32 %v2132, %v2133
    %v2135 = vadd.f32 %v2109, %v2113
    %v2136 = vrot.slane %v2135, 4
    %v2137 = vadd.f32 %v2135, %v2136
    %v2138 = vrot.slane %v2137, 2
    %v2139 = vadd.f32 %v2137, %v2138
    %v2140 = vrot.slane %v2139, 1
    %v2141 = vadd.f32 %v2139, %v2140
    %v2142 = vmul.f32 %v2120, %v2093
    %v2143 = vmul.f32 %v2127, %v2093
    %v2144 = vmul.f32 %v2134, %v2093
    %v2145 = vmul.f32 %v2141, %v2093
    %v2146 = vadd.f32 %v2142, 1e-05
    %v2147 = vadd.f32 %v2143, 1e-05
    %v2148 = vadd.f32 %v2144, 1e-05
    %v2149 = vadd.f32 %v2145, 1e-05
    %v2150 = vrsqrt.pop %v2146
    %v2151 = vrsqrt.pop %v2147
    %v2152 = vrsqrt.pop %v2148
    %v2153 = vrsqrt.pop %v2149
    %v2158 = vcombine.low %v2150, %v2151
    %v2159 = vcombine.low %v2152, %v2153
    %v2160 = vrot.slane %v2158, 7
    %v2161 = vrot.slane %v2159, 7
    %v2164 = vmul.f32 %v129, %v2160
    %v2165 = vmul.f32 %v130, %v2161
    %v2168 = vlaneseq
    %v2169 = vshrl.u32 %v2168, 7
    %v2170 = vsub.s32 1, %v2169
    %v2171 = vrot.slane %v2164, %v2170
    %v2172 = vlaneseq
    %v2173 = vshrl.u32 %v2172, 7
    %v2174 = vsub.s32 5, %v2173
    %v2175 = vrot.slane %v2164, %v2174
    %v2176 = vlaneseq
    %v2177 = vshrl.u32 %v2176, 7
    %v2178 = vsub.s32 1, %v2177
    %v2179 = vrot.slane %v2165, %v2178
    %v2180 = vlaneseq
    %v2181 = vshrl.u32 %v2180, 7
    %v2182 = vsub.s32 5, %v2181
    %v2183 = vrot.slane %v2165, %v2182
    %v2188 = vmul.f32 %v2094, %v2171
    %v2189 = vmul.f32 %v2095, %v2175
    %v2190 = vmul.f32 %v2096, %v2179
    %v2191 = vmul.f32 %v2097, %v2183
    %v2196 = vcombine.low %v2188, %v2189
    %v2197 = vcombine.low %v2190, %v2191
    %v2198 = vrot.slane %v2196, 6
    %v2199 = vrot.slane %v2197, 6
    %v2202 = vsub.f32 %v129, %v2198
    %v2203 = vsub.f32 %v130, %v2199
    %v2204 = vlaneseq
    %v2205 = vshrl.u32 %v2204, 7
    %v2206 = vsub.s32 1, %v2205
    %v2207 = vrot.slane %v2171, %v2206
    %v2208 = vlaneseq
    %v2209 = vshrl.u32 %v2208, 7
    %v2210 = vsub.s32 1, %v2209
    %v2211 = vrot.slane %v2175, %v2210
    %v2212 = vlaneseq
    %v2213 = vshrl.u32 %v2212, 7
    %v2214 = vsub.s32 1, %v2213
    %v2215 = vrot.slane %v2179, %v2214
    %v2216 = vlaneseq
    %v2217 = vshrl.u32 %v2216, 7
    %v2218 = vsub.s32 1, %v2217
    %v2219 = vrot.slane %v2183, %v2218
    %v2220 = vmul.f32 %v2057, %v2207
    %v2221 = vmul.f32 %v2058, %v2211
    %v2222 = vmul.f32 %v2059, %v2215
    %v2223 = vmul.f32 %v2060, %v2219
    %v2224 = vmul.f32 %v2061, %v2207
    %v2225 = vmul.f32 %v2062, %v2211
    %v2226 = vmul.f32 %v2063, %v2215
    %v2227 = vmul.f32 %v2064, %v2219
    %v2230 = vlaneseq
    %v2231 = vshrl.u32 %v2230, 7
    %v2232 = vsub.s32 2, %v2231
    %v2233 = vrot.slane %v2202, %v2232
    %v2234 = vlaneseq
    %v2235 = vshrl.u32 %v2234, 7
    %v2236 = vsub.s32 6, %v2235
    %v2237 = vrot.slane %v2202, %v2236
    %v2238 = vlaneseq
    %v2239 = vshrl.u32 %v2238, 7
    %v2240 = vsub.s32 2, %v2239
    %v2241 = vrot.slane %v2203, %v2240
    %v2242 = vlaneseq
    %v2243 = vshrl.u32 %v2242, 7
    %v2244 = vsub.s32 6, %v2243
    %v2245 = vrot.slane %v2203, %v2244
    %v2250 = vlaneseq
    %v2251 = vshrl.u32 %v2250, 7
    %v2252 = vsub.s32 2, %v2251
    %v2253 = vrot.slane %v2233, %v2252
    %v2254 = vlaneseq
    %v2255 = vshrl.u32 %v2254, 7
    %v2256 = vsub.s32 2, %v2255
    %v2257 = vrot.slane %v2237, %v2256
    %v2258 = vlaneseq
    %v2259 = vshrl.u32 %v2258, 7
    %v2260 = vsub.s32 2, %v2259
    %v2261 = vrot.slane %v2241, %v2260
    %v2262 = vlaneseq
    %v2263 = vshrl.u32 %v2262, 7
    %v2264 = vsub.s32 2, %v2263
    %v2265 = vrot.slane %v2245, %v2264
    %v2266 = vadd.f32 %v2220, %v2253
    %v2267 = vadd.f32 %v2221, %v2257
    %v2268 = vadd.f32 %v2222, %v2261
    %v2269 = vadd.f32 %v2223, %v2265
    %v2270 = vadd.f32 %v2224, %v2253
    %v2271 = vadd.f32 %v2225, %v2257
    %v2272 = vadd.f32 %v2226, %v2261
    %v2273 = vadd.f32 %v2227, %v2265
    %v2274 = vld [vmem:[%s4] sm:$0x77]
    %v2275 = vld [vmem:[%s4 + $0x8] sm:$0x77]
    %v2276 = vpack.c.bf16 %v2270, %v2266
    %v2277 = vpack.c.bf16 %v2271, %v2267
    %v2278 = vpack.c.bf16 %v2272, %v2268
    %v2279 = vpack.c.bf16 %v2273, %v2269
    %v2280 = vld [vmem:[#allocation6] sm:$0xff]
    %v2281 = vld [vmem:[#allocation6 + $0x8] sm:$0xff]
    %v2282 = vld [vmem:[#allocation6 + $0x10] sm:$0xff]
    %v2283 = vld [vmem:[#allocation6 + $0x18] sm:$0xff]
    %v2284 = vld [vmem:[#allocation6 + $0x20] sm:$0xff]
    %v2285 = vld [vmem:[#allocation6 + $0x28] sm:$0xff]
    %v2286 = vld [vmem:[#allocation6 + $0x30] sm:$0xff]
    %v2287 = vld [vmem:[#allocation6 + $0x38] sm:$0xff]
    %v2288 = vld [vmem:[#allocation6 + $0x40] sm:$0xff]
    %v2289 = vld [vmem:[#allocation6 + $0x48] sm:$0xff]
    %v2290 = vld [vmem:[#allocation6 + $0x50] sm:$0xff]
    %v2291 = vld [vmem:[#allocation6 + $0x58] sm:$0xff]
    %v2292 = vld [vmem:[#allocation6 + $0x60] sm:$0xff]
    %v2293 = vld [vmem:[#allocation6 + $0x68] sm:$0xff]
    %v2294 = vld [vmem:[#allocation6 + $0x70] sm:$0xff]
    %v2295 = vld [vmem:[#allocation6 + $0x78] sm:$0xff]
    %v2296 = vld [vmem:[#allocation6 + $0x80] sm:$0xff]
    %v2297 = vld [vmem:[#allocation6 + $0x88] sm:$0xff]
    %v2298 = vld [vmem:[#allocation6 + $0x90] sm:$0xff]
    %v2299 = vld [vmem:[#allocation6 + $0x98] sm:$0xff]
    %v2300 = vld [vmem:[#allocation6 + $0xa0] sm:$0xff]
    %v2301 = vld [vmem:[#allocation6 + $0xa8] sm:$0xff]
    %v2302 = vld [vmem:[#allocation6 + $0xb0] sm:$0xff]
    %v2303 = vld [vmem:[#allocation6 + $0xb8] sm:$0xff]
    %v2304 = vld [vmem:[#allocation6 + $0xc0] sm:$0xff]
    %v2305 = vld [vmem:[#allocation6 + $0xc8] sm:$0xff]
    %v2306 = vld [vmem:[#allocation6 + $0xd0] sm:$0xff]
    %v2307 = vld [vmem:[#allocation6 + $0xd8] sm:$0xff]
    %v2308 = vld [vmem:[#allocation6 + $0xe0] sm:$0xff]
    %v2309 = vld [vmem:[#allocation6 + $0xe8] sm:$0xff]
    %v2310 = vld [vmem:[#allocation6 + $0xf0] sm:$0xff]
    %v2311 = vld [vmem:[#allocation6 + $0xf8] sm:$0xff]
    %v2312 = vld [vmem:[#allocation6 + $0x100] sm:$0xff]
    %v2313 = vld [vmem:[#allocation6 + $0x108] sm:$0xff]
    %v2314 = vld [vmem:[#allocation6 + $0x110] sm:$0xff]
    %v2315 = vld [vmem:[#allocation6 + $0x118] sm:$0xff]
    %v2316 = vld [vmem:[#allocation6 + $0x120] sm:$0xff]
    %v2317 = vld [vmem:[#allocation6 + $0x128] sm:$0xff]
    %v2318 = vld [vmem:[#allocation6 + $0x130] sm:$0xff]
    %v2319 = vld [vmem:[#allocation6 + $0x138] sm:$0xff]
    %v2320 = vld [vmem:[#allocation6 + $0x140] sm:$0xff]
    %v2321 = vld [vmem:[#allocation6 + $0x148] sm:$0xff]
    %v2322 = vld [vmem:[#allocation6 + $0x150] sm:$0xff]
    %v2323 = vld [vmem:[#allocation6 + $0x158] sm:$0xff]
    %v2324 = vld [vmem:[#allocation6 + $0x160] sm:$0xff]
    %v2325 = vld [vmem:[#allocation6 + $0x168] sm:$0xff]
    %v2326 = vld [vmem:[#allocation6 + $0x170] sm:$0xff]
    %v2327 = vld [vmem:[#allocation6 + $0x178] sm:$0xff]
    %v2328 = vld [vmem:[#allocation6 + $0x180] sm:$0xff]
    %v2329 = vld [vmem:[#allocation6 + $0x188] sm:$0xff]
    %v2330 = vld [vmem:[#allocation6 + $0x190] sm:$0xff]
    %v2331 = vld [vmem:[#allocation6 + $0x198] sm:$0xff]
    %v2332 = vld [vmem:[#allocation6 + $0x1a0] sm:$0xff]
    %v2333 = vld [vmem:[#allocation6 + $0x1a8] sm:$0xff]
    %v2334 = vld [vmem:[#allocation6 + $0x1b0] sm:$0xff]
    %v2335 = vld [vmem:[#allocation6 + $0x1b8] sm:$0xff]
    %v2336 = vld [vmem:[#allocation6 + $0x1c0] sm:$0xff]
    %v2337 = vld [vmem:[#allocation6 + $0x1c8] sm:$0xff]
    %v2338 = vld [vmem:[#allocation6 + $0x1d0] sm:$0xff]
    %v2339 = vld [vmem:[#allocation6 + $0x1d8] sm:$0xff]
    %v2340 = vld [vmem:[#allocation6 + $0x1e0] sm:$0xff]
    %v2341 = vld [vmem:[#allocation6 + $0x1e8] sm:$0xff]
    %v2342 = vld [vmem:[#allocation6 + $0x1f0] sm:$0xff]
    %v2343 = vld [vmem:[#allocation6 + $0x1f8] sm:$0xff]
    %v2344 = vld [vmem:[#allocation6 + $0x200] sm:$0xff]
    %v2345 = vld [vmem:[#allocation6 + $0x208] sm:$0xff]
    %v2346 = vld [vmem:[#allocation6 + $0x210] sm:$0xff]
    %v2347 = vld [vmem:[#allocation6 + $0x218] sm:$0xff]
    %v2348 = vld [vmem:[#allocation6 + $0x220] sm:$0xff]
    %v2349 = vld [vmem:[#allocation6 + $0x228] sm:$0xff]
    %v2350 = vld [vmem:[#allocation6 + $0x230] sm:$0xff]
    %v2351 = vld [vmem:[#allocation6 + $0x238] sm:$0xff]
    %v2352 = vld [vmem:[#allocation6 + $0x240] sm:$0xff]
    %v2353 = vld [vmem:[#allocation6 + $0x248] sm:$0xff]
    %v2354 = vld [vmem:[#allocation6 + $0x250] sm:$0xff]
    %v2355 = vld [vmem:[#allocation6 + $0x258] sm:$0xff]
    %v2356 = vld [vmem:[#allocation6 + $0x260] sm:$0xff]
    %v2357 = vld [vmem:[#allocation6 + $0x268] sm:$0xff]
    %v2358 = vld [vmem:[#allocation6 + $0x270] sm:$0xff]
    %v2359 = vld [vmem:[#allocation6 + $0x278] sm:$0xff]
    %v2360 = vld [vmem:[#allocation6 + $0x280] sm:$0xff]
    %v2361 = vld [vmem:[#allocation6 + $0x288] sm:$0xff]
    %v2362 = vld [vmem:[#allocation6 + $0x290] sm:$0xff]
    %v2363 = vld [vmem:[#allocation6 + $0x298] sm:$0xff]
    %v2364 = vld [vmem:[#allocation6 + $0x2a0] sm:$0xff]
    %v2365 = vld [vmem:[#allocation6 + $0x2a8] sm:$0xff]
    %v2366 = vld [vmem:[#allocation6 + $0x2b0] sm:$0xff]
    %v2367 = vld [vmem:[#allocation6 + $0x2b8] sm:$0xff]
    %v2368 = vld [vmem:[#allocation6 + $0x2c0] sm:$0xff]
    %v2369 = vld [vmem:[#allocation6 + $0x2c8] sm:$0xff]
    %v2370 = vld [vmem:[#allocation6 + $0x2d0] sm:$0xff]
    %v2371 = vld [vmem:[#allocation6 + $0x2d8] sm:$0xff]
    %v2372 = vld [vmem:[#allocation6 + $0x2e0] sm:$0xff]
    %v2373 = vld [vmem:[#allocation6 + $0x2e8] sm:$0xff]
    %v2374 = vld [vmem:[#allocation6 + $0x2f0] sm:$0xff]
    %v2375 = vld [vmem:[#allocation6 + $0x2f8] sm:$0xff]
    %v2376 = vld [vmem:[#allocation6 + $0x300] sm:$0xff]
    %v2377 = vld [vmem:[#allocation6 + $0x308] sm:$0xff]
    %v2378 = vld [vmem:[#allocation6 + $0x310] sm:$0xff]
    %v2379 = vld [vmem:[#allocation6 + $0x318] sm:$0xff]
    %v2380 = vld [vmem:[#allocation6 + $0x320] sm:$0xff]
    %v2381 = vld [vmem:[#allocation6 + $0x328] sm:$0xff]
    %v2382 = vld [vmem:[#allocation6 + $0x330] sm:$0xff]
    %v2383 = vld [vmem:[#allocation6 + $0x338] sm:$0xff]
    %v2384 = vld [vmem:[#allocation6 + $0x340] sm:$0xff]
    %v2385 = vld [vmem:[#allocation6 + $0x348] sm:$0xff]
    %v2386 = vld [vmem:[#allocation6 + $0x350] sm:$0xff]
    %v2387 = vld [vmem:[#allocation6 + $0x358] sm:$0xff]
    %v2388 = vld [vmem:[#allocation6 + $0x360] sm:$0xff]
    %v2389 = vld [vmem:[#allocation6 + $0x368] sm:$0xff]
    %v2390 = vld [vmem:[#allocation6 + $0x370] sm:$0xff]
    %v2391 = vld [vmem:[#allocation6 + $0x378] sm:$0xff]
    %v2392 = vld [vmem:[#allocation6 + $0x380] sm:$0xff]
    %v2393 = vld [vmem:[#allocation6 + $0x388] sm:$0xff]
    %v2394 = vld [vmem:[#allocation6 + $0x390] sm:$0xff]
    %v2395 = vld [vmem:[#allocation6 + $0x398] sm:$0xff]
    %v2396 = vld [vmem:[#allocation6 + $0x3a0] sm:$0xff]
    %v2397 = vld [vmem:[#allocation6 + $0x3a8] sm:$0xff]
    %v2398 = vld [vmem:[#allocation6 + $0x3b0] sm:$0xff]
    %v2399 = vld [vmem:[#allocation6 + $0x3b8] sm:$0xff]
    %v2400 = vld [vmem:[#allocation6 + $0x3c0] sm:$0xff]
    %v2401 = vld [vmem:[#allocation6 + $0x3c8] sm:$0xff]
    %v2402 = vld [vmem:[#allocation6 + $0x3d0] sm:$0xff]
    %v2403 = vld [vmem:[#allocation6 + $0x3d8] sm:$0xff]
    %v2404 = vld [vmem:[#allocation6 + $0x3e0] sm:$0xff]
    %v2405 = vld [vmem:[#allocation6 + $0x3e8] sm:$0xff]
    %v2406 = vld [vmem:[#allocation6 + $0x3f0] sm:$0xff]
    %v2407 = vld [vmem:[#allocation6 + $0x3f8] sm:$0xff]
    %v2410 = vlaneseq
    %v2411 = vshrl.u32 %v2410, 7
    %v2412 = vsub.s32 0, %v2411
    %v2413 = vrot.slane %v2274, %v2412
    %v2414 = vlaneseq
    %v2415 = vshrl.u32 %v2414, 7
    %v2416 = vsub.s32 4, %v2415
    %v2417 = vrot.slane %v2274, %v2416
    %v2418 = vlaneseq
    %v2419 = vshrl.u32 %v2418, 7
    %v2420 = vsub.s32 0, %v2419
    %v2421 = vrot.slane %v2275, %v2420
    %v2422 = vlaneseq
    %v2423 = vshrl.u32 %v2422, 7
    %v2424 = vsub.s32 4, %v2423
    %v2425 = vrot.slane %v2275, %v2424
    %v2430 = vlaneseq
    %v2431 = vshrl.u32 %v2430, 7
    %v2432 = vsub.s32 0, %v2431
    %v2433 = vrot.slane %v2413, %v2432
    %v2434 = vlaneseq
    %v2435 = vshrl.u32 %v2434, 7
    %v2436 = vsub.s32 0, %v2435
    %v2437 = vrot.slane %v2417, %v2436
    %v2438 = vlaneseq
    %v2439 = vshrl.u32 %v2438, 7
    %v2440 = vsub.s32 0, %v2439
    %v2441 = vrot.slane %v2421, %v2440
    %v2442 = vlaneseq
    %v2443 = vshrl.u32 %v2442, 7
    %v2444 = vsub.s32 0, %v2443
    %v2445 = vrot.slane %v2425, %v2444
    %v2574 = vunpack.c.l.b16 %v2280
    %v2575 = vunpack.c.h.b16 %v2280
    %v2576 = vunpack.c.l.b16 %v2281
    %v2577 = vunpack.c.h.b16 %v2281
    %v2578 = vunpack.c.l.b16 %v2282
    %v2579 = vunpack.c.h.b16 %v2282
    %v2580 = vunpack.c.l.b16 %v2283
    %v2581 = vunpack.c.h.b16 %v2283
    %v2582 = vunpack.c.l.b16 %v2284
    %v2583 = vunpack.c.h.b16 %v2284
    %v2584 = vunpack.c.l.b16 %v2285
    %v2585 = vunpack.c.h.b16 %v2285
    %v2586 = vunpack.c.l.b16 %v2286
    %v2587 = vunpack.c.h.b16 %v2286
    %v2588 = vunpack.c.l.b16 %v2287
    %v2589 = vunpack.c.h.b16 %v2287
    %v2590 = vunpack.c.l.b16 %v2288
    %v2591 = vunpack.c.h.b16 %v2288
    %v2592 = vunpack.c.l.b16 %v2289
    %v2593 = vunpack.c.h.b16 %v2289
    %v2594 = vunpack.c.l.b16 %v2290
    %v2595 = vunpack.c.h.b16 %v2290
    %v2596 = vunpack.c.l.b16 %v2291
    %v2597 = vunpack.c.h.b16 %v2291
    %v2598 = vunpack.c.l.b16 %v2292
    %v2599 = vunpack.c.h.b16 %v2292
    %v2600 = vunpack.c.l.b16 %v2293
    %v2601 = vunpack.c.h.b16 %v2293
    %v2602 = vunpack.c.l.b16 %v2294
    %v2603 = vunpack.c.h.b16 %v2294
    %v2604 = vunpack.c.l.b16 %v2295
    %v2605 = vunpack.c.h.b16 %v2295
    %v2606 = vunpack.c.l.b16 %v2296
    %v2607 = vunpack.c.h.b16 %v2296
    %v2608 = vunpack.c.l.b16 %v2297
    %v2609 = vunpack.c.h.b16 %v2297
    %v2610 = vunpack.c.l.b16 %v2298
    %v2611 = vunpack.c.h.b16 %v2298
    %v2612 = vunpack.c.l.b16 %v2299
    %v2613 = vunpack.c.h.b16 %v2299
    %v2614 = vunpack.c.l.b16 %v2300
    %v2615 = vunpack.c.h.b16 %v2300
    %v2616 = vunpack.c.l.b16 %v2301
    %v2617 = vunpack.c.h.b16 %v2301
    %v2618 = vunpack.c.l.b16 %v2302
    %v2619 = vunpack.c.h.b16 %v2302
    %v2620 = vunpack.c.l.b16 %v2303
    %v2621 = vunpack.c.h.b16 %v2303
    %v2622 = vunpack.c.l.b16 %v2304
    %v2623 = vunpack.c.h.b16 %v2304
    %v2624 = vunpack.c.l.b16 %v2305
    %v2625 = vunpack.c.h.b16 %v2305
    %v2626 = vunpack.c.l.b16 %v2306
    %v2627 = vunpack.c.h.b16 %v2306
    %v2628 = vunpack.c.l.b16 %v2307
    %v2629 = vunpack.c.h.b16 %v2307
    %v2630 = vunpack.c.l.b16 %v2308
    %v2631 = vunpack.c.h.b16 %v2308
    %v2632 = vunpack.c.l.b16 %v2309
    %v2633 = vunpack.c.h.b16 %v2309
    %v2634 = vunpack.c.l.b16 %v2310
    %v2635 = vunpack.c.h.b16 %v2310
    %v2636 = vunpack.c.l.b16 %v2311
    %v2637 = vunpack.c.h.b16 %v2311
    %v2638 = vunpack.c.l.b16 %v2312
    %v2639 = vunpack.c.h.b16 %v2312
    %v2640 = vunpack.c.l.b16 %v2313
    %v2641 = vunpack.c.h.b16 %v2313
    %v2642 = vunpack.c.l.b16 %v2314
    %v2643 = vunpack.c.h.b16 %v2314
    %v2644 = vunpack.c.l.b16 %v2315
    %v2645 = vunpack.c.h.b16 %v2315
    %v2646 = vunpack.c.l.b16 %v2316
    %v2647 = vunpack.c.h.b16 %v2316
    %v2648 = vunpack.c.l.b16 %v2317
    %v2649 = vunpack.c.h.b16 %v2317
    %v2650 = vunpack.c.l.b16 %v2318
    %v2651 = vunpack.c.h.b16 %v2318
    %v2652 = vunpack.c.l.b16 %v2319
    %v2653 = vunpack.c.h.b16 %v2319
    %v2654 = vunpack.c.l.b16 %v2320
    %v2655 = vunpack.c.h.b16 %v2320
    %v2656 = vunpack.c.l.b16 %v2321
    %v2657 = vunpack.c.h.b16 %v2321
    %v2658 = vunpack.c.l.b16 %v2322
    %v2659 = vunpack.c.h.b16 %v2322
    %v2660 = vunpack.c.l.b16 %v2323
    %v2661 = vunpack.c.h.b16 %v2323
    %v2662 = vunpack.c.l.b16 %v2324
    %v2663 = vunpack.c.h.b16 %v2324
    %v2664 = vunpack.c.l.b16 %v2325
    %v2665 = vunpack.c.h.b16 %v2325
    %v2666 = vunpack.c.l.b16 %v2326
    %v2667 = vunpack.c.h.b16 %v2326
    %v2668 = vunpack.c.l.b16 %v2327
    %v2669 = vunpack.c.h.b16 %v2327
    %v2670 = vunpack.c.l.b16 %v2328
    %v2671 = vunpack.c.h.b16 %v2328
    %v2672 = vunpack.c.l.b16 %v2329
    %v2673 = vunpack.c.h.b16 %v2329
    %v2674 = vunpack.c.l.b16 %v2330
    %v2675 = vunpack.c.h.b16 %v2330
    %v2676 = vunpack.c.l.b16 %v2331
    %v2677 = vunpack.c.h.b16 %v2331
    %v2678 = vunpack.c.l.b16 %v2332
    %v2679 = vunpack.c.h.b16 %v2332
    %v2680 = vunpack.c.l.b16 %v2333
    %v2681 = vunpack.c.h.b16 %v2333
    %v2682 = vunpack.c.l.b16 %v2334
    %v2683 = vunpack.c.h.b16 %v2334
    %v2684 = vunpack.c.l.b16 %v2335
    %v2685 = vunpack.c.h.b16 %v2335
    %v2686 = vunpack.c.l.b16 %v2336
    %v2687 = vunpack.c.h.b16 %v2336
    %v2688 = vunpack.c.l.b16 %v2337
    %v2689 = vunpack.c.h.b16 %v2337
    %v2690 = vunpack.c.l.b16 %v2338
    %v2691 = vunpack.c.h.b16 %v2338
    %v2692 = vunpack.c.l.b16 %v2339
    %v2693 = vunpack.c.h.b16 %v2339
    %v2694 = vunpack.c.l.b16 %v2340
    %v2695 = vunpack.c.h.b16 %v2340
    %v2696 = vunpack.c.l.b16 %v2341
    %v2697 = vunpack.c.h.b16 %v2341
    %v2698 = vunpack.c.l.b16 %v2342
    %v2699 = vunpack.c.h.b16 %v2342
    %v2700 = vunpack.c.l.b16 %v2343
    %v2701 = vunpack.c.h.b16 %v2343
    %v2702 = vunpack.c.l.b16 %v2344
    %v2703 = vunpack.c.h.b16 %v2344
    %v2704 = vunpack.c.l.b16 %v2345
    %v2705 = vunpack.c.h.b16 %v2345
    %v2706 = vunpack.c.l.b16 %v2346
    %v2707 = vunpack.c.h.b16 %v2346
    %v2708 = vunpack.c.l.b16 %v2347
    %v2709 = vunpack.c.h.b16 %v2347
    %v2710 = vunpack.c.l.b16 %v2348
    %v2711 = vunpack.c.h.b16 %v2348
    %v2712 = vunpack.c.l.b16 %v2349
    %v2713 = vunpack.c.h.b16 %v2349
    %v2714 = vunpack.c.l.b16 %v2350
    %v2715 = vunpack.c.h.b16 %v2350
    %v2716 = vunpack.c.l.b16 %v2351
    %v2717 = vunpack.c.h.b16 %v2351
    %v2718 = vunpack.c.l.b16 %v2352
    %v2719 = vunpack.c.h.b16 %v2352
    %v2720 = vunpack.c.l.b16 %v2353
    %v2721 = vunpack.c.h.b16 %v2353
    %v2722 = vunpack.c.l.b16 %v2354
    %v2723 = vunpack.c.h.b16 %v2354
    %v2724 = vunpack.c.l.b16 %v2355
    %v2725 = vunpack.c.h.b16 %v2355
    %v2726 = vunpack.c.l.b16 %v2356
    %v2727 = vunpack.c.h.b16 %v2356
    %v2728 = vunpack.c.l.b16 %v2357
    %v2729 = vunpack.c.h.b16 %v2357
    %v2730 = vunpack.c.l.b16 %v2358
    %v2731 = vunpack.c.h.b16 %v2358
    %v2732 = vunpack.c.l.b16 %v2359
    %v2733 = vunpack.c.h.b16 %v2359
    %v2734 = vunpack.c.l.b16 %v2360
    %v2735 = vunpack.c.h.b16 %v2360
    %v2736 = vunpack.c.l.b16 %v2361
    %v2737 = vunpack.c.h.b16 %v2361
    %v2738 = vunpack.c.l.b16 %v2362
    %v2739 = vunpack.c.h.b16 %v2362
    %v2740 = vunpack.c.l.b16 %v2363
    %v2741 = vunpack.c.h.b16 %v2363
    %v2742 = vunpack.c.l.b16 %v2364
    %v2743 = vunpack.c.h.b16 %v2364
    %v2744 = vunpack.c.l.b16 %v2365
    %v2745 = vunpack.c.h.b16 %v2365
    %v2746 = vunpack.c.l.b16 %v2366
    %v2747 = vunpack.c.h.b16 %v2366
    %v2748 = vunpack.c.l.b16 %v2367
    %v2749 = vunpack.c.h.b16 %v2367
    %v2750 = vunpack.c.l.b16 %v2368
    %v2751 = vunpack.c.h.b16 %v2368
    %v2752 = vunpack.c.l.b16 %v2369
    %v2753 = vunpack.c.h.b16 %v2369
    %v2754 = vunpack.c.l.b16 %v2370
    %v2755 = vunpack.c.h.b16 %v2370
    %v2756 = vunpack.c.l.b16 %v2371
    %v2757 = vunpack.c.h.b16 %v2371
    %v2758 = vunpack.c.l.b16 %v2372
    %v2759 = vunpack.c.h.b16 %v2372
    %v2760 = vunpack.c.l.b16 %v2373
    %v2761 = vunpack.c.h.b16 %v2373
    %v2762 = vunpack.c.l.b16 %v2374
    %v2763 = vunpack.c.h.b16 %v2374
    %v2764 = vunpack.c.l.b16 %v2375
    %v2765 = vunpack.c.h.b16 %v2375
    %v2766 = vunpack.c.l.b16 %v2376
    %v2767 = vunpack.c.h.b16 %v2376
    %v2768 = vunpack.c.l.b16 %v2377
    %v2769 = vunpack.c.h.b16 %v2377
    %v2770 = vunpack.c.l.b16 %v2378
    %v2771 = vunpack.c.h.b16 %v2378
    %v2772 = vunpack.c.l.b16 %v2379
    %v2773 = vunpack.c.h.b16 %v2379
    %v2774 = vunpack.c.l.b16 %v2380
    %v2775 = vunpack.c.h.b16 %v2380
    %v2776 = vunpack.c.l.b16 %v2381
    %v2777 = vunpack.c.h.b16 %v2381
    %v2778 = vunpack.c.l.b16 %v2382
    %v2779 = vunpack.c.h.b16 %v2382
    %v2780 = vunpack.c.l.b16 %v2383
    %v2781 = vunpack.c.h.b16 %v2383
    %v2782 = vunpack.c.l.b16 %v2384
    %v2783 = vunpack.c.h.b16 %v2384
    %v2784 = vunpack.c.l.b16 %v2385
    %v2785 = vunpack.c.h.b16 %v2385
    %v2786 = vunpack.c.l.b16 %v2386
    %v2787 = vunpack.c.h.b16 %v2386
    %v2788 = vunpack.c.l.b16 %v2387
    %v2789 = vunpack.c.h.b16 %v2387
    %v2790 = vunpack.c.l.b16 %v2388
    %v2791 = vunpack.c.h.b16 %v2388
    %v2792 = vunpack.c.l.b16 %v2389
    %v2793 = vunpack.c.h.b16 %v2389
    %v2794 = vunpack.c.l.b16 %v2390
    %v2795 = vunpack.c.h.b16 %v2390
    %v2796 = vunpack.c.l.b16 %v2391
    %v2797 = vunpack.c.h.b16 %v2391
    %v2798 = vunpack.c.l.b16 %v2392
    %v2799 = vunpack.c.h.b16 %v2392
    %v2800 = vunpack.c.l.b16 %v2393
    %v2801 = vunpack.c.h.b16 %v2393
    %v2802 = vunpack.c.l.b16 %v2394
    %v2803 = vunpack.c.h.b16 %v2394
    %v2804 = vunpack.c.l.b16 %v2395
    %v2805 = vunpack.c.h.b16 %v2395
    %v2806 = vunpack.c.l.b16 %v2396
    %v2807 = vunpack.c.h.b16 %v2396
    %v2808 = vunpack.c.l.b16 %v2397
    %v2809 = vunpack.c.h.b16 %v2397
    %v2810 = vunpack.c.l.b16 %v2398
    %v2811 = vunpack.c.h.b16 %v2398
    %v2812 = vunpack.c.l.b16 %v2399
    %v2813 = vunpack.c.h.b16 %v2399
    %v2814 = vunpack.c.l.b16 %v2400
    %v2815 = vunpack.c.h.b16 %v2400
    %v2816 = vunpack.c.l.b16 %v2401
    %v2817 = vunpack.c.h.b16 %v2401
    %v2818 = vunpack.c.l.b16 %v2402
    %v2819 = vunpack.c.h.b16 %v2402
    %v2820 = vunpack.c.l.b16 %v2403
    %v2821 = vunpack.c.h.b16 %v2403
    %v2822 = vunpack.c.l.b16 %v2404
    %v2823 = vunpack.c.h.b16 %v2404
    %v2824 = vunpack.c.l.b16 %v2405
    %v2825 = vunpack.c.h.b16 %v2405
    %v2826 = vunpack.c.l.b16 %v2406
    %v2827 = vunpack.c.h.b16 %v2406
    %v2828 = vunpack.c.l.b16 %v2407
    %v2829 = vunpack.c.h.b16 %v2407
    %v2830 = vpack.c.b16 %v2578, %v2574
    %v2831 = vpack.c.b16 %v2579, %v2575
    %v2832 = vpack.c.b16 %v2580, %v2576
    %v2833 = vpack.c.b16 %v2581, %v2577
    %v2834 = vpack.c.b16 %v2586, %v2582
    %v2835 = vpack.c.b16 %v2587, %v2583
    %v2836 = vpack.c.b16 %v2588, %v2584
    %v2837 = vpack.c.b16 %v2589, %v2585
    %v2838 = vpack.c.b16 %v2594, %v2590
    %v2839 = vpack.c.b16 %v2595, %v2591
    %v2840 = vpack.c.b16 %v2596, %v2592
    %v2841 = vpack.c.b16 %v2597, %v2593
    %v2842 = vpack.c.b16 %v2602, %v2598
    %v2843 = vpack.c.b16 %v2603, %v2599
    %v2844 = vpack.c.b16 %v2604, %v2600
    %v2845 = vpack.c.b16 %v2605, %v2601
    %v2846 = vpack.c.b16 %v2610, %v2606
    %v2847 = vpack.c.b16 %v2611, %v2607
    %v2848 = vpack.c.b16 %v2612, %v2608
    %v2849 = vpack.c.b16 %v2613, %v2609
    %v2850 = vpack.c.b16 %v2618, %v2614
    %v2851 = vpack.c.b16 %v2619, %v2615
    %v2852 = vpack.c.b16 %v2620, %v2616
    %v2853 = vpack.c.b16 %v2621, %v2617
    %v2854 = vpack.c.b16 %v2626, %v2622
    %v2855 = vpack.c.b16 %v2627, %v2623
    %v2856 = vpack.c.b16 %v2628, %v2624
    %v2857 = vpack.c.b16 %v2629, %v2625
    %v2858 = vpack.c.b16 %v2634, %v2630
    %v2859 = vpack.c.b16 %v2635, %v2631
    %v2860 = vpack.c.b16 %v2636, %v2632
    %v2861 = vpack.c.b16 %v2637, %v2633
    %v2862 = vpack.c.b16 %v2642, %v2638
    %v2863 = vpack.c.b16 %v2643, %v2639
    %v2864 = vpack.c.b16 %v2644, %v2640
    %v2865 = vpack.c.b16 %v2645, %v2641
    %v2866 = vpack.c.b16 %v2650, %v2646
    %v2867 = vpack.c.b16 %v2651, %v2647
    %v2868 = vpack.c.b16 %v2652, %v2648
    %v2869 = vpack.c.b16 %v2653, %v2649
    %v2870 = vpack.c.b16 %v2658, %v2654
    %v2871 = vpack.c.b16 %v2659, %v2655
    %v2872 = vpack.c.b16 %v2660, %v2656
    %v2873 = vpack.c.b16 %v2661, %v2657
    %v2874 = vpack.c.b16 %v2666, %v2662
    %v2875 = vpack.c.b16 %v2667, %v2663
    %v2876 = vpack.c.b16 %v2668, %v2664
    %v2877 = vpack.c.b16 %v2669, %v2665
    %v2878 = vpack.c.b16 %v2674, %v2670
    %v2879 = vpack.c.b16 %v2675, %v2671
    %v2880 = vpack.c.b16 %v2676, %v2672
    %v2881 = vpack.c.b16 %v2677, %v2673
    %v2882 = vpack.c.b16 %v2682, %v2678
    %v2883 = vpack.c.b16 %v2683, %v2679
    %v2884 = vpack.c.b16 %v2684, %v2680
    %v2885 = vpack.c.b16 %v2685, %v2681
    %v2886 = vpack.c.b16 %v2690, %v2686
    %v2887 = vpack.c.b16 %v2691, %v2687
    %v2888 = vpack.c.b16 %v2692, %v2688
    %v2889 = vpack.c.b16 %v2693, %v2689
    %v2890 = vpack.c.b16 %v2698, %v2694
    %v2891 = vpack.c.b16 %v2699, %v2695
    %v2892 = vpack.c.b16 %v2700, %v2696
    %v2893 = vpack.c.b16 %v2701, %v2697
    %v2894 = vpack.c.b16 %v2706, %v2702
    %v2895 = vpack.c.b16 %v2707, %v2703
    %v2896 = vpack.c.b16 %v2708, %v2704
    %v2897 = vpack.c.b16 %v2709, %v2705
    %v2898 = vpack.c.b16 %v2714, %v2710
    %v2899 = vpack.c.b16 %v2715, %v2711
    %v2900 = vpack.c.b16 %v2716, %v2712
    %v2901 = vpack.c.b16 %v2717, %v2713
    %v2902 = vpack.c.b16 %v2722, %v2718
    %v2903 = vpack.c.b16 %v2723, %v2719
    %v2904 = vpack.c.b16 %v2724, %v2720
    %v2905 = vpack.c.b16 %v2725, %v2721
    %v2906 = vpack.c.b16 %v2730, %v2726
    %v2907 = vpack.c.b16 %v2731, %v2727
    %v2908 = vpack.c.b16 %v2732, %v2728
    %v2909 = vpack.c.b16 %v2733, %v2729
    %v2910 = vpack.c.b16 %v2738, %v2734
    %v2911 = vpack.c.b16 %v2739, %v2735
    %v2912 = vpack.c.b16 %v2740, %v2736
    %v2913 = vpack.c.b16 %v2741, %v2737
    %v2914 = vpack.c.b16 %v2746, %v2742
    %v2915 = vpack.c.b16 %v2747, %v2743
    %v2916 = vpack.c.b16 %v2748, %v2744
    %v2917 = vpack.c.b16 %v2749, %v2745
    %v2918 = vpack.c.b16 %v2754, %v2750
    %v2919 = vpack.c.b16 %v2755, %v2751
    %v2920 = vpack.c.b16 %v2756, %v2752
    %v2921 = vpack.c.b16 %v2757, %v2753
    %v2922 = vpack.c.b16 %v2762, %v2758
    %v2923 = vpack.c.b16 %v2763, %v2759
    %v2924 = vpack.c.b16 %v2764, %v2760
    %v2925 = vpack.c.b16 %v2765, %v2761
    %v2926 = vpack.c.b16 %v2770, %v2766
    %v2927 = vpack.c.b16 %v2771, %v2767
    %v2928 = vpack.c.b16 %v2772, %v2768
    %v2929 = vpack.c.b16 %v2773, %v2769
    %v2930 = vpack.c.b16 %v2778, %v2774
    %v2931 = vpack.c.b16 %v2779, %v2775
    %v2932 = vpack.c.b16 %v2780, %v2776
    %v2933 = vpack.c.b16 %v2781, %v2777
    %v2934 = vpack.c.b16 %v2786, %v2782
    %v2935 = vpack.c.b16 %v2787, %v2783
    %v2936 = vpack.c.b16 %v2788, %v2784
    %v2937 = vpack.c.b16 %v2789, %v2785
    %v2938 = vpack.c.b16 %v2794, %v2790
    %v2939 = vpack.c.b16 %v2795, %v2791
    %v2940 = vpack.c.b16 %v2796, %v2792
    %v2941 = vpack.c.b16 %v2797, %v2793
    %v2942 = vpack.c.b16 %v2802, %v2798
    %v2943 = vpack.c.b16 %v2803, %v2799
    %v2944 = vpack.c.b16 %v2804, %v2800
    %v2945 = vpack.c.b16 %v2805, %v2801
    %v2946 = vpack.c.b16 %v2810, %v2806
    %v2947 = vpack.c.b16 %v2811, %v2807
    %v2948 = vpack.c.b16 %v2812, %v2808
    %v2949 = vpack.c.b16 %v2813, %v2809
    %v2950 = vpack.c.b16 %v2818, %v2814
    %v2951 = vpack.c.b16 %v2819, %v2815
    %v2952 = vpack.c.b16 %v2820, %v2816
    %v2953 = vpack.c.b16 %v2821, %v2817
    %v2954 = vpack.c.b16 %v2826, %v2822
    %v2955 = vpack.c.b16 %v2827, %v2823
    %v2956 = vpack.c.b16 %v2828, %v2824
    %v2957 = vpack.c.b16 %v2829, %v2825
    %3086 = vmatprep.subr.bf16.mxu0 %v2831
    %3087 = vmatpush1.bf16.msra.mxu0 %v2830
    %3088 = vmatprep.subr.bf16.mxu0 %v2835
    %3089 = vmatpush1.bf16.msra.mxu0 %v2834
    %3090 = vmatprep.subr.bf16.mxu0 %v2839
    %3091 = vmatpush1.bf16.msra.mxu0 %v2838
    %3092 = vmatprep.subr.bf16.mxu0 %v2843
    %3093 = vmatpush1.bf16.msra.mxu0 %v2842
    %3094 = vmatprep.subr.bf16.mxu0 %v2847
    %3095 = vmatpush1.bf16.msra.mxu0 %v2846
    %3096 = vmatprep.subr.bf16.mxu0 %v2851
    %3097 = vmatpush1.bf16.msra.mxu0 %v2850
    %3098 = vmatprep.subr.bf16.mxu0 %v2855
    %3099 = vmatpush1.bf16.msra.mxu0 %v2854
    %3100 = vmatprep.subr.bf16.mxu0 %v2859
    %3101 = vmatpush1.bf16.msra.mxu0 %v2858
    %3102 = vmatprep.subr.bf16.mxu0 %v2863
    %3103 = vmatpush1.bf16.msra.mxu0 %v2862
    %3104 = vmatprep.subr.bf16.mxu0 %v2867
    %3105 = vmatpush1.bf16.msra.mxu0 %v2866
    %3106 = vmatprep.subr.bf16.mxu0 %v2871
    %3107 = vmatpush1.bf16.msra.mxu0 %v2870
    %3108 = vmatprep.subr.bf16.mxu0 %v2875
    %3109 = vmatpush1.bf16.msra.mxu0 %v2874
    %3110 = vmatprep.subr.bf16.mxu0 %v2879
    %3111 = vmatpush1.bf16.msra.mxu0 %v2878
    %3112 = vmatprep.subr.bf16.mxu0 %v2883
    %3113 = vmatpush1.bf16.msra.mxu0 %v2882
    %3114 = vmatprep.subr.bf16.mxu0 %v2887
    %3115 = vmatpush1.bf16.msra.mxu0 %v2886
    %3116 = vmatprep.subr.bf16.mxu0 %v2891
    %3117 = vmatpush1.bf16.msra.mxu0 %v2890
    %3118 = vmatprep.mubr.bf16.mxu0 %v2277
    %3119 = vmatmul.mubr.bf16.gmra.mrb[0].mxu0 %v2276
    %v3120 = vpop.f32.mrb[0].mxu0
    %v3121 = vadd.f32 %v2433, %v3120
    %v3122 = vpop.f32.mrb[0].mxu0
    %v3123 = vadd.f32 %v2437, %v3122
    %v3124 = vpop.f32.mrb[0].mxu0
    %v3125 = vadd.f32 %v2433, %v3124
    %v3126 = vpop.f32.mrb[0].mxu0
    %v3127 = vadd.f32 %v2437, %v3126
    %3128 = vdwg.mxu0
    %3129 = vmatprep.subr.bf16.mxu0 %v2895
    %3130 = vmatpush1.bf16.msra.mxu0 %v2894
    %3131 = vmatprep.subr.bf16.mxu0 %v2899
    %3132 = vmatpush1.bf16.msra.mxu0 %v2898
    %3133 = vmatprep.subr.bf16.mxu0 %v2903
    %3134 = vmatpush1.bf16.msra.mxu0 %v2902
    %3135 = vmatprep.subr.bf16.mxu0 %v2907
    %3136 = vmatpush1.bf16.msra.mxu0 %v2906
    %3137 = vmatprep.subr.bf16.mxu0 %v2911
    %3138 = vmatpush1.bf16.msra.mxu0 %v2910
    %3139 = vmatprep.subr.bf16.mxu0 %v2915
    %3140 = vmatpush1.bf16.msra.mxu0 %v2914
    %3141 = vmatprep.subr.bf16.mxu0 %v2919
    %3142 = vmatpush1.bf16.msra.mxu0 %v2918
    %3143 = vmatprep.subr.bf16.mxu0 %v2923
    %3144 = vmatpush1.bf16.msra.mxu0 %v2922
    %3145 = vmatprep.subr.bf16.mxu0 %v2927
    %3146 = vmatpush1.bf16.msra.mxu0 %v2926
    %3147 = vmatprep.subr.bf16.mxu0 %v2931
    %3148 = vmatpush1.bf16.msra.mxu0 %v2930
    %3149 = vmatprep.subr.bf16.mxu0 %v2935
    %3150 = vmatpush1.bf16.msra.mxu0 %v2934
    %3151 = vmatprep.subr.bf16.mxu0 %v2939
    %3152 = vmatpush1.bf16.msra.mxu0 %v2938
    %3153 = vmatprep.subr.bf16.mxu0 %v2943
    %3154 = vmatpush1.bf16.msra.mxu0 %v2942
    %3155 = vmatprep.subr.bf16.mxu0 %v2947
    %3156 = vmatpush1.bf16.msra.mxu0 %v2946
    %3157 = vmatprep.subr.bf16.mxu0 %v2951
    %3158 = vmatpush1.bf16.msra.mxu0 %v2950
    %3159 = vmatprep.subr.bf16.mxu0 %v2955
    %3160 = vmatpush1.bf16.msra.mxu0 %v2954
    %3161 = vmatprep.mubr.bf16.mxu0 %v2279
    %3162 = vmatmul.mubr.bf16.gmra.mrb[0].mxu0 %v2278
    %v3163 = vpop.f32.mrb[0].mxu0
    %v3164 = vadd.f32 %v3121, %v3163
    %v3165 = vpop.f32.mrb[0].mxu0
    %v3166 = vadd.f32 %v3123, %v3165
    %v3167 = vpop.f32.mrb[0].mxu0
    %v3168 = vadd.f32 %v3125, %v3167
    %v3169 = vpop.f32.mrb[0].mxu0
    %v3170 = vadd.f32 %v3127, %v3169
    %3171 = vdwg.mxu0
    %3172 = vmatprep.subr.bf16.mxu0 %v2833
    %3173 = vmatpush1.bf16.msra.mxu0 %v2832
    %3174 = vmatprep.subr.bf16.mxu0 %v2837
    %3175 = vmatpush1.bf16.msra.mxu0 %v2836
    %3176 = vmatprep.subr.bf16.mxu0 %v2841
    %3177 = vmatpush1.bf16.msra.mxu0 %v2840
    %3178 = vmatprep.subr.bf16.mxu0 %v2845
    %3179 = vmatpush1.bf16.msra.mxu0 %v2844
    %3180 = vmatprep.subr.bf16.mxu0 %v2849
    %3181 = vmatpush1.bf16.msra.mxu0 %v2848
    %3182 = vmatprep.subr.bf16.mxu0 %v2853
    %3183 = vmatpush1.bf16.msra.mxu0 %v2852
    %3184 = vmatprep.subr.bf16.mxu0 %v2857
    %3185 = vmatpush1.bf16.msra.mxu0 %v2856
    %3186 = vmatprep.subr.bf16.mxu0 %v2861
    %3187 = vmatpush1.bf16.msra.mxu0 %v2860
    %3188 = vmatprep.subr.bf16.mxu0 %v2865
    %3189 = vmatpush1.bf16.msra.mxu0 %v2864
    %3190 = vmatprep.subr.bf16.mxu0 %v2869
    %3191 = vmatpush1.bf16.msra.mxu0 %v2868
    %3192 = vmatprep.subr.bf16.mxu0 %v2873
    %3193 = vmatpush1.bf16.msra.mxu0 %v2872
    %3194 = vmatprep.subr.bf16.mxu0 %v2877
    %3195 = vmatpush1.bf16.msra.mxu0 %v2876
    %3196 = vmatprep.subr.bf16.mxu0 %v2881
    %3197 = vmatpush1.bf16.msra.mxu0 %v2880
    %3198 = vmatprep.subr.bf16.mxu0 %v2885
    %3199 = vmatpush1.bf16.msra.mxu0 %v2884
    %3200 = vmatprep.subr.bf16.mxu0 %v2889
    %3201 = vmatpush1.bf16.msra.mxu0 %v2888
    %3202 = vmatprep.subr.bf16.mxu0 %v2893
    %3203 = vmatpush1.bf16.msra.mxu0 %v2892
    %3204 = vmatprep.mubr.bf16.mxu0 %v2277
    %3205 = vmatmul.mubr.bf16.gmra.mrb[0].mxu0 %v2276
    %v3206 = vpop.f32.mrb[0].mxu0
    %v3207 = vadd.f32 %v2441, %v3206
    %v3208 = vpop.f32.mrb[0].mxu0
    %v3209 = vadd.f32 %v2445, %v3208
    %v3210 = vpop.f32.mrb[0].mxu0
    %v3211 = vadd.f32 %v2441, %v3210
    %v3212 = vpop.f32.mrb[0].mxu0
    %v3213 = vadd.f32 %v2445, %v3212
    %3214 = vdwg.mxu0
    %3215 = vmatprep.subr.bf16.mxu0 %v2897
    %3216 = vmatpush1.bf16.msra.mxu0 %v2896
    %3217 = vmatprep.subr.bf16.mxu0 %v2901
    %3218 = vmatpush1.bf16.msra.mxu0 %v2900
    %3219 = vmatprep.subr.bf16.mxu0 %v2905
    %3220 = vmatpush1.bf16.msra.mxu0 %v2904
    %3221 = vmatprep.subr.bf16.mxu0 %v2909
    %3222 = vmatpush1.bf16.msra.mxu0 %v2908
    %3223 = vmatprep.subr.bf16.mxu0 %v2913
    %3224 = vmatpush1.bf16.msra.mxu0 %v2912
    %3225 = vmatprep.subr.bf16.mxu0 %v2917
    %3226 = vmatpush1.bf16.msra.mxu0 %v2916
    %3227 = vmatprep.subr.bf16.mxu0 %v2921
    %3228 = vmatpush1.bf16.msra.mxu0 %v2920
    %3229 = vmatprep.subr.bf16.mxu0 %v2925
    %3230 = vmatpush1.bf16.msra.mxu0 %v2924
    %3231 = vmatprep.subr.bf16.mxu0 %v2929
    %3232 = vmatpush1.bf16.msra.mxu0 %v2928
    %3233 = vmatprep.subr.bf16.mxu0 %v2933
    %3234 = vmatpush1.bf16.msra.mxu0 %v2932
    %3235 = vmatprep.subr.bf16.mxu0 %v2937
    %3236 = vmatpush1.bf16.msra.mxu0 %v2936
    %3237 = vmatprep.subr.bf16.mxu0 %v2941
    %3238 = vmatpush1.bf16.msra.mxu0 %v2940
    %3239 = vmatprep.subr.bf16.mxu0 %v2945
    %3240 = vmatpush1.bf16.msra.mxu0 %v2944
    %3241 = vmatprep.subr.bf16.mxu0 %v2949
    %3242 = vmatpush1.bf16.msra.mxu0 %v2948
    %3243 = vmatprep.subr.bf16.mxu0 %v2953
    %3244 = vmatpush1.bf16.msra.mxu0 %v2952
    %3245 = vmatprep.subr.bf16.mxu0 %v2957
    %3246 = vmatpush1.bf16.msra.mxu0 %v2956
    %3247 = vmatprep.mubr.bf16.mxu0 %v2279
    %3248 = vmatmul.mubr.bf16.gmra.mrb[0].mxu0 %v2278
    %v3249 = vpop.f32.mrb[0].mxu0
    %v3250 = vadd.f32 %v3207, %v3249
    %v3251 = vpop.f32.mrb[0].mxu0
    %v3252 = vadd.f32 %v3209, %v3251
    %v3253 = vpop.f32.mrb[0].mxu0
    %v3254 = vadd.f32 %v3211, %v3253
    %v3255 = vpop.f32.mrb[0].mxu0
    %v3256 = vadd.f32 %v3213, %v3255
    %3257 = vdwg.mxu0
    %v3258 = vmax.f32 %v3164, 0.0
    %v3259 = vmax.f32 %v3166, 0.0
    %v3260 = vmax.f32 %v3250, 0.0
    %v3261 = vmax.f32 %v3252, 0.0
    %v3262 = vmax.f32 %v3168, 0.0
    %v3263 = vmax.f32 %v3170, 0.0
    %v3264 = vmax.f32 %v3254, 0.0
    %v3265 = vmax.f32 %v3256, 0.0
    %v3266 = vadd.f32 %v3258, %v3262
    %v3267 = vrot.slane %v3266, 4
    %v3268 = vadd.f32 %v3266, %v3267
    %v3269 = vrot.slane %v3268, 2
    %v3270 = vadd.f32 %v3268, %v3269
    %v3271 = vrot.slane %v3270, 1
    %v3272 = vadd.f32 %v3270, %v3271
    %v3273 = vadd.f32 %v3259, %v3263
    %v3274 = vrot.slane %v3273, 4
    %v3275 = vadd.f32 %v3273, %v3274
    %v3276 = vrot.slane %v3275, 2
    %v3277 = vadd.f32 %v3275, %v3276
    %v3278 = vrot.slane %v3277, 1
    %v3279 = vadd.f32 %v3277, %v3278
    %v3280 = vadd.f32 %v3260, %v3264
    %v3281 = vrot.slane %v3280, 4
    %v3282 = vadd.f32 %v3280, %v3281
    %v3283 = vrot.slane %v3282, 2
    %v3284 = vadd.f32 %v3282, %v3283
    %v3285 = vrot.slane %v3284, 1
    %v3286 = vadd.f32 %v3284, %v3285
    %v3287 = vadd.f32 %v3261, %v3265
    %v3288 = vrot.slane %v3287, 4
    %v3289 = vadd.f32 %v3287, %v3288
    %v3290 = vrot.slane %v3289, 2
    %v3291 = vadd.f32 %v3289, %v3290
    %v3292 = vrot.slane %v3291, 1
    %v3293 = vadd.f32 %v3291, %v3292
    %v3294 = vmul.f32 %v3272, %v2093
    %v3295 = vmul.f32 %v3279, %v2093
    %v3296 = vmul.f32 %v3286, %v2093
    %v3297 = vmul.f32 %v3293, %v2093
    %v3298 = vsub.f32 %v3258, %v3294
    %v3299 = vsub.f32 %v3259, %v3295
    %v3300 = vsub.f32 %v3260, %v3296
    %v3301 = vsub.f32 %v3261, %v3297
    %v3302 = vsub.f32 %v3262, %v3294
    %v3303 = vsub.f32 %v3263, %v3295
    %v3304 = vsub.f32 %v3264, %v3296
    %v3305 = vsub.f32 %v3265, %v3297
    %v3306 = vmul.f32 %v3298, %v3298
    %v3307 = vmul.f32 %v3299, %v3299
    %v3308 = vmul.f32 %v3300, %v3300
    %v3309 = vmul.f32 %v3301, %v3301
    %v3310 = vmul.f32 %v3302, %v3302
    %v3311 = vmul.f32 %v3303, %v3303
    %v3312 = vmul.f32 %v3304, %v3304
    %v3313 = vmul.f32 %v3305, %v3305
    %v3314 = vadd.f32 %v3306, %v3310
    %v3315 = vrot.slane %v3314, 4
    %v3316 = vadd.f32 %v3314, %v3315
    %v3317 = vrot.slane %v3316, 2
    %v3318 = vadd.f32 %v3316, %v3317
    %v3319 = vrot.slane %v3318, 1
    %v3320 = vadd.f32 %v3318, %v3319
    %v3321 = vadd.f32 %v3307, %v3311
    %v3322 = vrot.slane %v3321, 4
    %v3323 = vadd.f32 %v3321, %v3322
    %v3324 = vrot.slane %v3323, 2
    %v3325 = vadd.f32 %v3323, %v3324
    %v3326 = vrot.slane %v3325, 1
    %v3327 = vadd.f32 %v3325, %v3326
    %v3328 = vadd.f32 %v3308, %v3312
    %v3329 = vrot.slane %v3328, 4
    %v3330 = vadd.f32 %v3328, %v3329
    %v3331 = vrot.slane %v3330, 2
    %v3332 = vadd.f32 %v3330, %v3331
    %v3333 = vrot.slane %v3332, 1
    %v3334 = vadd.f32 %v3332, %v3333
    %v3335 = vadd.f32 %v3309, %v3313
    %v3336 = vrot.slane %v3335, 4
    %v3337 = vadd.f32 %v3335, %v3336
    %v3338 = vrot.slane %v3337, 2
    %v3339 = vadd.f32 %v3337, %v3338
    %v3340 = vrot.slane %v3339, 1
    %v3341 = vadd.f32 %v3339, %v3340
    %v3342 = vmul.f32 %v3320, %v2093
    %v3343 = vmul.f32 %v3327, %v2093
    %v3344 = vmul.f32 %v3334, %v2093
    %v3345 = vmul.f32 %v3341, %v2093
    %v3346 = vadd.f32 %v3342, 1e-05
    %v3347 = vadd.f32 %v3343, 1e-05
    %v3348 = vadd.f32 %v3344, 1e-05
    %v3349 = vadd.f32 %v3345, 1e-05
    %v3350 = vrsqrt.pop %v3346
    %v3351 = vrsqrt.pop %v3347
    %v3352 = vrsqrt.pop %v3348
    %v3353 = vrsqrt.pop %v3349
    %v3358 = vcombine.low %v3350, %v3351
    %v3359 = vcombine.low %v3352, %v3353
    %v3360 = vrot.slane %v3358, 7
    %v3361 = vrot.slane %v3359, 7
    %v3364 = vmul.f32 %v2274, %v3360
    %v3365 = vmul.f32 %v2275, %v3361
    %v3368 = vlaneseq
    %v3369 = vshrl.u32 %v3368, 7
    %v3370 = vsub.s32 1, %v3369
    %v3371 = vrot.slane %v3364, %v3370
    %v3372 = vlaneseq
    %v3373 = vshrl.u32 %v3372, 7
    %v3374 = vsub.s32 5, %v3373
    %v3375 = vrot.slane %v3364, %v3374
    %v3376 = vlaneseq
    %v3377 = vshrl.u32 %v3376, 7
    %v3378 = vsub.s32 1, %v3377
    %v3379 = vrot.slane %v3365, %v3378
    %v3380 = vlaneseq
    %v3381 = vshrl.u32 %v3380, 7
    %v3382 = vsub.s32 5, %v3381
    %v3383 = vrot.slane %v3365, %v3382
    %v3388 = vmul.f32 %v3294, %v3371
    %v3389 = vmul.f32 %v3295, %v3375
    %v3390 = vmul.f32 %v3296, %v3379
    %v3391 = vmul.f32 %v3297, %v3383
    %v3396 = vcombine.low %v3388, %v3389
    %v3397 = vcombine.low %v3390, %v3391
    %v3398 = vrot.slane %v3396, 6
    %v3399 = vrot.slane %v3397, 6
    %v3402 = vsub.f32 %v2274, %v3398
    %v3403 = vsub.f32 %v2275, %v3399
    %v3404 = vlaneseq
    %v3405 = vshrl.u32 %v3404, 7
    %v3406 = vsub.s32 1, %v3405
    %v3407 = vrot.slane %v3371, %v3406
    %v3408 = vlaneseq
    %v3409 = vshrl.u32 %v3408, 7
    %v3410 = vsub.s32 1, %v3409
    %v3411 = vrot.slane %v3375, %v3410
    %v3412 = vlaneseq
    %v3413 = vshrl.u32 %v3412, 7
    %v3414 = vsub.s32 1, %v3413
    %v3415 = vrot.slane %v3379, %v3414
    %v3416 = vlaneseq
    %v3417 = vshrl.u32 %v3416, 7
    %v3418 = vsub.s32 1, %v3417
    %v3419 = vrot.slane %v3383, %v3418
    %v3420 = vmul.f32 %v3258, %v3407
    %v3421 = vmul.f32 %v3259, %v3411
    %v3422 = vmul.f32 %v3260, %v3415
    %v3423 = vmul.f32 %v3261, %v3419
    %v3424 = vmul.f32 %v3262, %v3407
    %v3425 = vmul.f32 %v3263, %v3411
    %v3426 = vmul.f32 %v3264, %v3415
    %v3427 = vmul.f32 %v3265, %v3419
    %v3430 = vlaneseq
    %v3431 = vshrl.u32 %v3430, 7
    %v3432 = vsub.s32 2, %v3431
    %v3433 = vrot.slane %v3402, %v3432
    %v3434 = vlaneseq
    %v3435 = vshrl.u32 %v3434, 7
    %v3436 = vsub.s32 6, %v3435
    %v3437 = vrot.slane %v3402, %v3436
    %v3438 = vlaneseq
    %v3439 = vshrl.u32 %v3438, 7
    %v3440 = vsub.s32 2, %v3439
    %v3441 = vrot.slane %v3403, %v3440
    %v3442 = vlaneseq
    %v3443 = vshrl.u32 %v3442, 7
    %v3444 = vsub.s32 6, %v3443
    %v3445 = vrot.slane %v3403, %v3444
    %v3450 = vlaneseq
    %v3451 = vshrl.u32 %v3450, 7
    %v3452 = vsub.s32 2, %v3451
    %v3453 = vrot.slane %v3433, %v3452
    %v3454 = vlaneseq
    %v3455 = vshrl.u32 %v3454, 7
    %v3456 = vsub.s32 2, %v3455
    %v3457 = vrot.slane %v3437, %v3456
    %v3458 = vlaneseq
    %v3459 = vshrl.u32 %v3458, 7
    %v3460 = vsub.s32 2, %v3459
    %v3461 = vrot.slane %v3441, %v3460
    %v3462 = vlaneseq
    %v3463 = vshrl.u32 %v3462, 7
    %v3464 = vsub.s32 2, %v3463
    %v3465 = vrot.slane %v3445, %v3464
    %v3466 = vadd.f32 %v3420, %v3453
    %v3467 = vadd.f32 %v3421, %v3457
    %v3468 = vadd.f32 %v3422, %v3461
    %v3469 = vadd.f32 %v3423, %v3465
    %v3470 = vadd.f32 %v3424, %v3453
    %v3471 = vadd.f32 %v3425, %v3457
    %v3472 = vadd.f32 %v3426, %v3461
    %v3473 = vadd.f32 %v3427, %v3465
    %v3474 = vld [vmem:[%s6] sm:$0x77]
    %v3475 = vpack.c.bf16 %v3470, %v3466
    %v3476 = vpack.c.bf16 %v3471, %v3467
    %v3477 = vpack.c.bf16 %v3472, %v3468
    %v3478 = vpack.c.bf16 %v3473, %v3469
    %v3479 = vld [vmem:[#allocation7] sm:$0xff]
    %v3480 = vld [vmem:[#allocation7 + $0x8] sm:$0xff]
    %v3481 = vld [vmem:[#allocation7 + $0x10] sm:$0xff]
    %v3482 = vld [vmem:[#allocation7 + $0x18] sm:$0xff]
    %v3483 = vld [vmem:[#allocation7 + $0x20] sm:$0xff]
    %v3484 = vld [vmem:[#allocation7 + $0x28] sm:$0xff]
    %v3485 = vld [vmem:[#allocation7 + $0x30] sm:$0xff]
    %v3486 = vld [vmem:[#allocation7 + $0x38] sm:$0xff]
    %v3487 = vld [vmem:[#allocation7 + $0x40] sm:$0xff]
    %v3488 = vld [vmem:[#allocation7 + $0x48] sm:$0xff]
    %v3489 = vld [vmem:[#allocation7 + $0x50] sm:$0xff]
    %v3490 = vld [vmem:[#allocation7 + $0x58] sm:$0xff]
    %v3491 = vld [vmem:[#allocation7 + $0x60] sm:$0xff]
    %v3492 = vld [vmem:[#allocation7 + $0x68] sm:$0xff]
    %v3493 = vld [vmem:[#allocation7 + $0x70] sm:$0xff]
    %v3494 = vld [vmem:[#allocation7 + $0x78] sm:$0xff]
    %v3495 = vld [vmem:[#allocation7 + $0x80] sm:$0xff]
    %v3496 = vld [vmem:[#allocation7 + $0x88] sm:$0xff]
    %v3497 = vld [vmem:[#allocation7 + $0x90] sm:$0xff]
    %v3498 = vld [vmem:[#allocation7 + $0x98] sm:$0xff]
    %v3499 = vld [vmem:[#allocation7 + $0xa0] sm:$0xff]
    %v3500 = vld [vmem:[#allocation7 + $0xa8] sm:$0xff]
    %v3501 = vld [vmem:[#allocation7 + $0xb0] sm:$0xff]
    %v3502 = vld [vmem:[#allocation7 + $0xb8] sm:$0xff]
    %v3503 = vld [vmem:[#allocation7 + $0xc0] sm:$0xff]
    %v3504 = vld [vmem:[#allocation7 + $0xc8] sm:$0xff]
    %v3505 = vld [vmem:[#allocation7 + $0xd0] sm:$0xff]
    %v3506 = vld [vmem:[#allocation7 + $0xd8] sm:$0xff]
    %v3507 = vld [vmem:[#allocation7 + $0xe0] sm:$0xff]
    %v3508 = vld [vmem:[#allocation7 + $0xe8] sm:$0xff]
    %v3509 = vld [vmem:[#allocation7 + $0xf0] sm:$0xff]
    %v3510 = vld [vmem:[#allocation7 + $0xf8] sm:$0xff]
    %v3511 = vld [vmem:[#allocation7 + $0x100] sm:$0xff]
    %v3512 = vld [vmem:[#allocation7 + $0x108] sm:$0xff]
    %v3513 = vld [vmem:[#allocation7 + $0x110] sm:$0xff]
    %v3514 = vld [vmem:[#allocation7 + $0x118] sm:$0xff]
    %v3515 = vld [vmem:[#allocation7 + $0x120] sm:$0xff]
    %v3516 = vld [vmem:[#allocation7 + $0x128] sm:$0xff]
    %v3517 = vld [vmem:[#allocation7 + $0x130] sm:$0xff]
    %v3518 = vld [vmem:[#allocation7 + $0x138] sm:$0xff]
    %v3519 = vld [vmem:[#allocation7 + $0x140] sm:$0xff]
    %v3520 = vld [vmem:[#allocation7 + $0x148] sm:$0xff]
    %v3521 = vld [vmem:[#allocation7 + $0x150] sm:$0xff]
    %v3522 = vld [vmem:[#allocation7 + $0x158] sm:$0xff]
    %v3523 = vld [vmem:[#allocation7 + $0x160] sm:$0xff]
    %v3524 = vld [vmem:[#allocation7 + $0x168] sm:$0xff]
    %v3525 = vld [vmem:[#allocation7 + $0x170] sm:$0xff]
    %v3526 = vld [vmem:[#allocation7 + $0x178] sm:$0xff]
    %v3527 = vld [vmem:[#allocation7 + $0x180] sm:$0xff]
    %v3528 = vld [vmem:[#allocation7 + $0x188] sm:$0xff]
    %v3529 = vld [vmem:[#allocation7 + $0x190] sm:$0xff]
    %v3530 = vld [vmem:[#allocation7 + $0x198] sm:$0xff]
    %v3531 = vld [vmem:[#allocation7 + $0x1a0] sm:$0xff]
    %v3532 = vld [vmem:[#allocation7 + $0x1a8] sm:$0xff]
    %v3533 = vld [vmem:[#allocation7 + $0x1b0] sm:$0xff]
    %v3534 = vld [vmem:[#allocation7 + $0x1b8] sm:$0xff]
    %v3535 = vld [vmem:[#allocation7 + $0x1c0] sm:$0xff]
    %v3536 = vld [vmem:[#allocation7 + $0x1c8] sm:$0xff]
    %v3537 = vld [vmem:[#allocation7 + $0x1d0] sm:$0xff]
    %v3538 = vld [vmem:[#allocation7 + $0x1d8] sm:$0xff]
    %v3539 = vld [vmem:[#allocation7 + $0x1e0] sm:$0xff]
    %v3540 = vld [vmem:[#allocation7 + $0x1e8] sm:$0xff]
    %v3541 = vld [vmem:[#allocation7 + $0x1f0] sm:$0xff]
    %v3542 = vld [vmem:[#allocation7 + $0x1f8] sm:$0xff]
    %v3544 = vlaneseq
    %v3545 = vshrl.u32 %v3544, 7
    %v3546 = vsub.s32 0, %v3545
    %v3547 = vrot.slane %v3474, %v3546
    %v3548 = vlaneseq
    %v3549 = vshrl.u32 %v3548, 7
    %v3550 = vsub.s32 4, %v3549
    %v3551 = vrot.slane %v3474, %v3550
    %v3554 = vlaneseq
    %v3555 = vshrl.u32 %v3554, 7
    %v3556 = vsub.s32 0, %v3555
    %v3557 = vrot.slane %v3547, %v3556
    %v3558 = vlaneseq
    %v3559 = vshrl.u32 %v3558, 7
    %v3560 = vsub.s32 0, %v3559
    %v3561 = vrot.slane %v3551, %v3560
    %v3626 = vunpack.c.l.b16 %v3479
    %v3627 = vunpack.c.h.b16 %v3479
    %v3628 = vunpack.c.l.b16 %v3480
    %v3629 = vunpack.c.h.b16 %v3480
    %v3630 = vunpack.c.l.b16 %v3481
    %v3631 = vunpack.c.h.b16 %v3481
    %v3632 = vunpack.c.l.b16 %v3482
    %v3633 = vunpack.c.h.b16 %v3482
    %v3634 = vunpack.c.l.b16 %v3483
    %v3635 = vunpack.c.h.b16 %v3483
    %v3636 = vunpack.c.l.b16 %v3484
    %v3637 = vunpack.c.h.b16 %v3484
    %v3638 = vunpack.c.l.b16 %v3485
    %v3639 = vunpack.c.h.b16 %v3485
    %v3640 = vunpack.c.l.b16 %v3486
    %v3641 = vunpack.c.h.b16 %v3486
    %v3642 = vunpack.c.l.b16 %v3487
    %v3643 = vunpack.c.h.b16 %v3487
    %v3644 = vunpack.c.l.b16 %v3488
    %v3645 = vunpack.c.h.b16 %v3488
    %v3646 = vunpack.c.l.b16 %v3489
    %v3647 = vunpack.c.h.b16 %v3489
    %v3648 = vunpack.c.l.b16 %v3490
    %v3649 = vunpack.c.h.b16 %v3490
    %v3650 = vunpack.c.l.b16 %v3491
    %v3651 = vunpack.c.h.b16 %v3491
    %v3652 = vunpack.c.l.b16 %v3492
    %v3653 = vunpack.c.h.b16 %v3492
    %v3654 = vunpack.c.l.b16 %v3493
    %v3655 = vunpack.c.h.b16 %v3493
    %v3656 = vunpack.c.l.b16 %v3494
    %v3657 = vunpack.c.h.b16 %v3494
    %v3658 = vunpack.c.l.b16 %v3495
    %v3659 = vunpack.c.h.b16 %v3495
    %v3660 = vunpack.c.l.b16 %v3496
    %v3661 = vunpack.c.h.b16 %v3496
    %v3662 = vunpack.c.l.b16 %v3497
    %v3663 = vunpack.c.h.b16 %v3497
    %v3664 = vunpack.c.l.b16 %v3498
    %v3665 = vunpack.c.h.b16 %v3498
    %v3666 = vunpack.c.l.b16 %v3499
    %v3667 = vunpack.c.h.b16 %v3499
    %v3668 = vunpack.c.l.b16 %v3500
    %v3669 = vunpack.c.h.b16 %v3500
    %v3670 = vunpack.c.l.b16 %v3501
    %v3671 = vunpack.c.h.b16 %v3501
    %v3672 = vunpack.c.l.b16 %v3502
    %v3673 = vunpack.c.h.b16 %v3502
    %v3674 = vunpack.c.l.b16 %v3503
    %v3675 = vunpack.c.h.b16 %v3503
    %v3676 = vunpack.c.l.b16 %v3504
    %v3677 = vunpack.c.h.b16 %v3504
    %v3678 = vunpack.c.l.b16 %v3505
    %v3679 = vunpack.c.h.b16 %v3505
    %v3680 = vunpack.c.l.b16 %v3506
    %v3681 = vunpack.c.h.b16 %v3506
    %v3682 = vunpack.c.l.b16 %v3507
    %v3683 = vunpack.c.h.b16 %v3507
    %v3684 = vunpack.c.l.b16 %v3508
    %v3685 = vunpack.c.h.b16 %v3508
    %v3686 = vunpack.c.l.b16 %v3509
    %v3687 = vunpack.c.h.b16 %v3509
    %v3688 = vunpack.c.l.b16 %v3510
    %v3689 = vunpack.c.h.b16 %v3510
    %v3690 = vunpack.c.l.b16 %v3511
    %v3691 = vunpack.c.h.b16 %v3511
    %v3692 = vunpack.c.l.b16 %v3512
    %v3693 = vunpack.c.h.b16 %v3512
    %v3694 = vunpack.c.l.b16 %v3513
    %v3695 = vunpack.c.h.b16 %v3513
    %v3696 = vunpack.c.l.b16 %v3514
    %v3697 = vunpack.c.h.b16 %v3514
    %v3698 = vunpack.c.l.b16 %v3515
    %v3699 = vunpack.c.h.b16 %v3515
    %v3700 = vunpack.c.l.b16 %v3516
    %v3701 = vunpack.c.h.b16 %v3516
    %v3702 = vunpack.c.l.b16 %v3517
    %v3703 = vunpack.c.h.b16 %v3517
    %v3704 = vunpack.c.l.b16 %v3518
    %v3705 = vunpack.c.h.b16 %v3518
    %v3706 = vunpack.c.l.b16 %v3519
    %v3707 = vunpack.c.h.b16 %v3519
    %v3708 = vunpack.c.l.b16 %v3520
    %v3709 = vunpack.c.h.b16 %v3520
    %v3710 = vunpack.c.l.b16 %v3521
    %v3711 = vunpack.c.h.b16 %v3521
    %v3712 = vunpack.c.l.b16 %v3522
    %v3713 = vunpack.c.h.b16 %v3522
    %v3714 = vunpack.c.l.b16 %v3523
    %v3715 = vunpack.c.h.b16 %v3523
    %v3716 = vunpack.c.l.b16 %v3524
    %v3717 = vunpack.c.h.b16 %v3524
    %v3718 = vunpack.c.l.b16 %v3525
    %v3719 = vunpack.c.h.b16 %v3525
    %v3720 = vunpack.c.l.b16 %v3526
    %v3721 = vunpack.c.h.b16 %v3526
    %v3722 = vunpack.c.l.b16 %v3527
    %v3723 = vunpack.c.h.b16 %v3527
    %v3724 = vunpack.c.l.b16 %v3528
    %v3725 = vunpack.c.h.b16 %v3528
    %v3726 = vunpack.c.l.b16 %v3529
    %v3727 = vunpack.c.h.b16 %v3529
    %v3728 = vunpack.c.l.b16 %v3530
    %v3729 = vunpack.c.h.b16 %v3530
    %v3730 = vunpack.c.l.b16 %v3531
    %v3731 = vunpack.c.h.b16 %v3531
    %v3732 = vunpack.c.l.b16 %v3532
    %v3733 = vunpack.c.h.b16 %v3532
    %v3734 = vunpack.c.l.b16 %v3533
    %v3735 = vunpack.c.h.b16 %v3533
    %v3736 = vunpack.c.l.b16 %v3534
    %v3737 = vunpack.c.h.b16 %v3534
    %v3738 = vunpack.c.l.b16 %v3535
    %v3739 = vunpack.c.h.b16 %v3535
    %v3740 = vunpack.c.l.b16 %v3536
    %v3741 = vunpack.c.h.b16 %v3536
    %v3742 = vunpack.c.l.b16 %v3537
    %v3743 = vunpack.c.h.b16 %v3537
    %v3744 = vunpack.c.l.b16 %v3538
    %v3745 = vunpack.c.h.b16 %v3538
    %v3746 = vunpack.c.l.b16 %v3539
    %v3747 = vunpack.c.h.b16 %v3539
    %v3748 = vunpack.c.l.b16 %v3540
    %v3749 = vunpack.c.h.b16 %v3540
    %v3750 = vunpack.c.l.b16 %v3541
    %v3751 = vunpack.c.h.b16 %v3541
    %v3752 = vunpack.c.l.b16 %v3542
    %v3753 = vunpack.c.h.b16 %v3542
    %v3754 = vpack.c.b16 %v3628, %v3626
    %v3755 = vpack.c.b16 %v3629, %v3627
    %v3756 = vpack.c.b16 %v3632, %v3630
    %v3757 = vpack.c.b16 %v3633, %v3631
    %v3758 = vpack.c.b16 %v3636, %v3634
    %v3759 = vpack.c.b16 %v3637, %v3635
    %v3760 = vpack.c.b16 %v3640, %v3638
    %v3761 = vpack.c.b16 %v3641, %v3639
    %v3762 = vpack.c.b16 %v3644, %v3642
    %v3763 = vpack.c.b16 %v3645, %v3643
    %v3764 = vpack.c.b16 %v3648, %v3646
    %v3765 = vpack.c.b16 %v3649, %v3647
    %v3766 = vpack.c.b16 %v3652, %v3650
    %v3767 = vpack.c.b16 %v3653, %v3651
    %v3768 = vpack.c.b16 %v3656, %v3654
    %v3769 = vpack.c.b16 %v3657, %v3655
    %v3770 = vpack.c.b16 %v3660, %v3658
    %v3771 = vpack.c.b16 %v3661, %v3659
    %v3772 = vpack.c.b16 %v3664, %v3662
    %v3773 = vpack.c.b16 %v3665, %v3663
    %v3774 = vpack.c.b16 %v3668, %v3666
    %v3775 = vpack.c.b16 %v3669, %v3667
    %v3776 = vpack.c.b16 %v3672, %v3670
    %v3777 = vpack.c.b16 %v3673, %v3671
    %v3778 = vpack.c.b16 %v3676, %v3674
    %v3779 = vpack.c.b16 %v3677, %v3675
    %v3780 = vpack.c.b16 %v3680, %v3678
    %v3781 = vpack.c.b16 %v3681, %v3679
    %v3782 = vpack.c.b16 %v3684, %v3682
    %v3783 = vpack.c.b16 %v3685, %v3683
    %v3784 = vpack.c.b16 %v3688, %v3686
    %v3785 = vpack.c.b16 %v3689, %v3687
    %v3786 = vpack.c.b16 %v3692, %v3690
    %v3787 = vpack.c.b16 %v3693, %v3691
    %v3788 = vpack.c.b16 %v3696, %v3694
    %v3789 = vpack.c.b16 %v3697, %v3695
    %v3790 = vpack.c.b16 %v3700, %v3698
    %v3791 = vpack.c.b16 %v3701, %v3699
    %v3792 = vpack.c.b16 %v3704, %v3702
    %v3793 = vpack.c.b16 %v3705, %v3703
    %v3794 = vpack.c.b16 %v3708, %v3706
    %v3795 = vpack.c.b16 %v3709, %v3707
    %v3796 = vpack.c.b16 %v3712, %v3710
    %v3797 = vpack.c.b16 %v3713, %v3711
    %v3798 = vpack.c.b16 %v3716, %v3714
    %v3799 = vpack.c.b16 %v3717, %v3715
    %v3800 = vpack.c.b16 %v3720, %v3718
    %v3801 = vpack.c.b16 %v3721, %v3719
    %v3802 = vpack.c.b16 %v3724, %v3722
    %v3803 = vpack.c.b16 %v3725, %v3723
    %v3804 = vpack.c.b16 %v3728, %v3726
    %v3805 = vpack.c.b16 %v3729, %v3727
    %v3806 = vpack.c.b16 %v3732, %v3730
    %v3807 = vpack.c.b16 %v3733, %v3731
    %v3808 = vpack.c.b16 %v3736, %v3734
    %v3809 = vpack.c.b16 %v3737, %v3735
    %v3810 = vpack.c.b16 %v3740, %v3738
    %v3811 = vpack.c.b16 %v3741, %v3739
    %v3812 = vpack.c.b16 %v3744, %v3742
    %v3813 = vpack.c.b16 %v3745, %v3743
    %v3814 = vpack.c.b16 %v3748, %v3746
    %v3815 = vpack.c.b16 %v3749, %v3747
    %v3816 = vpack.c.b16 %v3752, %v3750
    %v3817 = vpack.c.b16 %v3753, %v3751
    %3882 = vmatprep.subr.bf16.mxu0 %v3755
    %3883 = vmatpush1.bf16.msra.mxu0 %v3754
    %3884 = vmatprep.subr.bf16.mxu0 %v3757
    %3885 = vmatpush1.bf16.msra.mxu0 %v3756
    %3886 = vmatprep.subr.bf16.mxu0 %v3759
    %3887 = vmatpush1.bf16.msra.mxu0 %v3758
    %3888 = vmatprep.subr.bf16.mxu0 %v3761
    %3889 = vmatpush1.bf16.msra.mxu0 %v3760
    %3890 = vmatprep.subr.bf16.mxu0 %v3763
    %3891 = vmatpush1.bf16.msra.mxu0 %v3762
    %3892 = vmatprep.subr.bf16.mxu0 %v3765
    %3893 = vmatpush1.bf16.msra.mxu0 %v3764
    %3894 = vmatprep.subr.bf16.mxu0 %v3767
    %3895 = vmatpush1.bf16.msra.mxu0 %v3766
    %3896 = vmatprep.subr.bf16.mxu0 %v3769
    %3897 = vmatpush1.bf16.msra.mxu0 %v3768
    %3898 = vmatprep.subr.bf16.mxu0 %v3771
    %3899 = vmatpush1.bf16.msra.mxu0 %v3770
    %3900 = vmatprep.subr.bf16.mxu0 %v3773
    %3901 = vmatpush1.bf16.msra.mxu0 %v3772
    %3902 = vmatprep.subr.bf16.mxu0 %v3775
    %3903 = vmatpush1.bf16.msra.mxu0 %v3774
    %3904 = vmatprep.subr.bf16.mxu0 %v3777
    %3905 = vmatpush1.bf16.msra.mxu0 %v3776
    %3906 = vmatprep.subr.bf16.mxu0 %v3779
    %3907 = vmatpush1.bf16.msra.mxu0 %v3778
    %3908 = vmatprep.subr.bf16.mxu0 %v3781
    %3909 = vmatpush1.bf16.msra.mxu0 %v3780
    %3910 = vmatprep.subr.bf16.mxu0 %v3783
    %3911 = vmatpush1.bf16.msra.mxu0 %v3782
    %3912 = vmatprep.subr.bf16.mxu0 %v3785
    %3913 = vmatpush1.bf16.msra.mxu0 %v3784
    %3914 = vmatprep.mubr.bf16.mxu0 %v3476
    %3915 = vmatmul.mubr.bf16.gmra.mrb[0].mxu0 %v3475
    %v3916 = vpop.f32.mrb[0].mxu0
    %v3917 = vadd.f32 %v3557, %v3916
    %v3918 = vpop.f32.mrb[0].mxu0
    %v3919 = vadd.f32 %v3561, %v3918
    %v3920 = vpop.f32.mrb[0].mxu0
    %v3921 = vadd.f32 %v3557, %v3920
    %v3922 = vpop.f32.mrb[0].mxu0
    %v3923 = vadd.f32 %v3561, %v3922
    %3924 = vdwg.mxu0
    %3925 = vmatprep.subr.bf16.mxu0 %v3787
    %3926 = vmatpush1.bf16.msra.mxu0 %v3786
    %3927 = vmatprep.subr.bf16.mxu0 %v3789
    %3928 = vmatpush1.bf16.msra.mxu0 %v3788
    %3929 = vmatprep.subr.bf16.mxu0 %v3791
    %3930 = vmatpush1.bf16.msra.mxu0 %v3790
    %3931 = vmatprep.subr.bf16.mxu0 %v3793
    %3932 = vmatpush1.bf16.msra.mxu0 %v3792
    %3933 = vmatprep.subr.bf16.mxu0 %v3795
    %3934 = vmatpush1.bf16.msra.mxu0 %v3794
    %3935 = vmatprep.subr.bf16.mxu0 %v3797
    %3936 = vmatpush1.bf16.msra.mxu0 %v3796
    %3937 = vmatprep.subr.bf16.mxu0 %v3799
    %3938 = vmatpush1.bf16.msra.mxu0 %v3798
    %3939 = vmatprep.subr.bf16.mxu0 %v3801
    %3940 = vmatpush1.bf16.msra.mxu0 %v3800
    %3941 = vmatprep.subr.bf16.mxu0 %v3803
    %3942 = vmatpush1.bf16.msra.mxu0 %v3802
    %3943 = vmatprep.subr.bf16.mxu0 %v3805
    %3944 = vmatpush1.bf16.msra.mxu0 %v3804
    %3945 = vmatprep.subr.bf16.mxu0 %v3807
    %3946 = vmatpush1.bf16.msra.mxu0 %v3806
    %3947 = vmatprep.subr.bf16.mxu0 %v3809
    %3948 = vmatpush1.bf16.msra.mxu0 %v3808
    %3949 = vmatprep.subr.bf16.mxu0 %v3811
    %3950 = vmatpush1.bf16.msra.mxu0 %v3810
    %3951 = vmatprep.subr.bf16.mxu0 %v3813
    %3952 = vmatpush1.bf16.msra.mxu0 %v3812
    %3953 = vmatprep.subr.bf16.mxu0 %v3815
    %3954 = vmatpush1.bf16.msra.mxu0 %v3814
    %3955 = vmatprep.subr.bf16.mxu0 %v3817
    %3956 = vmatpush1.bf16.msra.mxu0 %v3816
    %3957 = vmatprep.mubr.bf16.mxu0 %v3478
    %3958 = vmatmul.mubr.bf16.gmra.mrb[0].mxu0 %v3477
    %v3959 = vpop.f32.mrb[0].mxu0
    %v3960 = vadd.f32 %v3917, %v3959
    %v3961 = vpop.f32.mrb[0].mxu0
    %v3962 = vadd.f32 %v3919, %v3961
    %v3963 = vpop.f32.mrb[0].mxu0
    %v3964 = vadd.f32 %v3921, %v3963
    %v3965 = vpop.f32.mrb[0].mxu0
    %v3966 = vadd.f32 %v3923, %v3965
    %3967 = vdwg.mxu0
    %v3968 = vmax.f32 %v3960, 0.0
    %v3969 = vmax.f32 %v3962, 0.0
    %v3970 = vmax.f32 %v3964, 0.0
    %v3971 = vmax.f32 %v3966, 0.0
    %v3972 = vadd.f32 %v3968, %v3970
    %v3973 = vrot.slane %v3972, 4
    %v3974 = vadd.f32 %v3972, %v3973
    %v3975 = vrot.slane %v3974, 2
    %v3976 = vadd.f32 %v3974, %v3975
    %v3977 = vrot.slane %v3976, 1
    %v3978 = vadd.f32 %v3976, %v3977
    %v3979 = vadd.f32 %v3969, %v3971
    %v3980 = vrot.slane %v3979, 4
    %v3981 = vadd.f32 %v3979, %v3980
    %v3982 = vrot.slane %v3981, 2
    %v3983 = vadd.f32 %v3981, %v3982
    %v3984 = vrot.slane %v3983, 1
    %v3985 = vadd.f32 %v3983, %v3984
    %v3986 = vmul.f32 %v3978, %v2093
    %v3987 = vmul.f32 %v3985, %v2093
    %v3988 = vsub.f32 %v3968, %v3986
    %v3989 = vsub.f32 %v3969, %v3987
    %v3990 = vsub.f32 %v3970, %v3986
    %v3991 = vsub.f32 %v3971, %v3987
    %v3992 = vmul.f32 %v3988, %v3988
    %v3993 = vmul.f32 %v3989, %v3989
    %v3994 = vmul.f32 %v3990, %v3990
    %v3995 = vmul.f32 %v3991, %v3991
    %v3996 = vadd.f32 %v3992, %v3994
    %v3997 = vrot.slane %v3996, 4
    %v3998 = vadd.f32 %v3996, %v3997
    %v3999 = vrot.slane %v3998, 2
    %v4000 = vadd.f32 %v3998, %v3999
    %v4001 = vrot.slane %v4000, 1
    %v4002 = vadd.f32 %v4000, %v4001
    %v4003 = vadd.f32 %v3993, %v3995
    %v4004 = vrot.slane %v4003, 4
    %v4005 = vadd.f32 %v4003, %v4004
    %v4006 = vrot.slane %v4005, 2
    %v4007 = vadd.f32 %v4005, %v4006
    %v4008 = vrot.slane %v4007, 1
    %v4009 = vadd.f32 %v4007, %v4008
    %v4010 = vmul.f32 %v4002, %v2093
    %v4011 = vmul.f32 %v4009, %v2093
    %v4012 = vadd.f32 %v4010, 1e-05
    %v4013 = vadd.f32 %v4011, 1e-05
    %v4014 = vrsqrt.pop %v4012
    %v4015 = vrsqrt.pop %v4013
    %v4018 = vcombine.low %v4014, %v4015
    %v4019 = vrot.slane %v4018, 7
    %v4021 = vmul.f32 %v3474, %v4019
    %v4023 = vlaneseq
    %v4024 = vshrl.u32 %v4023, 7
    %v4025 = vsub.s32 1, %v4024
    %v4026 = vrot.slane %v4021, %v4025
    %v4027 = vlaneseq
    %v4028 = vshrl.u32 %v4027, 7
    %v4029 = vsub.s32 5, %v4028
    %v4030 = vrot.slane %v4021, %v4029
    %v4033 = vmul.f32 %v3986, %v4026
    %v4034 = vmul.f32 %v3987, %v4030
    %v4037 = vcombine.low %v4033, %v4034
    %v4038 = vrot.slane %v4037, 6
    %v4040 = vsub.f32 %v3474, %v4038
    %v4041 = vlaneseq
    %v4042 = vshrl.u32 %v4041, 7
    %v4043 = vsub.s32 1, %v4042
    %v4044 = vrot.slane %v4026, %v4043
    %v4045 = vlaneseq
    %v4046 = vshrl.u32 %v4045, 7
    %v4047 = vsub.s32 1, %v4046
    %v4048 = vrot.slane %v4030, %v4047
    %v4049 = vmul.f32 %v3968, %v4044
    %v4050 = vmul.f32 %v3969, %v4048
    %v4051 = vmul.f32 %v3970, %v4044
    %v4052 = vmul.f32 %v3971, %v4048
    %v4054 = vlaneseq
    %v4055 = vshrl.u32 %v4054, 7
    %v4056 = vsub.s32 2, %v4055
    %v4057 = vrot.slane %v4040, %v4056
    %v4058 = vlaneseq
    %v4059 = vshrl.u32 %v4058, 7
    %v4060 = vsub.s32 6, %v4059
    %v4061 = vrot.slane %v4040, %v4060
    %v4064 = vlaneseq
    %v4065 = vshrl.u32 %v4064, 7
    %v4066 = vsub.s32 2, %v4065
    %v4067 = vrot.slane %v4057, %v4066
    %v4068 = vlaneseq
    %v4069 = vshrl.u32 %v4068, 7
    %v4070 = vsub.s32 2, %v4069
    %v4071 = vrot.slane %v4061, %v4070
    %v4072 = vadd.f32 %v4049, %v4067
    %v4073 = vadd.f32 %v4050, %v4071
    %v4074 = vadd.f32 %v4051, %v4067
    %v4075 = vadd.f32 %v4052, %v4071
    %v4076 = vld [vmem:[%s8] sm:$0x7]
    %v4077 = vpack.c.bf16 %v4074, %v4072
    %v4078 = vpack.c.bf16 %v4075, %v4073
    %v4079 = vld [vmem:[#allocation9] sm:$0xf]
    %v4080 = vld [vmem:[#allocation9 + $0x4] sm:$0xf]
    %v4081 = vld [vmem:[#allocation9 + $0x8] sm:$0xf]
    %v4082 = vld [vmem:[#allocation9 + $0xc] sm:$0xf]
    %v4083 = vld [vmem:[#allocation9 + $0x10] sm:$0xf]
    %v4084 = vld [vmem:[#allocation9 + $0x14] sm:$0xf]
    %v4085 = vld [vmem:[#allocation9 + $0x18] sm:$0xf]
    %v4086 = vld [vmem:[#allocation9 + $0x1c] sm:$0xf]
    %v4087 = vld [vmem:[#allocation9 + $0x20] sm:$0xf]
    %v4088 = vld [vmem:[#allocation9 + $0x24] sm:$0xf]
    %v4089 = vld [vmem:[#allocation9 + $0x28] sm:$0xf]
    %v4090 = vld [vmem:[#allocation9 + $0x2c] sm:$0xf]
    %v4091 = vld [vmem:[#allocation9 + $0x30] sm:$0xf]
    %v4092 = vld [vmem:[#allocation9 + $0x34] sm:$0xf]
    %v4093 = vld [vmem:[#allocation9 + $0x38] sm:$0xf]
    %v4094 = vld [vmem:[#allocation9 + $0x3c] sm:$0xf]
    %v4095 = vld [vmem:[#allocation9 + $0x40] sm:$0xf]
    %v4096 = vld [vmem:[#allocation9 + $0x44] sm:$0xf]
    %v4097 = vld [vmem:[#allocation9 + $0x48] sm:$0xf]
    %v4098 = vld [vmem:[#allocation9 + $0x4c] sm:$0xf]
    %v4099 = vld [vmem:[#allocation9 + $0x50] sm:$0xf]
    %v4100 = vld [vmem:[#allocation9 + $0x54] sm:$0xf]
    %v4101 = vld [vmem:[#allocation9 + $0x58] sm:$0xf]
    %v4102 = vld [vmem:[#allocation9 + $0x5c] sm:$0xf]
    %v4103 = vld [vmem:[#allocation9 + $0x60] sm:$0xf]
    %v4104 = vld [vmem:[#allocation9 + $0x64] sm:$0xf]
    %v4105 = vld [vmem:[#allocation9 + $0x68] sm:$0xf]
    %v4106 = vld [vmem:[#allocation9 + $0x6c] sm:$0xf]
    %v4107 = vld [vmem:[#allocation9 + $0x70] sm:$0xf]
    %v4108 = vld [vmem:[#allocation9 + $0x74] sm:$0xf]
    %v4109 = vld [vmem:[#allocation9 + $0x78] sm:$0xf]
    %v4110 = vld [vmem:[#allocation9 + $0x7c] sm:$0xf]
    %v4111 = vlaneseq
    %v4112 = vshrl.u32 %v4111, 7
    %v4113 = vsub.s32 0, %v4112
    %v4114 = vrot.slane %v4076, %v4113
    %v4147 = vunpack.c.l.b16 %v4079
    %v4148 = vunpack.c.l.b16 %v4080
    %v4149 = vunpack.c.l.b16 %v4081
    %v4150 = vunpack.c.l.b16 %v4082
    %v4151 = vunpack.c.l.b16 %v4083
    %v4152 = vunpack.c.l.b16 %v4084
    %v4153 = vunpack.c.l.b16 %v4085
    %v4154 = vunpack.c.l.b16 %v4086
    %v4155 = vunpack.c.l.b16 %v4087
    %v4156 = vunpack.c.l.b16 %v4088
    %v4157 = vunpack.c.l.b16 %v4089
    %v4158 = vunpack.c.l.b16 %v4090
    %v4159 = vunpack.c.l.b16 %v4091
    %v4160 = vunpack.c.l.b16 %v4092
    %v4161 = vunpack.c.l.b16 %v4093
    %v4162 = vunpack.c.l.b16 %v4094
    %v4163 = vunpack.c.l.b16 %v4095
    %v4164 = vunpack.c.l.b16 %v4096
    %v4165 = vunpack.c.l.b16 %v4097
    %v4166 = vunpack.c.l.b16 %v4098
    %v4167 = vunpack.c.l.b16 %v4099
    %v4168 = vunpack.c.l.b16 %v4100
    %v4169 = vunpack.c.l.b16 %v4101
    %v4170 = vunpack.c.l.b16 %v4102
    %v4171 = vunpack.c.l.b16 %v4103
    %v4172 = vunpack.c.l.b16 %v4104
    %v4173 = vunpack.c.l.b16 %v4105
    %v4174 = vunpack.c.l.b16 %v4106
    %v4175 = vunpack.c.l.b16 %v4107
    %v4176 = vunpack.c.l.b16 %v4108
    %v4177 = vunpack.c.l.b16 %v4109
    %v4178 = vunpack.c.l.b16 %v4110
    %v4179 = vpack.c.b16 %v4148, %v4147
    %v4180 = vpack.c.b16 %v4150, %v4149
    %v4181 = vpack.c.b16 %v4152, %v4151
    %v4182 = vpack.c.b16 %v4154, %v4153
    %v4183 = vpack.c.b16 %v4156, %v4155
    %v4184 = vpack.c.b16 %v4158, %v4157
    %v4185 = vpack.c.b16 %v4160, %v4159
    %v4186 = vpack.c.b16 %v4162, %v4161
    %v4187 = vpack.c.b16 %v4164, %v4163
    %v4188 = vpack.c.b16 %v4166, %v4165
    %v4189 = vpack.c.b16 %v4168, %v4167
    %v4190 = vpack.c.b16 %v4170, %v4169
    %v4191 = vpack.c.b16 %v4172, %v4171
    %v4192 = vpack.c.b16 %v4174, %v4173
    %v4193 = vpack.c.b16 %v4176, %v4175
    %v4194 = vpack.c.b16 %v4178, %v4177
    %4211 = vmatprep.subr.bf16.mxu0 0
    %4212 = vmatpush1.bf16.msra.mxu0 %v4179
    %4213 = vmatprep.subr.bf16.mxu0 0
    %4214 = vmatpush1.bf16.msra.mxu0 %v4180
    %4215 = vmatprep.subr.bf16.mxu0 0
    %4216 = vmatpush1.bf16.msra.mxu0 %v4181
    %4217 = vmatprep.subr.bf16.mxu0 0
    %4218 = vmatpush1.bf16.msra.mxu0 %v4182
    %4219 = vmatprep.subr.bf16.mxu0 0
    %4220 = vmatpush1.bf16.msra.mxu0 %v4183
    %4221 = vmatprep.subr.bf16.mxu0 0
    %4222 = vmatpush1.bf16.msra.mxu0 %v4184
    %4223 = vmatprep.subr.bf16.mxu0 0
    %4224 = vmatpush1.bf16.msra.mxu0 %v4185
    %4225 = vmatprep.subr.bf16.mxu0 0
    %4226 = vmatpush1.bf16.msra.mxu0 %v4186
    %4227 = vmatprep.subr.bf16.mxu0 0
    %4228 = vmatpush1.bf16.msra.mxu0 %v4187
    %4229 = vmatprep.subr.bf16.mxu0 0
    %4230 = vmatpush1.bf16.msra.mxu0 %v4188
    %4231 = vmatprep.subr.bf16.mxu0 0
    %4232 = vmatpush1.bf16.msra.mxu0 %v4189
    %4233 = vmatprep.subr.bf16.mxu0 0
    %4234 = vmatpush1.bf16.msra.mxu0 %v4190
    %4235 = vmatprep.subr.bf16.mxu0 0
    %4236 = vmatpush1.bf16.msra.mxu0 %v4191
    %4237 = vmatprep.subr.bf16.mxu0 0
    %4238 = vmatpush1.bf16.msra.mxu0 %v4192
    %4239 = vmatprep.subr.bf16.mxu0 0
    %4240 = vmatpush1.bf16.msra.mxu0 %v4193
    %4241 = vmatprep.subr.bf16.mxu0 0
    %4242 = vmatpush1.bf16.msra.mxu0 %v4194
    %4243 = vmatprep.mubr.bf16.mxu0 %v4078
    %4244 = vmatmul.mubr.bf16.gmra.mrb[0].mxu0 %v4077
    %v4245 = vpop.f32.mrb[0].mxu0
    %v4246 = vadd.f32 %v4114, %v4245
    %v4247 = vpop.f32.mrb[0].mxu0
    %v4248 = vpop.f32.mrb[0].mxu0
    %v4249 = vadd.f32 %v4114, %v4248
    %v4250 = vpop.f32.mrb[0].mxu0
    %4251 = vdwg.mxu0
    %v4252 = vmax.f32 %v4246, 0.0
    %v4253 = vmax.f32 %v4249, 0.0
    %v4254 = vadd.f32 %v4252, %v4253
    %v4255 = vrot.slane %v4254, 4
    %v4256 = vadd.f32 %v4254, %v4255
    %v4257 = vrot.slane %v4256, 2
    %v4258 = vadd.f32 %v4256, %v4257
    %v4259 = vrot.slane %v4258, 1
    %v4260 = vadd.f32 %v4258, %v4259
    %v4261 = vmul.f32 %v4260, %v2093
    %v4262 = vsub.f32 %v4252, %v4261
    %v4263 = vsub.f32 %v4253, %v4261
    %v4264 = vmul.f32 %v4262, %v4262
    %v4265 = vmul.f32 %v4263, %v4263
    %v4266 = vadd.f32 %v4264, %v4265
    %v4267 = vrot.slane %v4266, 4
    %v4268 = vadd.f32 %v4266, %v4267
    %v4269 = vrot.slane %v4268, 2
    %v4270 = vadd.f32 %v4268, %v4269
    %v4271 = vrot.slane %v4270, 1
    %v4272 = vadd.f32 %v4270, %v4271
    %v4273 = vmul.f32 %v4272, %v2093
    %v4274 = vadd.f32 %v4273, 1e-05
    %v4275 = vrsqrt.pop %v4274
    %v4276 = vmul.f32 %v4076, %v4275
    %v4277 = vmul.f32 %v4261, %v4276
    %v4279 = vrot.slane %v4277, 7
    %v4281 = vsub.f32 %v4076, %v4279
    %v4282 = vlaneseq
    %v4283 = vshrl.u32 %v4282, 7
    %v4284 = vsub.s32 1, %v4283
    %v4285 = vrot.slane %v4276, %v4284
    %v4286 = vmul.f32 %v4252, %v4285
    %v4287 = vmul.f32 %v4253, %v4285
    %v4288 = vlaneseq
    %v4289 = vshrl.u32 %v4288, 7
    %v4290 = vsub.s32 2, %v4289
    %v4291 = vrot.slane %v4281, %v4290
    %v4292 = vadd.f32 %v4286, %v4291
    %v4293 = vadd.f32 %v4287, %v4291
    %v4294 = vld [vmem:[%s10] sm:$0x7]
    %v4295 = vpack.c.bf16 %v4293, %v4292
    %v4296 = vld [vmem:[%s9] sm:$0xf]
    %v4297 = vld [vmem:[%s9 + $0x4] sm:$0xf]
    %v4298 = vld [vmem:[%s9 + $0x8] sm:$0xf]
    %v4299 = vld [vmem:[%s9 + $0xc] sm:$0xf]
    %v4300 = vld [vmem:[%s9 + $0x10] sm:$0xf]
    %v4301 = vld [vmem:[%s9 + $0x14] sm:$0xf]
    %v4302 = vld [vmem:[%s9 + $0x18] sm:$0xf]
    %v4303 = vld [vmem:[%s9 + $0x1c] sm:$0xf]
    %v4304 = vld [vmem:[%s9 + $0x20] sm:$0xf]
    %v4305 = vld [vmem:[%s9 + $0x24] sm:$0xf]
    %v4306 = vld [vmem:[%s9 + $0x28] sm:$0xf]
    %v4307 = vld [vmem:[%s9 + $0x2c] sm:$0xf]
    %v4308 = vld [vmem:[%s9 + $0x30] sm:$0xf]
    %v4309 = vld [vmem:[%s9 + $0x34] sm:$0xf]
    %v4310 = vld [vmem:[%s9 + $0x38] sm:$0xf]
    %v4311 = vld [vmem:[%s9 + $0x3c] sm:$0xf]
    %v4312 = vlaneseq
    %v4313 = vshrl.u32 %v4312, 7
    %v4314 = vsub.s32 0, %v4313
    %v4315 = vrot.slane %v4294, %v4314
    %v4332 = vunpack.c.l.b16 %v4296
    %v4333 = vunpack.c.l.b16 %v4297
    %v4334 = vunpack.c.l.b16 %v4298
    %v4335 = vunpack.c.l.b16 %v4299
    %v4336 = vunpack.c.l.b16 %v4300
    %v4337 = vunpack.c.l.b16 %v4301
    %v4338 = vunpack.c.l.b16 %v4302
    %v4339 = vunpack.c.l.b16 %v4303
    %v4340 = vunpack.c.l.b16 %v4304
    %v4341 = vunpack.c.l.b16 %v4305
    %v4342 = vunpack.c.l.b16 %v4306
    %v4343 = vunpack.c.l.b16 %v4307
    %v4344 = vunpack.c.l.b16 %v4308
    %v4345 = vunpack.c.l.b16 %v4309
    %v4346 = vunpack.c.l.b16 %v4310
    %v4347 = vunpack.c.l.b16 %v4311
    %v4348 = vpack.c.b16 %v4333, %v4332
    %v4349 = vpack.c.b16 %v4335, %v4334
    %v4350 = vpack.c.b16 %v4337, %v4336
    %v4351 = vpack.c.b16 %v4339, %v4338
    %v4352 = vpack.c.b16 %v4341, %v4340
    %v4353 = vpack.c.b16 %v4343, %v4342
    %v4354 = vpack.c.b16 %v4345, %v4344
    %v4355 = vpack.c.b16 %v4347, %v4346
    %4364 = vmatprep.subr.bf16.mxu0 0
    %4365 = vmatpush1.bf16.msra.mxu0 %v4348
    %4366 = vmatprep.subr.bf16.mxu0 0
    %4367 = vmatpush1.bf16.msra.mxu0 %v4349
    %4368 = vmatprep.subr.bf16.mxu0 0
    %4369 = vmatpush1.bf16.msra.mxu0 %v4350
    %4370 = vmatprep.subr.bf16.mxu0 0
    %4371 = vmatpush1.bf16.msra.mxu0 %v4351
    %4372 = vmatprep.subr.bf16.mxu0 0
    %4373 = vmatpush1.bf16.msra.mxu0 %v4352
    %4374 = vmatprep.subr.bf16.mxu0 0
    %4375 = vmatpush1.bf16.msra.mxu0 %v4353
    %4376 = vmatprep.subr.bf16.mxu0 0
    %4377 = vmatpush1.bf16.msra.mxu0 %v4354
    %4378 = vmatprep.subr.bf16.mxu0 0
    %4379 = vmatpush1.bf16.msra.mxu0 %v4355
    %4380 = vmatprep.subr.bf16.mxu0 0
    %4381 = vmatpush1.bf16.msra.mxu0 0
    %4382 = vmatprep.subr.bf16.mxu0 0
    %4383 = vmatpush1.bf16.msra.mxu0 0
    %4384 = vmatprep.subr.bf16.mxu0 0
    %4385 = vmatpush1.bf16.msra.mxu0 0
    %4386 = vmatprep.subr.bf16.mxu0 0
    %4387 = vmatpush1.bf16.msra.mxu0 0
    %4388 = vmatprep.subr.bf16.mxu0 0
    %4389 = vmatpush1.bf16.msra.mxu0 0
    %4390 = vmatprep.subr.bf16.mxu0 0
    %4391 = vmatpush1.bf16.msra.mxu0 0
    %4392 = vmatprep.subr.bf16.mxu0 0
    %4393 = vmatpush1.bf16.msra.mxu0 0
    %4394 = vmatprep.subr.bf16.mxu0 0
    %4395 = vmatpush1.bf16.msra.mxu0 0
    %4396 = vmatprep.mubr.bf16.mxu0 0
    %4397 = vmatmul.mubr.bf16.gmra.mrb[0].mxu0 %v4295
    %v4398 = vpop.f32.mrb[0].mxu0
    %v4399 = vadd.f32 %v4315, %v4398
    %v4400 = vpop.f32.mrb[0].mxu0
    %v4401 = vpop.f32.mrb[0].mxu0
    %v4402 = vadd.f32 %v4315, %v4401
    %v4403 = vpop.f32.mrb[0].mxu0
    %4404 = vdwg.mxu0
    %v4405 = vmax.f32 %v4399, 0.0
    %v4406 = vmax.f32 %v4402, 0.0
    %vm4407 = vcmask 523264
    %v4408 = vsel %vm4407, %v4405, 0.0
    %v4409 = vsel %vm4407, %v4406, 0.0
    %v4410 = vadd.f32 %v4408, %v4409
    %v4411 = vrot.slane %v4410, 4
    %v4412 = vadd.f32 %v4410, %v4411
    %v4413 = vrot.slane %v4412, 2
    %v4414 = vadd.f32 %v4412, %v4413
    %v4415 = vrot.slane %v4414, 1
    %v4416 = vadd.f32 %v4414, %v4415
    %v4417 = vmul.f32 %v4416, %v2093
    %v4418 = vsub.f32 %v4405, %v4417
    %v4419 = vsub.f32 %v4406, %v4417
    %v4420 = vmul.f32 %v4418, %v4418
    %v4421 = vmul.f32 %v4419, %v4419
    %v4422 = vsel %vm4407, %v4420, 0.0
    %v4423 = vsel %vm4407, %v4421, 0.0
    %v4424 = vadd.f32 %v4422, %v4423
    %v4425 = vrot.slane %v4424, 4
    %v4426 = vadd.f32 %v4424, %v4425
    %v4427 = vrot.slane %v4426, 2
    %v4428 = vadd.f32 %v4426, %v4427
    %v4429 = vrot.slane %v4428, 1
    %v4430 = vadd.f32 %v4428, %v4429
    %v4431 = vmul.f32 %v4430, %v2093
    %v4432 = vadd.f32 %v4431, 1e-05
    %v4433 = vrsqrt.pop %v4432
    %v4434 = vmul.f32 %v4294, %v4433
    %v4435 = vmul.f32 %v4417, %v4434
    %v4437 = vrot.slane %v4435, 7
    %v4439 = vsub.f32 %v4294, %v4437
    %v4440 = vlaneseq
    %v4441 = vshrl.u32 %v4440, 7
    %v4442 = vsub.s32 1, %v4441
    %v4443 = vrot.slane %v4434, %v4442
    %v4444 = vmul.f32 %v4405, %v4443
    %v4445 = vmul.f32 %v4406, %v4443
    %v4446 = vlaneseq
    %v4447 = vshrl.u32 %v4446, 7
    %v4448 = vsub.s32 2, %v4447
    %v4449 = vrot.slane %v4439, %v4448
    %v4450 = vadd.f32 %v4444, %v4449
    %v4451 = vadd.f32 %v4445, %v4449
    %v4452 = vpack.c.bf16 %v4451, %v4450
    %v4453 = vld [vmem:[%s11] sm:$0xf]
    %v4454 = vld [vmem:[%s11 + $0x4] sm:$0xf]
    %v4455 = vld [vmem:[%s11 + $0x8] sm:$0xf]
    %v4456 = vld [vmem:[%s11 + $0xc] sm:$0xf]
    %v4457 = vld [vmem:[%s11 + $0x10] sm:$0xf]
    %v4458 = vld [vmem:[%s11 + $0x14] sm:$0xf]
    %v4459 = vld [vmem:[%s11 + $0x18] sm:$0xf]
    %v4460 = vld [vmem:[%s11 + $0x1c] sm:$0xf]
    %v4461 = vld [vmem:[%s12] sm:$0x1]
    %v4463 = vlaneseq
    %v4464 = vshrl.u32 %v4463, 7
    %v4465 = vsub.s32 0, %v4464
    %v4466 = vrot.slane %v4461, %v4465
    %v4476 = vunpack.c.l.b16 %v4453
    %v4477 = vunpack.c.l.b16 %v4454
    %v4478 = vunpack.c.l.b16 %v4455
    %v4479 = vunpack.c.l.b16 %v4456
    %v4480 = vunpack.c.l.b16 %v4457
    %v4481 = vunpack.c.l.b16 %v4458
    %v4482 = vunpack.c.l.b16 %v4459
    %v4483 = vunpack.c.l.b16 %v4460
    %v4484 = vpack.c.b16 %v4477, %v4476
    %v4485 = vpack.c.b16 %v4479, %v4478
    %v4486 = vpack.c.b16 %v4481, %v4480
    %v4487 = vpack.c.b16 %v4483, %v4482
    %v4493 = vsel %vm4407, %v4452, 0
    %4495 = vmatprep.subr.bf16.mxu0 0
    %4496 = vmatpush1.bf16.msra.mxu0 %v4484
    %4497 = vmatprep.subr.bf16.mxu0 0
    %4498 = vmatpush1.bf16.msra.mxu0 %v4485
    %4499 = vmatprep.subr.bf16.mxu0 0
    %4500 = vmatpush1.bf16.msra.mxu0 %v4486
    %4501 = vmatprep.subr.bf16.mxu0 0
    %4502 = vmatpush1.bf16.msra.mxu0 %v4487
    %4503 = vmatprep.subr.bf16.mxu0 0
    %4504 = vmatpush1.bf16.msra.mxu0 0
    %4505 = vmatprep.subr.bf16.mxu0 0
    %4506 = vmatpush1.bf16.msra.mxu0 0
    %4507 = vmatprep.subr.bf16.mxu0 0
    %4508 = vmatpush1.bf16.msra.mxu0 0
    %4509 = vmatprep.subr.bf16.mxu0 0
    %4510 = vmatpush1.bf16.msra.mxu0 0
    %4511 = vmatprep.subr.bf16.mxu0 0
    %4512 = vmatpush1.bf16.msra.mxu0 0
    %4513 = vmatprep.subr.bf16.mxu0 0
    %4514 = vmatpush1.bf16.msra.mxu0 0
    %4515 = vmatprep.subr.bf16.mxu0 0
    %4516 = vmatpush1.bf16.msra.mxu0 0
    %4517 = vmatprep.subr.bf16.mxu0 0
    %4518 = vmatpush1.bf16.msra.mxu0 0
    %4519 = vmatprep.subr.bf16.mxu0 0
    %4520 = vmatpush1.bf16.msra.mxu0 0
    %4521 = vmatprep.subr.bf16.mxu0 0
    %4522 = vmatpush1.bf16.msra.mxu0 0
    %4523 = vmatprep.subr.bf16.mxu0 0
    %4524 = vmatpush1.bf16.msra.mxu0 0
    %4525 = vmatprep.subr.bf16.mxu0 0
    %4526 = vmatpush1.bf16.msra.mxu0 0
    %4527 = vmatprep.mubr.bf16.mxu0 0
    %4528 = vmatmul.mubr.bf16.gmra.mrb[0].mxu0 %v4493
    %v4529 = vpop.f32.mrb[0].mxu0
    %v4530 = vadd.f32 %v4466, %v4529
    %v4531 = vpop.f32.mrb[0].mxu0
    %v4532 = vpop.f32.mrb[0].mxu0
    %v4533 = vadd.f32 %v4466, %v4532
    %v4534 = vpop.f32.mrb[0].mxu0
    %4535 = vdwg.mxu0
    %4536 = vmax.xlane.f32.xlu0 %v4530
    %v4537 = vpop.xlane.xlu0 %4536
    %4538 = vmax.xlane.f32.xlu0 %v4533
    %v4539 = vpop.xlane.xlu0 %4538
    %v4540 = vsub.f32 %v4530, %v4537
    %v4541 = vsub.f32 %v4533, %v4539
    %v4542 = vmul.f32 %v4540, 1.442695
    %v4543 = vpow.pop %v4542
    %v4544 = vmul.f32 %v4541, 1.442695
    %v4545 = vpow.pop %v4544
    %4546 = vadd.xlane.f32.xlu0 %v4543
    %v4547 = vpop.xlane.xlu0 %4546
    %4548 = vadd.xlane.f32.xlu0 %v4545
    %v4549 = vpop.xlane.xlu0 %4548
    %v4550 = vrcp.pop %v4547
    %v4551 = vrcp.pop %v4549
    %v4552 = vmul.f32 %v4543, %v4550
    %v4553 = vmul.f32 %v4545, %v4551
    %4554 = vst [vmem:[%s13] sm:$0xff] %v4552
    %4555 = vst [vmem:[%s13 + $0x8] sm:$0xff] %v4553
    // Predicated region
    $region74: #{model_forward.1} parent=1 // pred_check
      _
    $region75: #{model_forward.1} parent=1 // pred_check_branch
      %4557 = sbr.rel (0) target = $region77
    $region76: #{model_forward.1} parent=1 // pred_region
      _
    $region77: #{model_forward.1} parent=1 // pred_fallthru
      _
    // Predicated region
    $region78: #{model_forward.1} parent=1 // pred_check
      _
    $region79: #{model_forward.1} parent=1 // pred_check_branch
      %4559 = sbr.rel (0) target = $region81
    $region80: #{model_forward.1} parent=1 // pred_region
      _
    $region81: #{model_forward.1} parent=1 // pred_fallthru
      _
    %4560 = vsyncpa [#allocation3], 1
    %4561 = vsyncpa [#allocation5], 1
    %4562 = vsyncpa [#allocation8], 1

</llo_original>
